<compile_context>
chip_gen: v5e
topology: v5e:2x2
jax: 0.10.0
libtpu: 0.0.40
codegen_flags: <defaults>
</compile_context>

<pallas_src>
import math
import functools

import jax
import jax.numpy as jnp
from jax import lax
from jax.experimental import pallas as pl
from jax.experimental.pallas import tpu as pltpu

LN_EPS = 1e-5  # torch nn.LayerNorm default


def _build_kernel(T, B, H, num_blocks):
    def kernel(xseq_ref, Wih_ref, Whh_ref, blstm_ref,
               Wg_ref, bg_ref, lng_ref, lnb_ref,
               png_ref, pnb_ref, out_ref):
        # xseq rows are time-major with batch packed on sublanes: row = t*B + b
        xseq = xseq_ref[...]                                     # (T*B, H)

        for blk in range(num_blocks):
            # Hoisted input contribution: one lane-dense (T*B, H) @ (H, 4H)
            # matmul instead of T tiny ones inside the recurrence.
            xw = (jnp.dot(xseq, Wih_ref[blk],
                          preferred_element_type=jnp.float32)
                  + blstm_ref[blk])                              # (T*B, 4H)
            # bf16 recurrent weights -> single-pass MXU issue on the 48-step
            # serial chain (cast hoisted out of the time loop).
            Whh = Whh_ref[blk].astype(jnp.bfloat16)              # (H, 4H)

            h = jnp.zeros((B, H), jnp.float32)
            c = jnp.zeros((B, H), jnp.float32)
            hs = []
            # Fully unrolled time loop; h/c live in vregs, only the tiny
            # h @ Whh matmul sits on the serial dependency chain.
            for t in range(T):
                gates = xw[t * B:(t + 1) * B, :] + jnp.dot(
                    h.astype(jnp.bfloat16), Whh,
                    preferred_element_type=jnp.float32)          # (B, 4H)
                # Fused nonlinearities: one sigmoid + one tanh over the full
                # 128-lane gates value, then slice i/f/o/g out.
                sig = jax.nn.sigmoid(gates)
                tnh = jnp.tanh(gates)
                i_g = sig[:, 0 * H:1 * H]
                f_g = sig[:, 1 * H:2 * H]
                g_g = tnh[:, 2 * H:3 * H]
                o_g = sig[:, 3 * H:4 * H]
                c = f_g * c + i_g * g_g
                h = o_g * jnp.tanh(c)
                hs.append(h)                                     # stays in vregs
            lo = jnp.concatenate(hs, axis=0)                     # (T*B, H)

            gate = jax.nn.sigmoid(
                jnp.dot(lo, Wg_ref[blk], preferred_element_type=jnp.float32)
                + bg_ref[blk])
            xf = xseq + gate * lo
            mean = jnp.mean(xf, axis=-1, keepdims=True)
            var = jnp.mean((xf - mean) ** 2, axis=-1, keepdims=True)
            xseq = ((xf - mean) * lax.rsqrt(var + LN_EPS)
                    * lng_ref[blk] + lnb_ref[blk])

        # ---- post-blocks LayerNorm (dropout is identity at inference) ------
        mean = jnp.mean(xseq, axis=-1, keepdims=True)
        var = jnp.mean((xseq - mean) ** 2, axis=-1, keepdims=True)
        out_ref[...] = ((xseq - mean) * lax.rsqrt(var + LN_EPS)
                        * png_ref[...] + pnb_ref[...])           # (T*B, H)

    return kernel


@functools.partial(jax.jit, static_argnums=(2,))
def xlstm_forward(x, p, num_blocks):
    B, S, C = x.shape
    T = p["Ws"].shape[0]
    H = p["Wip"].shape[1]
    O = p["Wo"].shape[1]

    # ---- host-side (XLA) algebraic fold of the linear front-end -------------
    # comb = Ws @ (x - A@x) + Wt @ (A@x) + (bs + bt) = M @ x + bcomb
    # seq  = comb @ Wip + bip = (M @ x) @ Wip + bfold
    M = p["Ws"] + jnp.dot(p["Wt"] - p["Ws"], p["A"])               # (T, S)
    bcomb = p["bs"] + p["bt"]                                      # (T, 1)
    bfold = bcomb * jnp.sum(p["Wip"], axis=0, keepdims=True) + p["bip"]  # (T, H)

    # lane-sparse front-end stays in XLA (K = C = 4 contraction)
    front = jnp.einsum("ts,bsc->btc", M, x)                        # (B, T, C)
    xseq0 = jnp.einsum("btc,ch->bth", front, p["Wip"]) + bfold[None]  # (B, T, H)
    # time-major, batch packed onto sublanes: row index = t * B + b
    xseq_flat = jnp.transpose(xseq0, (1, 0, 2)).reshape(T * B, H)

    kernel = _build_kernel(T, B, H, num_blocks)
    args = (xseq_flat, p["Wih"], p["Whh"], p["blstm"],
            p["Wg"], p["bg"], p["lng"], p["lnb"], p["png"], p["pnb"])

    vmem = pl.BlockSpec(memory_space=pltpu.MemorySpace.VMEM)
    xn_flat = pl.pallas_call(
        kernel,
        out_shape=jax.ShapeDtypeStruct((T * B, H), jnp.float32),
        in_specs=[vmem] * len(args),
        out_specs=vmem,
    )(*args)

    xn = jnp.transpose(xn_flat.reshape(T, B, H), (1, 0, 2))        # (B, T, H)
    # O = 4 output projection is lane-sparse -> stays in XLA (per perf review);
    # dropout is identity at inference time.
    return jnp.einsum("bth,ho->bto", xn, p["Wo"]) + p["bo"].reshape(1, 1, O)


def init_params(key, C, H, O, S, T, num_blocks=3, kernel_size=25):
    """Deterministic parameter init mirroring the PyTorch module's __init__."""
    def uni(k, shape, fan_in):
        bound = 1.0 / math.sqrt(fan_in)
        return jax.random.uniform(k, shape, jnp.float32, -bound, bound)

    keys = jax.random.split(key, 8)
    p = {}

    # moving-average operator: mm[t] = mean_k x[clip(t + k - pad, 0, S-1)]
    pad = (kernel_size - 1) // 2
    idx = jnp.clip(jnp.arange(S)[:, None] + jnp.arange(kernel_size)[None, :] - pad,
                   0, S - 1)
    A = jnp.zeros((S, S), jnp.float32).at[
        jnp.arange(S)[:, None], idx].add(1.0 / kernel_size)
    p["A"] = A

    # Linear_Seasonal / Linear_Trend: weights set to 1/S * ones in __init__
    p["Ws"] = jnp.full((T, S), 1.0 / S, jnp.float32)
    p["Wt"] = jnp.full((T, S), 1.0 / S, jnp.float32)
    p["bs"] = uni(keys[0], (T, 1), S)
    p["bt"] = uni(keys[1], (T, 1), S)

    # input projection (stored transposed: (C, H))
    p["Wip"] = uni(keys[2], (C, H), C)
    p["bip"] = uni(keys[3], (1, H), C)

    # per-block LSTM / gate / layernorm parameters
    kk = jax.random.split(keys[4], num_blocks * 6)
    Wih, Whh, blstm, Wg, bg, lng, lnb = [], [], [], [], [], [], []
    for i in range(num_blocks):
        Wih.append(uni(kk[6 * i + 0], (H, 4 * H), H))              # weight_ih^T
        Whh.append(uni(kk[6 * i + 1], (H, 4 * H), H))              # weight_hh^T
        blstm.append(uni(kk[6 * i + 2], (1, 4 * H), H)
                     + uni(kk[6 * i + 3], (1, 4 * H), H))          # b_ih + b_hh
        Wg.append(uni(kk[6 * i + 4], (H, H), H))                   # gate Linear^T
        bg.append(uni(kk[6 * i + 5], (1, H), H))
        lng.append(jnp.ones((1, H), jnp.float32))
        lnb.append(jnp.zeros((1, H), jnp.float32))
    p["Wih"] = jnp.stack(Wih)
    p["Whh"] = jnp.stack(Whh)
    p["blstm"] = jnp.stack(blstm)
    p["Wg"] = jnp.stack(Wg)
    p["bg"] = jnp.stack(bg)
    p["lng"] = jnp.stack(lng)
    p["lnb"] = jnp.stack(lnb)

    p["png"] = jnp.ones((1, H), jnp.float32)
    p["pnb"] = jnp.zeros((1, H), jnp.float32)

    # output projection (stored transposed: (H, O))
    p["Wo"] = uni(keys[5], (H, O), H)
    p["bo"] = uni(keys[6], (1, O), H)

    # TODO(synk): nn.BatchNorm1d(input_dim) is constructed in __init__ but never
    # used in forward(), so it is intentionally not materialized here.
    return p


def reference_forward(x, p, num_blocks):
    """Pure-JAX reference with the ORIGINAL (unfolded) semantics."""
    B, S, C = x.shape
    T = p["Ws"].shape[0]
    H = p["Wip"].shape[1]

    mm = jnp.einsum("ts,bsc->btc", p["A"], x)
    res = x - mm
    comb = (jnp.einsum("ts,bsc->btc", p["Ws"], res)
            + jnp.einsum("ts,bsc->btc", p["Wt"], mm)
            + (p["bs"] + p["bt"]).reshape(1, T, 1))
    xseq = jnp.einsum("btc,ch->bth", comb, p["Wip"]) + p["bip"].reshape(1, 1, H)

    for blk in range(num_blocks):
        Wih, Whh, bl = p["Wih"][blk], p["Whh"][blk], p["blstm"][blk]

        def step(carry, x_t):
            h, c = carry
            gates = x_t @ Wih + h @ Whh + bl
            i_g = jax.nn.sigmoid(gates[:, 0 * H:1 * H])
            f_g = jax.nn.sigmoid(gates[:, 1 * H:2 * H])
            g_g = jnp.tanh(gates[:, 2 * H:3 * H])
            o_g = jax.nn.sigmoid(gates[:, 3 * H:4 * H])
            c = f_g * c + i_g * g_g
            h = o_g * jnp.tanh(c)
            return (h, c), h

        init = (jnp.zeros((B, H), jnp.float32), jnp.zeros((B, H), jnp.float32))
        _, hs = lax.scan(step, init, jnp.swapaxes(xseq, 0, 1))
        lstm_out = jnp.swapaxes(hs, 0, 1)

        gate = jax.nn.sigmoid(lstm_out @ p["Wg"][blk] + p["bg"][blk])
        xseq = xseq + gate * lstm_out
        mean = xseq.mean(-1, keepdims=True)
        var = ((xseq - mean) ** 2).mean(-1, keepdims=True)
        xseq = (xseq - mean) * lax.rsqrt(var + LN_EPS) * p["lng"][blk] + p["lnb"][blk]

    mean = xseq.mean(-1, keepdims=True)
    var = ((xseq - mean) ** 2).mean(-1, keepdims=True)
    xseq = (xseq - mean) * lax.rsqrt(var + LN_EPS) * p["png"] + p["pnb"]
    return jnp.einsum("bth,ho->bto", xseq, p["Wo"]) + p["bo"].reshape(1, 1, -1)


if __name__ == "__main__":
    # small shapes consistent with the module's forward
    B = 2            # batch
    S = 32           # context_points (sequence length in)
    C = 4            # input_dim (number of series / channels)
    T = 16           # target_points (sequence length out)
    H = 32           # hidden_dim (embedding_dim of the xLSTM stack)
    O = 4            # output_dim
    NUM_BLOCKS = 3

    key = jax.random.PRNGKey(0)
    kx, kp = jax.random.split(key)
    x = jax.random.normal(kx, (B, S, C), jnp.float32)
    params = init_params(kp, C, H, O, S, T, NUM_BLOCKS)

    out = xlstm_forward(x, params, NUM_BLOCKS)
    out = jax.block_until_ready(out)
    assert out.shape == (B, T, O), out.shape

    ref = reference_forward(x, params, NUM_BLOCKS)
    # Tolerance budgets for the bf16 single-pass h @ Whh recurrence in the
    # kernel vs. the default-precision f32 reference; the LayerNorm after each
    # block keeps the accumulated error ~1e-2, while a genuine semantic bug
    # blows well past 5e-2.
    max_err = float(jnp.max(jnp.abs(out - ref)))
    assert max_err < 5e-2, f"kernel/reference mismatch: max abs err = {max_err}"

    print("KERNEL_OK")
</pallas_src>

<mosaic_0001>
module attributes {stable_mosaic.version = 11 : i64} {
  func.func @kernel(%arg0: memref<32x32xf32, #tpu.memory_space<vmem>>, %arg1: memref<3x32x128xf32, #tpu.memory_space<vmem>>, %arg2: memref<3x32x128xf32, #tpu.memory_space<vmem>>, %arg3: memref<3x1x128xf32, #tpu.memory_space<vmem>>, %arg4: memref<3x32x32xf32, #tpu.memory_space<vmem>>, %arg5: memref<3x1x32xf32, #tpu.memory_space<vmem>>, %arg6: memref<3x1x32xf32, #tpu.memory_space<vmem>>, %arg7: memref<3x1x32xf32, #tpu.memory_space<vmem>>, %arg8: memref<1x32xf32, #tpu.memory_space<vmem>>, %arg9: memref<1x32xf32, #tpu.memory_space<vmem>>, %arg10: memref<32x32xf32, #tpu.memory_space<vmem>>) attributes {dimension_semantics = [], scalar_prefetch = 0 : i64, scratch_operands = 0 : i64, tpu.core_type = #tpu.core_type<tc>} {
    %c0 = arith.constant 0 : index
    %c0_0 = arith.constant 0 : index
    %0 = vector.load %arg0[%c0, %c0_0] : memref<32x32xf32, #tpu.memory_space<vmem>>, vector<32x32xf32>
    %c0_1 = arith.constant 0 : index
    %c0_2 = arith.constant 0 : index
    %c0_3 = arith.constant 0 : index
    %1 = vector.load %arg1[%c0_1, %c0_2, %c0_3] : memref<3x32x128xf32, #tpu.memory_space<vmem>>, vector<1x32x128xf32>
    %2 = vector.shape_cast %1 : vector<1x32x128xf32> to vector<32x128xf32>
    %cst = arith.constant dense<0.000000e+00> : vector<32x128xf32>
    %3 = tpu.matmul %0, %2, %cst {dimension_numbers = #tpu.dot_dimension_numbers<[1], [0], [0], [1], [0, 0, 1, 1], [], []>} : vector<32x32xf32>, vector<32x128xf32>, vector<32x128xf32> -> vector<32x128xf32>
    %c0_4 = arith.constant 0 : index
    %c0_5 = arith.constant 0 : index
    %c0_6 = arith.constant 0 : index
    %4 = vector.load %arg3[%c0_4, %c0_5, %c0_6] : memref<3x1x128xf32, #tpu.memory_space<vmem>>, vector<1x1x128xf32>
    %5 = vector.shape_cast %4 : vector<1x1x128xf32> to vector<1x128xf32>
    %6 = vector.broadcast %5 : vector<1x128xf32> to vector<32x128xf32>
    %7 = arith.addf %3, %6 : vector<32x128xf32>
    %c0_7 = arith.constant 0 : index
    %c0_8 = arith.constant 0 : index
    %c0_9 = arith.constant 0 : index
    %8 = vector.load %arg2[%c0_7, %c0_8, %c0_9] : memref<3x32x128xf32, #tpu.memory_space<vmem>>, vector<1x32x128xf32>
    %9 = vector.shape_cast %8 : vector<1x32x128xf32> to vector<32x128xf32>
    %10 = arith.truncf %9 : vector<32x128xf32> to vector<32x128xbf16>
    %cst_10 = arith.constant 0.000000e+00 : f32
    %11 = vector.broadcast %cst_10 : f32 to vector<2x32xf32>
    %cst_11 = arith.constant 0.000000e+00 : f32
    %12 = vector.broadcast %cst_11 : f32 to vector<2x32xf32>
    %13 = vector.extract_strided_slice %7 {offsets = [0, 0], sizes = [2, 128], strides = [1, 1]} : vector<32x128xf32> to vector<2x128xf32>
    %14 = arith.truncf %11 : vector<2x32xf32> to vector<2x32xbf16>
    %cst_12 = arith.constant dense<0.000000e+00> : vector<2x128xf32>
    %15 = tpu.matmul %14, %10, %cst_12 {dimension_numbers = #tpu.dot_dimension_numbers<[1], [0], [0], [1], [0, 0, 1, 1], [], []>} : vector<2x32xbf16>, vector<32x128xbf16>, vector<2x128xf32> -> vector<2x128xf32>
    %16 = arith.addf %13, %15 : vector<2x128xf32>
    %17 = arith.negf %16 : vector<2x128xf32>
    %18 = math.exp %17 : vector<2x128xf32>
    %cst_13 = arith.constant 1.000000e+00 : f32
    %19 = vector.broadcast %cst_13 : f32 to vector<2x128xf32>
    %20 = arith.addf %19, %18 : vector<2x128xf32>
    %21 = arith.divf %19, %20 : vector<2x128xf32>
    %22 = math.tanh %16 : vector<2x128xf32>
    %23 = vector.extract_strided_slice %21 {offsets = [0, 0], sizes = [2, 32], strides = [1, 1]} : vector<2x128xf32> to vector<2x32xf32>
    %24 = vector.extract_strided_slice %21 {offsets = [0, 32], sizes = [2, 32], strides = [1, 1]} : vector<2x128xf32> to vector<2x32xf32>
    %25 = vector.extract_strided_slice %22 {offsets = [0, 64], sizes = [2, 32], strides = [1, 1]} : vector<2x128xf32> to vector<2x32xf32>
    %26 = vector.extract_strided_slice %21 {offsets = [0, 96], sizes = [2, 32], strides = [1, 1]} : vector<2x128xf32> to vector<2x32xf32>
    %27 = arith.mulf %24, %12 : vector<2x32xf32>
    %28 = arith.mulf %23, %25 : vector<2x32xf32>
    %29 = arith.addf %27, %28 : vector<2x32xf32>
    %30 = math.tanh %29 : vector<2x32xf32>
    %31 = arith.mulf %26, %30 : vector<2x32xf32>
    %32 = vector.extract_strided_slice %7 {offsets = [2, 0], sizes = [2, 128], strides = [1, 1]} : vector<32x128xf32> to vector<2x128xf32>
    %33 = arith.truncf %31 : vector<2x32xf32> to vector<2x32xbf16>
    %cst_14 = arith.constant dense<0.000000e+00> : vector<2x128xf32>
    %34 = tpu.matmul %33, %10, %cst_14 {dimension_numbers = #tpu.dot_dimension_numbers<[1], [0], [0], [1], [0, 0, 1, 1], [], []>} : vector<2x32xbf16>, vector<32x128xbf16>, vector<2x128xf32> -> vector<2x128xf32>
    %35 = arith.addf %32, %34 : vector<2x128xf32>
    %36 = arith.negf %35 : vector<2x128xf32>
    %37 = math.exp %36 : vector<2x128xf32>
    %cst_15 = arith.constant 1.000000e+00 : f32
    %38 = vector.broadcast %cst_15 : f32 to vector<2x128xf32>
    %39 = arith.addf %38, %37 : vector<2x128xf32>
    %40 = arith.divf %38, %39 : vector<2x128xf32>
    %41 = math.tanh %35 : vector<2x128xf32>
    %42 = vector.extract_strided_slice %40 {offsets = [0, 0], sizes = [2, 32], strides = [1, 1]} : vector<2x128xf32> to vector<2x32xf32>
    %43 = vector.extract_strided_slice %40 {offsets = [0, 32], sizes = [2, 32], strides = [1, 1]} : vector<2x128xf32> to vector<2x32xf32>
    %44 = vector.extract_strided_slice %41 {offsets = [0, 64], sizes = [2, 32], strides = [1, 1]} : vector<2x128xf32> to vector<2x32xf32>
    %45 = vector.extract_strided_slice %40 {offsets = [0, 96], sizes = [2, 32], strides = [1, 1]} : vector<2x128xf32> to vector<2x32xf32>
    %46 = arith.mulf %43, %29 : vector<2x32xf32>
    %47 = arith.mulf %42, %44 : vector<2x32xf32>
    %48 = arith.addf %46, %47 : vector<2x32xf32>
    %49 = math.tanh %48 : vector<2x32xf32>
    %50 = arith.mulf %45, %49 : vector<2x32xf32>
    %51 = vector.extract_strided_slice %7 {offsets = [4, 0], sizes = [2, 128], strides = [1, 1]} : vector<32x128xf32> to vector<2x128xf32>
    %52 = arith.truncf %50 : vector<2x32xf32> to vector<2x32xbf16>
    %cst_16 = arith.constant dense<0.000000e+00> : vector<2x128xf32>
    %53 = tpu.matmul %52, %10, %cst_16 {dimension_numbers = #tpu.dot_dimension_numbers<[1], [0], [0], [1], [0, 0, 1, 1], [], []>} : vector<2x32xbf16>, vector<32x128xbf16>, vector<2x128xf32> -> vector<2x128xf32>
    %54 = arith.addf %51, %53 : vector<2x128xf32>
    %55 = arith.negf %54 : vector<2x128xf32>
    %56 = math.exp %55 : vector<2x128xf32>
    %cst_17 = arith.constant 1.000000e+00 : f32
    %57 = vector.broadcast %cst_17 : f32 to vector<2x128xf32>
    %58 = arith.addf %57, %56 : vector<2x128xf32>
    %59 = arith.divf %57, %58 : vector<2x128xf32>
    %60 = math.tanh %54 : vector<2x128xf32>
    %61 = vector.extract_strided_slice %59 {offsets = [0, 0], sizes = [2, 32], strides = [1, 1]} : vector<2x128xf32> to vector<2x32xf32>
    %62 = vector.extract_strided_slice %59 {offsets = [0, 32], sizes = [2, 32], strides = [1, 1]} : vector<2x128xf32> to vector<2x32xf32>
    %63 = vector.extract_strided_slice %60 {offsets = [0, 64], sizes = [2, 32], strides = [1, 1]} : vector<2x128xf32> to vector<2x32xf32>
    %64 = vector.extract_strided_slice %59 {offsets = [0, 96], sizes = [2, 32], strides = [1, 1]} : vector<2x128xf32> to vector<2x32xf32>
    %65 = arith.mulf %62, %48 : vector<2x32xf32>
    %66 = arith.mulf %61, %63 : vector<2x32xf32>
    %67 = arith.addf %65, %66 : vector<2x32xf32>
    %68 = math.tanh %67 : vector<2x32xf32>
    %69 = arith.mulf %64, %68 : vector<2x32xf32>
    %70 = vector.extract_strided_slice %7 {offsets = [6, 0], sizes = [2, 128], strides = [1, 1]} : vector<32x128xf32> to vector<2x128xf32>
    %71 = arith.truncf %69 : vector<2x32xf32> to vector<2x32xbf16>
    %cst_18 = arith.constant dense<0.000000e+00> : vector<2x128xf32>
    %72 = tpu.matmul %71, %10, %cst_18 {dimension_numbers = #tpu.dot_dimension_numbers<[1], [0], [0], [1], [0, 0, 1, 1], [], []>} : vector<2x32xbf16>, vector<32x128xbf16>, vector<2x128xf32> -> vector<2x128xf32>
    %73 = arith.addf %70, %72 : vector<2x128xf32>
    %74 = arith.negf %73 : vector<2x128xf32>
    %75 = math.exp %74 : vector<2x128xf32>
    %cst_19 = arith.constant 1.000000e+00 : f32
    %76 = vector.broadcast %cst_19 : f32 to vector<2x128xf32>
    %77 = arith.addf %76, %75 : vector<2x128xf32>
    %78 = arith.divf %76, %77 : vector<2x128xf32>
    %79 = math.tanh %73 : vector<2x128xf32>
    %80 = vector.extract_strided_slice %78 {offsets = [0, 0], sizes = [2, 32], strides = [1, 1]} : vector<2x128xf32> to vector<2x32xf32>
    %81 = vector.extract_strided_slice %78 {offsets = [0, 32], sizes = [2, 32], strides = [1, 1]} : vector<2x128xf32> to vector<2x32xf32>
    %82 = vector.extract_strided_slice %79 {offsets = [0, 64], sizes = [2, 32], strides = [1, 1]} : vector<2x128xf32> to vector<2x32xf32>
    %83 = vector.extract_strided_slice %78 {offsets = [0, 96], sizes = [2, 32], strides = [1, 1]} : vector<2x128xf32> to vector<2x32xf32>
    %84 = arith.mulf %81, %67 : vector<2x32xf32>
    %85 = arith.mulf %80, %82 : vector<2x32xf32>
    %86 = arith.addf %84, %85 : vector<2x32xf32>
    %87 = math.tanh %86 : vector<2x32xf32>
    %88 = arith.mulf %83, %87 : vector<2x32xf32>
    %89 = vector.extract_strided_slice %7 {offsets = [8, 0], sizes = [2, 128], strides = [1, 1]} : vector<32x128xf32> to vector<2x128xf32>
    %90 = arith.truncf %88 : vector<2x32xf32> to vector<2x32xbf16>
    %cst_20 = arith.constant dense<0.000000e+00> : vector<2x128xf32>
    %91 = tpu.matmul %90, %10, %cst_20 {dimension_numbers = #tpu.dot_dimension_numbers<[1], [0], [0], [1], [0, 0, 1, 1], [], []>} : vector<2x32xbf16>, vector<32x128xbf16>, vector<2x128xf32> -> vector<2x128xf32>
    %92 = arith.addf %89, %91 : vector<2x128xf32>
    %93 = arith.negf %92 : vector<2x128xf32>
    %94 = math.exp %93 : vector<2x128xf32>
    %cst_21 = arith.constant 1.000000e+00 : f32
    %95 = vector.broadcast %cst_21 : f32 to vector<2x128xf32>
    %96 = arith.addf %95, %94 : vector<2x128xf32>
    %97 = arith.divf %95, %96 : vector<2x128xf32>
    %98 = math.tanh %92 : vector<2x128xf32>
    %99 = vector.extract_strided_slice %97 {offsets = [0, 0], sizes = [2, 32], strides = [1, 1]} : vector<2x128xf32> to vector<2x32xf32>
    %100 = vector.extract_strided_slice %97 {offsets = [0, 32], sizes = [2, 32], strides = [1, 1]} : vector<2x128xf32> to vector<2x32xf32>
    %101 = vector.extract_strided_slice %98 {offsets = [0, 64], sizes = [2, 32], strides = [1, 1]} : vector<2x128xf32> to vector<2x32xf32>
    %102 = vector.extract_strided_slice %97 {offsets = [0, 96], sizes = [2, 32], strides = [1, 1]} : vector<2x128xf32> to vector<2x32xf32>
    %103 = arith.mulf %100, %86 : vector<2x32xf32>
    %104 = arith.mulf %99, %101 : vector<2x32xf32>
    %105 = arith.addf %103, %104 : vector<2x32xf32>
    %106 = math.tanh %105 : vector<2x32xf32>
    %107 = arith.mulf %102, %106 : vector<2x32xf32>
    %108 = vector.extract_strided_slice %7 {offsets = [10, 0], sizes = [2, 128], strides = [1, 1]} : vector<32x128xf32> to vector<2x128xf32>
    %109 = arith.truncf %107 : vector<2x32xf32> to vector<2x32xbf16>
    %cst_22 = arith.constant dense<0.000000e+00> : vector<2x128xf32>
    %110 = tpu.matmul %109, %10, %cst_22 {dimension_numbers = #tpu.dot_dimension_numbers<[1], [0], [0], [1], [0, 0, 1, 1], [], []>} : vector<2x32xbf16>, vector<32x128xbf16>, vector<2x128xf32> -> vector<2x128xf32>
    %111 = arith.addf %108, %110 : vector<2x128xf32>
    %112 = arith.negf %111 : vector<2x128xf32>
    %113 = math.exp %112 : vector<2x128xf32>
    %cst_23 = arith.constant 1.000000e+00 : f32
    %114 = vector.broadcast %cst_23 : f32 to vector<2x128xf32>
    %115 = arith.addf %114, %113 : vector<2x128xf32>
    %116 = arith.divf %114, %115 : vector<2x128xf32>
    %117 = math.tanh %111 : vector<2x128xf32>
    %118 = vector.extract_strided_slice %116 {offsets = [0, 0], sizes = [2, 32], strides = [1, 1]} : vector<2x128xf32> to vector<2x32xf32>
    %119 = vector.extract_strided_slice %116 {offsets = [0, 32], sizes = [2, 32], strides = [1, 1]} : vector<2x128xf32> to vector<2x32xf32>
    %120 = vector.extract_strided_slice %117 {offsets = [0, 64], sizes = [2, 32], strides = [1, 1]} : vector<2x128xf32> to vector<2x32xf32>
    %121 = vector.extract_strided_slice %116 {offsets = [0, 96], sizes = [2, 32], strides = [1, 1]} : vector<2x128xf32> to vector<2x32xf32>
    %122 = arith.mulf %119, %105 : vector<2x32xf32>
    %123 = arith.mulf %118, %120 : vector<2x32xf32>
    %124 = arith.addf %122, %123 : vector<2x32xf32>
    %125 = math.tanh %124 : vector<2x32xf32>
    %126 = arith.mulf %121, %125 : vector<2x32xf32>
    %127 = vector.extract_strided_slice %7 {offsets = [12, 0], sizes = [2, 128], strides = [1, 1]} : vector<32x128xf32> to vector<2x128xf32>
    %128 = arith.truncf %126 : vector<2x32xf32> to vector<2x32xbf16>
    %cst_24 = arith.constant dense<0.000000e+00> : vector<2x128xf32>
    %129 = tpu.matmul %128, %10, %cst_24 {dimension_numbers = #tpu.dot_dimension_numbers<[1], [0], [0], [1], [0, 0, 1, 1], [], []>} : vector<2x32xbf16>, vector<32x128xbf16>, vector<2x128xf32> -> vector<2x128xf32>
    %130 = arith.addf %127, %129 : vector<2x128xf32>
    %131 = arith.negf %130 : vector<2x128xf32>
    %132 = math.exp %131 : vector<2x128xf32>
    %cst_25 = arith.constant 1.000000e+00 : f32
    %133 = vector.broadcast %cst_25 : f32 to vector<2x128xf32>
    %134 = arith.addf %133, %132 : vector<2x128xf32>
    %135 = arith.divf %133, %134 : vector<2x128xf32>
    %136 = math.tanh %130 : vector<2x128xf32>
    %137 = vector.extract_strided_slice %135 {offsets = [0, 0], sizes = [2, 32], strides = [1, 1]} : vector<2x128xf32> to vector<2x32xf32>
    %138 = vector.extract_strided_slice %135 {offsets = [0, 32], sizes = [2, 32], strides = [1, 1]} : vector<2x128xf32> to vector<2x32xf32>
    %139 = vector.extract_strided_slice %136 {offsets = [0, 64], sizes = [2, 32], strides = [1, 1]} : vector<2x128xf32> to vector<2x32xf32>
    %140 = vector.extract_strided_slice %135 {offsets = [0, 96], sizes = [2, 32], strides = [1, 1]} : vector<2x128xf32> to vector<2x32xf32>
    %141 = arith.mulf %138, %124 : vector<2x32xf32>
    %142 = arith.mulf %137, %139 : vector<2x32xf32>
    %143 = arith.addf %141, %142 : vector<2x32xf32>
    %144 = math.tanh %143 : vector<2x32xf32>
    %145 = arith.mulf %140, %144 : vector<2x32xf32>
    %146 = vector.extract_strided_slice %7 {offsets = [14, 0], sizes = [2, 128], strides = [1, 1]} : vector<32x128xf32> to vector<2x128xf32>
    %147 = arith.truncf %145 : vector<2x32xf32> to vector<2x32xbf16>
    %cst_26 = arith.constant dense<0.000000e+00> : vector<2x128xf32>
    %148 = tpu.matmul %147, %10, %cst_26 {dimension_numbers = #tpu.dot_dimension_numbers<[1], [0], [0], [1], [0, 0, 1, 1], [], []>} : vector<2x32xbf16>, vector<32x128xbf16>, vector<2x128xf32> -> vector<2x128xf32>
    %149 = arith.addf %146, %148 : vector<2x128xf32>
    %150 = arith.negf %149 : vector<2x128xf32>
    %151 = math.exp %150 : vector<2x128xf32>
    %cst_27 = arith.constant 1.000000e+00 : f32
    %152 = vector.broadcast %cst_27 : f32 to vector<2x128xf32>
    %153 = arith.addf %152, %151 : vector<2x128xf32>
    %154 = arith.divf %152, %153 : vector<2x128xf32>
    %155 = math.tanh %149 : vector<2x128xf32>
    %156 = vector.extract_strided_slice %154 {offsets = [0, 0], sizes = [2, 32], strides = [1, 1]} : vector<2x128xf32> to vector<2x32xf32>
    %157 = vector.extract_strided_slice %154 {offsets = [0, 32], sizes = [2, 32], strides = [1, 1]} : vector<2x128xf32> to vector<2x32xf32>
    %158 = vector.extract_strided_slice %155 {offsets = [0, 64], sizes = [2, 32], strides = [1, 1]} : vector<2x128xf32> to vector<2x32xf32>
    %159 = vector.extract_strided_slice %154 {offsets = [0, 96], sizes = [2, 32], strides = [1, 1]} : vector<2x128xf32> to vector<2x32xf32>
    %160 = arith.mulf %157, %143 : vector<2x32xf32>
    %161 = arith.mulf %156, %158 : vector<2x32xf32>
    %162 = arith.addf %160, %161 : vector<2x32xf32>
    %163 = math.tanh %162 : vector<2x32xf32>
    %164 = arith.mulf %159, %163 : vector<2x32xf32>
    %165 = vector.extract_strided_slice %7 {offsets = [16, 0], sizes = [2, 128], strides = [1, 1]} : vector<32x128xf32> to vector<2x128xf32>
    %166 = arith.truncf %164 : vector<2x32xf32> to vector<2x32xbf16>
    %cst_28 = arith.constant dense<0.000000e+00> : vector<2x128xf32>
    %167 = tpu.matmul %166, %10, %cst_28 {dimension_numbers = #tpu.dot_dimension_numbers<[1], [0], [0], [1], [0, 0, 1, 1], [], []>} : vector<2x32xbf16>, vector<32x128xbf16>, vector<2x128xf32> -> vector<2x128xf32>
    %168 = arith.addf %165, %167 : vector<2x128xf32>
    %169 = arith.negf %168 : vector<2x128xf32>
    %170 = math.exp %169 : vector<2x128xf32>
    %cst_29 = arith.constant 1.000000e+00 : f32
    %171 = vector.broadcast %cst_29 : f32 to vector<2x128xf32>
    %172 = arith.addf %171, %170 : vector<2x128xf32>
    %173 = arith.divf %171, %172 : vector<2x128xf32>
    %174 = math.tanh %168 : vector<2x128xf32>
    %175 = vector.extract_strided_slice %173 {offsets = [0, 0], sizes = [2, 32], strides = [1, 1]} : vector<2x128xf32> to vector<2x32xf32>
    %176 = vector.extract_strided_slice %173 {offsets = [0, 32], sizes = [2, 32], strides = [1, 1]} : vector<2x128xf32> to vector<2x32xf32>
    %177 = vector.extract_strided_slice %174 {offsets = [0, 64], sizes = [2, 32], strides = [1, 1]} : vector<2x128xf32> to vector<2x32xf32>
    %178 = vector.extract_strided_slice %173 {offsets = [0, 96], sizes = [2, 32], strides = [1, 1]} : vector<2x128xf32> to vector<2x32xf32>
    %179 = arith.mulf %176, %162 : vector<2x32xf32>
    %180 = arith.mulf %175, %177 : vector<2x32xf32>
    %181 = arith.addf %179, %180 : vector<2x32xf32>
    %182 = math.tanh %181 : vector<2x32xf32>
    %183 = arith.mulf %178, %182 : vector<2x32xf32>
    %184 = vector.extract_strided_slice %7 {offsets = [18, 0], sizes = [2, 128], strides = [1, 1]} : vector<32x128xf32> to vector<2x128xf32>
    %185 = arith.truncf %183 : vector<2x32xf32> to vector<2x32xbf16>
    %cst_30 = arith.constant dense<0.000000e+00> : vector<2x128xf32>
    %186 = tpu.matmul %185, %10, %cst_30 {dimension_numbers = #tpu.dot_dimension_numbers<[1], [0], [0], [1], [0, 0, 1, 1], [], []>} : vector<2x32xbf16>, vector<32x128xbf16>, vector<2x128xf32> -> vector<2x128xf32>
    %187 = arith.addf %184, %186 : vector<2x128xf32>
    %188 = arith.negf %187 : vector<2x128xf32>
    %189 = math.exp %188 : vector<2x128xf32>
    %cst_31 = arith.constant 1.000000e+00 : f32
    %190 = vector.broadcast %cst_31 : f32 to vector<2x128xf32>
    %191 = arith.addf %190, %189 : vector<2x128xf32>
    %192 = arith.divf %190, %191 : vector<2x128xf32>
    %193 = math.tanh %187 : vector<2x128xf32>
    %194 = vector.extract_strided_slice %192 {offsets = [0, 0], sizes = [2, 32], strides = [1, 1]} : vector<2x128xf32> to vector<2x32xf32>
    %195 = vector.extract_strided_slice %192 {offsets = [0, 32], sizes = [2, 32], strides = [1, 1]} : vector<2x128xf32> to vector<2x32xf32>
    %196 = vector.extract_strided_slice %193 {offsets = [0, 64], sizes = [2, 32], strides = [1, 1]} : vector<2x128xf32> to vector<2x32xf32>
    %197 = vector.extract_strided_slice %192 {offsets = [0, 96], sizes = [2, 32], strides = [1, 1]} : vector<2x128xf32> to vector<2x32xf32>
    %198 = arith.mulf %195, %181 : vector<2x32xf32>
    %199 = arith.mulf %194, %196 : vector<2x32xf32>
    %200 = arith.addf %198, %199 : vector<2x32xf32>
    %201 = math.tanh %200 : vector<2x32xf32>
    %202 = arith.mulf %197, %201 : vector<2x32xf32>
    %203 = vector.extract_strided_slice %7 {offsets = [20, 0], sizes = [2, 128], strides = [1, 1]} : vector<32x128xf32> to vector<2x128xf32>
    %204 = arith.truncf %202 : vector<2x32xf32> to vector<2x32xbf16>
    %cst_32 = arith.constant dense<0.000000e+00> : vector<2x128xf32>
    %205 = tpu.matmul %204, %10, %cst_32 {dimension_numbers = #tpu.dot_dimension_numbers<[1], [0], [0], [1], [0, 0, 1, 1], [], []>} : vector<2x32xbf16>, vector<32x128xbf16>, vector<2x128xf32> -> vector<2x128xf32>
    %206 = arith.addf %203, %205 : vector<2x128xf32>
    %207 = arith.negf %206 : vector<2x128xf32>
    %208 = math.exp %207 : vector<2x128xf32>
    %cst_33 = arith.constant 1.000000e+00 : f32
    %209 = vector.broadcast %cst_33 : f32 to vector<2x128xf32>
    %210 = arith.addf %209, %208 : vector<2x128xf32>
    %211 = arith.divf %209, %210 : vector<2x128xf32>
    %212 = math.tanh %206 : vector<2x128xf32>
    %213 = vector.extract_strided_slice %211 {offsets = [0, 0], sizes = [2, 32], strides = [1, 1]} : vector<2x128xf32> to vector<2x32xf32>
    %214 = vector.extract_strided_slice %211 {offsets = [0, 32], sizes = [2, 32], strides = [1, 1]} : vector<2x128xf32> to vector<2x32xf32>
    %215 = vector.extract_strided_slice %212 {offsets = [0, 64], sizes = [2, 32], strides = [1, 1]} : vector<2x128xf32> to vector<2x32xf32>
    %216 = vector.extract_strided_slice %211 {offsets = [0, 96], sizes = [2, 32], strides = [1, 1]} : vector<2x128xf32> to vector<2x32xf32>
    %217 = arith.mulf %214, %200 : vector<2x32xf32>
    %218 = arith.mulf %213, %215 : vector<2x32xf32>
    %219 = arith.addf %217, %218 : vector<2x32xf32>
    %220 = math.tanh %219 : vector<2x32xf32>
    %221 = arith.mulf %216, %220 : vector<2x32xf32>
    %222 = vector.extract_strided_slice %7 {offsets = [22, 0], sizes = [2, 128], strides = [1, 1]} : vector<32x128xf32> to vector<2x128xf32>
    %223 = arith.truncf %221 : vector<2x32xf32> to vector<2x32xbf16>
    %cst_34 = arith.constant dense<0.000000e+00> : vector<2x128xf32>
    %224 = tpu.matmul %223, %10, %cst_34 {dimension_numbers = #tpu.dot_dimension_numbers<[1], [0], [0], [1], [0, 0, 1, 1], [], []>} : vector<2x32xbf16>, vector<32x128xbf16>, vector<2x128xf32> -> vector<2x128xf32>
    %225 = arith.addf %222, %224 : vector<2x128xf32>
    %226 = arith.negf %225 : vector<2x128xf32>
    %227 = math.exp %226 : vector<2x128xf32>
    %cst_35 = arith.constant 1.000000e+00 : f32
    %228 = vector.broadcast %cst_35 : f32 to vector<2x128xf32>
    %229 = arith.addf %228, %227 : vector<2x128xf32>
    %230 = arith.divf %228, %229 : vector<2x128xf32>
    %231 = math.tanh %225 : vector<2x128xf32>
    %232 = vector.extract_strided_slice %230 {offsets = [0, 0], sizes = [2, 32], strides = [1, 1]} : vector<2x128xf32> to vector<2x32xf32>
    %233 = vector.extract_strided_slice %230 {offsets = [0, 32], sizes = [2, 32], strides = [1, 1]} : vector<2x128xf32> to vector<2x32xf32>
    %234 = vector.extract_strided_slice %231 {offsets = [0, 64], sizes = [2, 32], strides = [1, 1]} : vector<2x128xf32> to vector<2x32xf32>
    %235 = vector.extract_strided_slice %230 {offsets = [0, 96], sizes = [2, 32], strides = [1, 1]} : vector<2x128xf32> to vector<2x32xf32>
    %236 = arith.mulf %233, %219 : vector<2x32xf32>
    %237 = arith.mulf %232, %234 : vector<2x32xf32>
    %238 = arith.addf %236, %237 : vector<2x32xf32>
    %239 = math.tanh %238 : vector<2x32xf32>
    %240 = arith.mulf %235, %239 : vector<2x32xf32>
    %241 = vector.extract_strided_slice %7 {offsets = [24, 0], sizes = [2, 128], strides = [1, 1]} : vector<32x128xf32> to vector<2x128xf32>
    %242 = arith.truncf %240 : vector<2x32xf32> to vector<2x32xbf16>
    %cst_36 = arith.constant dense<0.000000e+00> : vector<2x128xf32>
    %243 = tpu.matmul %242, %10, %cst_36 {dimension_numbers = #tpu.dot_dimension_numbers<[1], [0], [0], [1], [0, 0, 1, 1], [], []>} : vector<2x32xbf16>, vector<32x128xbf16>, vector<2x128xf32> -> vector<2x128xf32>
    %244 = arith.addf %241, %243 : vector<2x128xf32>
    %245 = arith.negf %244 : vector<2x128xf32>
    %246 = math.exp %245 : vector<2x128xf32>
    %cst_37 = arith.constant 1.000000e+00 : f32
    %247 = vector.broadcast %cst_37 : f32 to vector<2x128xf32>
    %248 = arith.addf %247, %246 : vector<2x128xf32>
    %249 = arith.divf %247, %248 : vector<2x128xf32>
    %250 = math.tanh %244 : vector<2x128xf32>
    %251 = vector.extract_strided_slice %249 {offsets = [0, 0], sizes = [2, 32], strides = [1, 1]} : vector<2x128xf32> to vector<2x32xf32>
    %252 = vector.extract_strided_slice %249 {offsets = [0, 32], sizes = [2, 32], strides = [1, 1]} : vector<2x128xf32> to vector<2x32xf32>
    %253 = vector.extract_strided_slice %250 {offsets = [0, 64], sizes = [2, 32], strides = [1, 1]} : vector<2x128xf32> to vector<2x32xf32>
    %254 = vector.extract_strided_slice %249 {offsets = [0, 96], sizes = [2, 32], strides = [1, 1]} : vector<2x128xf32> to vector<2x32xf32>
    %255 = arith.mulf %252, %238 : vector<2x32xf32>
    %256 = arith.mulf %251, %253 : vector<2x32xf32>
    %257 = arith.addf %255, %256 : vector<2x32xf32>
    %258 = math.tanh %257 : vector<2x32xf32>
    %259 = arith.mulf %254, %258 : vector<2x32xf32>
    %260 = vector.extract_strided_slice %7 {offsets = [26, 0], sizes = [2, 128], strides = [1, 1]} : vector<32x128xf32> to vector<2x128xf32>
    %261 = arith.truncf %259 : vector<2x32xf32> to vector<2x32xbf16>
    %cst_38 = arith.constant dense<0.000000e+00> : vector<2x128xf32>
    %262 = tpu.matmul %261, %10, %cst_38 {dimension_numbers = #tpu.dot_dimension_numbers<[1], [0], [0], [1], [0, 0, 1, 1], [], []>} : vector<2x32xbf16>, vector<32x128xbf16>, vector<2x128xf32> -> vector<2x128xf32>
    %263 = arith.addf %260, %262 : vector<2x128xf32>
    %264 = arith.negf %263 : vector<2x128xf32>
    %265 = math.exp %264 : vector<2x128xf32>
    %cst_39 = arith.constant 1.000000e+00 : f32
    %266 = vector.broadcast %cst_39 : f32 to vector<2x128xf32>
    %267 = arith.addf %266, %265 : vector<2x128xf32>
    %268 = arith.divf %266, %267 : vector<2x128xf32>
    %269 = math.tanh %263 : vector<2x128xf32>
    %270 = vector.extract_strided_slice %268 {offsets = [0, 0], sizes = [2, 32], strides = [1, 1]} : vector<2x128xf32> to vector<2x32xf32>
    %271 = vector.extract_strided_slice %268 {offsets = [0, 32], sizes = [2, 32], strides = [1, 1]} : vector<2x128xf32> to vector<2x32xf32>
    %272 = vector.extract_strided_slice %269 {offsets = [0, 64], sizes = [2, 32], strides = [1, 1]} : vector<2x128xf32> to vector<2x32xf32>
    %273 = vector.extract_strided_slice %268 {offsets = [0, 96], sizes = [2, 32], strides = [1, 1]} : vector<2x128xf32> to vector<2x32xf32>
    %274 = arith.mulf %271, %257 : vector<2x32xf32>
    %275 = arith.mulf %270, %272 : vector<2x32xf32>
    %276 = arith.addf %274, %275 : vector<2x32xf32>
    %277 = math.tanh %276 : vector<2x32xf32>
    %278 = arith.mulf %273, %277 : vector<2x32xf32>
    %279 = vector.extract_strided_slice %7 {offsets = [28, 0], sizes = [2, 128], strides = [1, 1]} : vector<32x128xf32> to vector<2x128xf32>
    %280 = arith.truncf %278 : vector<2x32xf32> to vector<2x32xbf16>
    %cst_40 = arith.constant dense<0.000000e+00> : vector<2x128xf32>
    %281 = tpu.matmul %280, %10, %cst_40 {dimension_numbers = #tpu.dot_dimension_numbers<[1], [0], [0], [1], [0, 0, 1, 1], [], []>} : vector<2x32xbf16>, vector<32x128xbf16>, vector<2x128xf32> -> vector<2x128xf32>
    %282 = arith.addf %279, %281 : vector<2x128xf32>
    %283 = arith.negf %282 : vector<2x128xf32>
    %284 = math.exp %283 : vector<2x128xf32>
    %cst_41 = arith.constant 1.000000e+00 : f32
    %285 = vector.broadcast %cst_41 : f32 to vector<2x128xf32>
    %286 = arith.addf %285, %284 : vector<2x128xf32>
    %287 = arith.divf %285, %286 : vector<2x128xf32>
    %288 = math.tanh %282 : vector<2x128xf32>
    %289 = vector.extract_strided_slice %287 {offsets = [0, 0], sizes = [2, 32], strides = [1, 1]} : vector<2x128xf32> to vector<2x32xf32>
    %290 = vector.extract_strided_slice %287 {offsets = [0, 32], sizes = [2, 32], strides = [1, 1]} : vector<2x128xf32> to vector<2x32xf32>
    %291 = vector.extract_strided_slice %288 {offsets = [0, 64], sizes = [2, 32], strides = [1, 1]} : vector<2x128xf32> to vector<2x32xf32>
    %292 = vector.extract_strided_slice %287 {offsets = [0, 96], sizes = [2, 32], strides = [1, 1]} : vector<2x128xf32> to vector<2x32xf32>
    %293 = arith.mulf %290, %276 : vector<2x32xf32>
    %294 = arith.mulf %289, %291 : vector<2x32xf32>
    %295 = arith.addf %293, %294 : vector<2x32xf32>
    %296 = math.tanh %295 : vector<2x32xf32>
    %297 = arith.mulf %292, %296 : vector<2x32xf32>
    %298 = vector.extract_strided_slice %7 {offsets = [30, 0], sizes = [2, 128], strides = [1, 1]} : vector<32x128xf32> to vector<2x128xf32>
    %299 = arith.truncf %297 : vector<2x32xf32> to vector<2x32xbf16>
    %cst_42 = arith.constant dense<0.000000e+00> : vector<2x128xf32>
    %300 = tpu.matmul %299, %10, %cst_42 {dimension_numbers = #tpu.dot_dimension_numbers<[1], [0], [0], [1], [0, 0, 1, 1], [], []>} : vector<2x32xbf16>, vector<32x128xbf16>, vector<2x128xf32> -> vector<2x128xf32>
    %301 = arith.addf %298, %300 : vector<2x128xf32>
    %302 = arith.negf %301 : vector<2x128xf32>
    %303 = math.exp %302 : vector<2x128xf32>
    %cst_43 = arith.constant 1.000000e+00 : f32
    %304 = vector.broadcast %cst_43 : f32 to vector<2x128xf32>
    %305 = arith.addf %304, %303 : vector<2x128xf32>
    %306 = arith.divf %304, %305 : vector<2x128xf32>
    %307 = math.tanh %301 : vector<2x128xf32>
    %308 = vector.extract_strided_slice %306 {offsets = [0, 0], sizes = [2, 32], strides = [1, 1]} : vector<2x128xf32> to vector<2x32xf32>
    %309 = vector.extract_strided_slice %306 {offsets = [0, 32], sizes = [2, 32], strides = [1, 1]} : vector<2x128xf32> to vector<2x32xf32>
    %310 = vector.extract_strided_slice %307 {offsets = [0, 64], sizes = [2, 32], strides = [1, 1]} : vector<2x128xf32> to vector<2x32xf32>
    %311 = vector.extract_strided_slice %306 {offsets = [0, 96], sizes = [2, 32], strides = [1, 1]} : vector<2x128xf32> to vector<2x32xf32>
    %312 = arith.mulf %309, %295 : vector<2x32xf32>
    %313 = arith.mulf %308, %310 : vector<2x32xf32>
    %314 = arith.addf %312, %313 : vector<2x32xf32>
    %315 = math.tanh %314 : vector<2x32xf32>
    %316 = arith.mulf %311, %315 : vector<2x32xf32>
    %317 = tpu.concatenate %31, %50, %69, %88, %107, %126, %145, %164, %183, %202, %221, %240, %259, %278, %297, %316 in 0 : vector<2x32xf32>, vector<2x32xf32>, vector<2x32xf32>, vector<2x32xf32>, vector<2x32xf32>, vector<2x32xf32>, vector<2x32xf32>, vector<2x32xf32>, vector<2x32xf32>, vector<2x32xf32>, vector<2x32xf32>, vector<2x32xf32>, vector<2x32xf32>, vector<2x32xf32>, vector<2x32xf32>, vector<2x32xf32> -> vector<32x32xf32>
    %c0_44 = arith.constant 0 : index
    %c0_45 = arith.constant 0 : index
    %c0_46 = arith.constant 0 : index
    %318 = vector.load %arg4[%c0_44, %c0_45, %c0_46] : memref<3x32x32xf32, #tpu.memory_space<vmem>>, vector<1x32x32xf32>
    %319 = vector.shape_cast %318 : vector<1x32x32xf32> to vector<32x32xf32>
    %cst_47 = arith.constant dense<0.000000e+00> : vector<32x32xf32>
    %320 = tpu.matmul %317, %319, %cst_47 {dimension_numbers = #tpu.dot_dimension_numbers<[1], [0], [0], [1], [0, 0, 1, 1], [], []>} : vector<32x32xf32>, vector<32x32xf32>, vector<32x32xf32> -> vector<32x32xf32>
    %c0_48 = arith.constant 0 : index
    %c0_49 = arith.constant 0 : index
    %c0_50 = arith.constant 0 : index
    %321 = vector.load %arg5[%c0_48, %c0_49, %c0_50] : memref<3x1x32xf32, #tpu.memory_space<vmem>>, vector<1x1x32xf32>
    %322 = vector.shape_cast %321 : vector<1x1x32xf32> to vector<1x32xf32>
    %323 = vector.broadcast %322 : vector<1x32xf32> to vector<32x32xf32>
    %324 = arith.addf %320, %323 : vector<32x32xf32>
    %325 = arith.negf %324 : vector<32x32xf32>
    %326 = math.exp %325 : vector<32x32xf32>
    %cst_51 = arith.constant 1.000000e+00 : f32
    %327 = vector.broadcast %cst_51 : f32 to vector<32x32xf32>
    %328 = arith.addf %327, %326 : vector<32x32xf32>
    %329 = arith.divf %327, %328 : vector<32x32xf32>
    %330 = arith.mulf %329, %317 : vector<32x32xf32>
    %331 = arith.addf %0, %330 : vector<32x32xf32>
    %cst_52 = arith.constant dense<0.000000e+00> : vector<32xf32>
    %332 = vector.multi_reduction <add>, %331, %cst_52 [1] : vector<32x32xf32> to vector<32xf32>
    %333 = vector.shape_cast %332 : vector<32xf32> to vector<32x1xf32>
    %cst_53 = arith.constant 3.200000e+01 : f32
    %334 = vector.broadcast %cst_53 : f32 to vector<32x1xf32>
    %335 = arith.divf %333, %334 : vector<32x1xf32>
    %336 = vector.broadcast %335 : vector<32x1xf32> to vector<32x32xf32>
    %337 = arith.subf %331, %336 : vector<32x32xf32>
    %338 = arith.mulf %337, %337 : vector<32x32xf32>
    %cst_54 = arith.constant dense<0.000000e+00> : vector<32xf32>
    %339 = vector.multi_reduction <add>, %338, %cst_54 [1] : vector<32x32xf32> to vector<32xf32>
    %340 = vector.shape_cast %339 : vector<32xf32> to vector<32x1xf32>
    %cst_55 = arith.constant 3.200000e+01 : f32
    %341 = vector.broadcast %cst_55 : f32 to vector<32x1xf32>
    %342 = arith.divf %340, %341 : vector<32x1xf32>
    %343 = vector.broadcast %335 : vector<32x1xf32> to vector<32x32xf32>
    %344 = arith.subf %331, %343 : vector<32x32xf32>
    %cst_56 = arith.constant 9.99999974E-6 : f32
    %345 = vector.broadcast %cst_56 : f32 to vector<32x1xf32>
    %346 = arith.addf %342, %345 : vector<32x1xf32>
    %347 = math.rsqrt %346 : vector<32x1xf32>
    %348 = vector.broadcast %347 : vector<32x1xf32> to vector<32x32xf32>
    %349 = arith.mulf %344, %348 : vector<32x32xf32>
    %c0_57 = arith.constant 0 : index
    %c0_58 = arith.constant 0 : index
    %c0_59 = arith.constant 0 : index
    %350 = vector.load %arg6[%c0_57, %c0_58, %c0_59] : memref<3x1x32xf32, #tpu.memory_space<vmem>>, vector<1x1x32xf32>
    %351 = vector.shape_cast %350 : vector<1x1x32xf32> to vector<1x32xf32>
    %352 = vector.broadcast %351 : vector<1x32xf32> to vector<32x32xf32>
    %353 = arith.mulf %349, %352 : vector<32x32xf32>
    %c0_60 = arith.constant 0 : index
    %c0_61 = arith.constant 0 : index
    %c0_62 = arith.constant 0 : index
    %354 = vector.load %arg7[%c0_60, %c0_61, %c0_62] : memref<3x1x32xf32, #tpu.memory_space<vmem>>, vector<1x1x32xf32>
    %355 = vector.shape_cast %354 : vector<1x1x32xf32> to vector<1x32xf32>
    %356 = vector.broadcast %355 : vector<1x32xf32> to vector<32x32xf32>
    %357 = arith.addf %353, %356 : vector<32x32xf32>
    %c1 = arith.constant 1 : index
    %c0_63 = arith.constant 0 : index
    %c0_64 = arith.constant 0 : index
    %358 = vector.load %arg1[%c1, %c0_63, %c0_64] : memref<3x32x128xf32, #tpu.memory_space<vmem>>, vector<1x32x128xf32>
    %359 = vector.shape_cast %358 : vector<1x32x128xf32> to vector<32x128xf32>
    %cst_65 = arith.constant dense<0.000000e+00> : vector<32x128xf32>
    %360 = tpu.matmul %357, %359, %cst_65 {dimension_numbers = #tpu.dot_dimension_numbers<[1], [0], [0], [1], [0, 0, 1, 1], [], []>} : vector<32x32xf32>, vector<32x128xf32>, vector<32x128xf32> -> vector<32x128xf32>
    %c1_66 = arith.constant 1 : index
    %c0_67 = arith.constant 0 : index
    %c0_68 = arith.constant 0 : index
    %361 = vector.load %arg3[%c1_66, %c0_67, %c0_68] : memref<3x1x128xf32, #tpu.memory_space<vmem>>, vector<1x1x128xf32>
    %362 = vector.shape_cast %361 : vector<1x1x128xf32> to vector<1x128xf32>
    %363 = vector.broadcast %362 : vector<1x128xf32> to vector<32x128xf32>
    %364 = arith.addf %360, %363 : vector<32x128xf32>
    %c1_69 = arith.constant 1 : index
    %c0_70 = arith.constant 0 : index
    %c0_71 = arith.constant 0 : index
    %365 = vector.load %arg2[%c1_69, %c0_70, %c0_71] : memref<3x32x128xf32, #tpu.memory_space<vmem>>, vector<1x32x128xf32>
    %366 = vector.shape_cast %365 : vector<1x32x128xf32> to vector<32x128xf32>
    %367 = arith.truncf %366 : vector<32x128xf32> to vector<32x128xbf16>
    %cst_72 = arith.constant 0.000000e+00 : f32
    %368 = vector.broadcast %cst_72 : f32 to vector<2x32xf32>
    %cst_73 = arith.constant 0.000000e+00 : f32
    %369 = vector.broadcast %cst_73 : f32 to vector<2x32xf32>
    %370 = vector.extract_strided_slice %364 {offsets = [0, 0], sizes = [2, 128], strides = [1, 1]} : vector<32x128xf32> to vector<2x128xf32>
    %371 = arith.truncf %368 : vector<2x32xf32> to vector<2x32xbf16>
    %cst_74 = arith.constant dense<0.000000e+00> : vector<2x128xf32>
    %372 = tpu.matmul %371, %367, %cst_74 {dimension_numbers = #tpu.dot_dimension_numbers<[1], [0], [0], [1], [0, 0, 1, 1], [], []>} : vector<2x32xbf16>, vector<32x128xbf16>, vector<2x128xf32> -> vector<2x128xf32>
    %373 = arith.addf %370, %372 : vector<2x128xf32>
    %374 = arith.negf %373 : vector<2x128xf32>
    %375 = math.exp %374 : vector<2x128xf32>
    %cst_75 = arith.constant 1.000000e+00 : f32
    %376 = vector.broadcast %cst_75 : f32 to vector<2x128xf32>
    %377 = arith.addf %376, %375 : vector<2x128xf32>
    %378 = arith.divf %376, %377 : vector<2x128xf32>
    %379 = math.tanh %373 : vector<2x128xf32>
    %380 = vector.extract_strided_slice %378 {offsets = [0, 0], sizes = [2, 32], strides = [1, 1]} : vector<2x128xf32> to vector<2x32xf32>
    %381 = vector.extract_strided_slice %378 {offsets = [0, 32], sizes = [2, 32], strides = [1, 1]} : vector<2x128xf32> to vector<2x32xf32>
    %382 = vector.extract_strided_slice %379 {offsets = [0, 64], sizes = [2, 32], strides = [1, 1]} : vector<2x128xf32> to vector<2x32xf32>
    %383 = vector.extract_strided_slice %378 {offsets = [0, 96], sizes = [2, 32], strides = [1, 1]} : vector<2x128xf32> to vector<2x32xf32>
    %384 = arith.mulf %381, %369 : vector<2x32xf32>
    %385 = arith.mulf %380, %382 : vector<2x32xf32>
    %386 = arith.addf %384, %385 : vector<2x32xf32>
    %387 = math.tanh %386 : vector<2x32xf32>
    %388 = arith.mulf %383, %387 : vector<2x32xf32>
    %389 = vector.extract_strided_slice %364 {offsets = [2, 0], sizes = [2, 128], strides = [1, 1]} : vector<32x128xf32> to vector<2x128xf32>
    %390 = arith.truncf %388 : vector<2x32xf32> to vector<2x32xbf16>
    %cst_76 = arith.constant dense<0.000000e+00> : vector<2x128xf32>
    %391 = tpu.matmul %390, %367, %cst_76 {dimension_numbers = #tpu.dot_dimension_numbers<[1], [0], [0], [1], [0, 0, 1, 1], [], []>} : vector<2x32xbf16>, vector<32x128xbf16>, vector<2x128xf32> -> vector<2x128xf32>
    %392 = arith.addf %389, %391 : vector<2x128xf32>
    %393 = arith.negf %392 : vector<2x128xf32>
    %394 = math.exp %393 : vector<2x128xf32>
    %cst_77 = arith.constant 1.000000e+00 : f32
    %395 = vector.broadcast %cst_77 : f32 to vector<2x128xf32>
    %396 = arith.addf %395, %394 : vector<2x128xf32>
    %397 = arith.divf %395, %396 : vector<2x128xf32>
    %398 = math.tanh %392 : vector<2x128xf32>
    %399 = vector.extract_strided_slice %397 {offsets = [0, 0], sizes = [2, 32], strides = [1, 1]} : vector<2x128xf32> to vector<2x32xf32>
    %400 = vector.extract_strided_slice %397 {offsets = [0, 32], sizes = [2, 32], strides = [1, 1]} : vector<2x128xf32> to vector<2x32xf32>
    %401 = vector.extract_strided_slice %398 {offsets = [0, 64], sizes = [2, 32], strides = [1, 1]} : vector<2x128xf32> to vector<2x32xf32>
    %402 = vector.extract_strided_slice %397 {offsets = [0, 96], sizes = [2, 32], strides = [1, 1]} : vector<2x128xf32> to vector<2x32xf32>
    %403 = arith.mulf %400, %386 : vector<2x32xf32>
    %404 = arith.mulf %399, %401 : vector<2x32xf32>
    %405 = arith.addf %403, %404 : vector<2x32xf32>
    %406 = math.tanh %405 : vector<2x32xf32>
    %407 = arith.mulf %402, %406 : vector<2x32xf32>
    %408 = vector.extract_strided_slice %364 {offsets = [4, 0], sizes = [2, 128], strides = [1, 1]} : vector<32x128xf32> to vector<2x128xf32>
    %409 = arith.truncf %407 : vector<2x32xf32> to vector<2x32xbf16>
    %cst_78 = arith.constant dense<0.000000e+00> : vector<2x128xf32>
    %410 = tpu.matmul %409, %367, %cst_78 {dimension_numbers = #tpu.dot_dimension_numbers<[1], [0], [0], [1], [0, 0, 1, 1], [], []>} : vector<2x32xbf16>, vector<32x128xbf16>, vector<2x128xf32> -> vector<2x128xf32>
    %411 = arith.addf %408, %410 : vector<2x128xf32>
    %412 = arith.negf %411 : vector<2x128xf32>
    %413 = math.exp %412 : vector<2x128xf32>
    %cst_79 = arith.constant 1.000000e+00 : f32
    %414 = vector.broadcast %cst_79 : f32 to vector<2x128xf32>
    %415 = arith.addf %414, %413 : vector<2x128xf32>
    %416 = arith.divf %414, %415 : vector<2x128xf32>
    %417 = math.tanh %411 : vector<2x128xf32>
    %418 = vector.extract_strided_slice %416 {offsets = [0, 0], sizes = [2, 32], strides = [1, 1]} : vector<2x128xf32> to vector<2x32xf32>
    %419 = vector.extract_strided_slice %416 {offsets = [0, 32], sizes = [2, 32], strides = [1, 1]} : vector<2x128xf32> to vector<2x32xf32>
    %420 = vector.extract_strided_slice %417 {offsets = [0, 64], sizes = [2, 32], strides = [1, 1]} : vector<2x128xf32> to vector<2x32xf32>
    %421 = vector.extract_strided_slice %416 {offsets = [0, 96], sizes = [2, 32], strides = [1, 1]} : vector<2x128xf32> to vector<2x32xf32>
    %422 = arith.mulf %419, %405 : vector<2x32xf32>
    %423 = arith.mulf %418, %420 : vector<2x32xf32>
    %424 = arith.addf %422, %423 : vector<2x32xf32>
    %425 = math.tanh %424 : vector<2x32xf32>
    %426 = arith.mulf %421, %425 : vector<2x32xf32>
    %427 = vector.extract_strided_slice %364 {offsets = [6, 0], sizes = [2, 128], strides = [1, 1]} : vector<32x128xf32> to vector<2x128xf32>
    %428 = arith.truncf %426 : vector<2x32xf32> to vector<2x32xbf16>
    %cst_80 = arith.constant dense<0.000000e+00> : vector<2x128xf32>
    %429 = tpu.matmul %428, %367, %cst_80 {dimension_numbers = #tpu.dot_dimension_numbers<[1], [0], [0], [1], [0, 0, 1, 1], [], []>} : vector<2x32xbf16>, vector<32x128xbf16>, vector<2x128xf32> -> vector<2x128xf32>
    %430 = arith.addf %427, %429 : vector<2x128xf32>
    %431 = arith.negf %430 : vector<2x128xf32>
    %432 = math.exp %431 : vector<2x128xf32>
    %cst_81 = arith.constant 1.000000e+00 : f32
    %433 = vector.broadcast %cst_81 : f32 to vector<2x128xf32>
    %434 = arith.addf %433, %432 : vector<2x128xf32>
    %435 = arith.divf %433, %434 : vector<2x128xf32>
    %436 = math.tanh %430 : vector<2x128xf32>
    %437 = vector.extract_strided_slice %435 {offsets = [0, 0], sizes = [2, 32], strides = [1, 1]} : vector<2x128xf32> to vector<2x32xf32>
    %438 = vector.extract_strided_slice %435 {offsets = [0, 32], sizes = [2, 32], strides = [1, 1]} : vector<2x128xf32> to vector<2x32xf32>
    %439 = vector.extract_strided_slice %436 {offsets = [0, 64], sizes = [2, 32], strides = [1, 1]} : vector<2x128xf32> to vector<2x32xf32>
    %440 = vector.extract_strided_slice %435 {offsets = [0, 96], sizes = [2, 32], strides = [1, 1]} : vector<2x128xf32> to vector<2x32xf32>
    %441 = arith.mulf %438, %424 : vector<2x32xf32>
    %442 = arith.mulf %437, %439 : vector<2x32xf32>
    %443 = arith.addf %441, %442 : vector<2x32xf32>
    %444 = math.tanh %443 : vector<2x32xf32>
    %445 = arith.mulf %440, %444 : vector<2x32xf32>
    %446 = vector.extract_strided_slice %364 {offsets = [8, 0], sizes = [2, 128], strides = [1, 1]} : vector<32x128xf32> to vector<2x128xf32>
    %447 = arith.truncf %445 : vector<2x32xf32> to vector<2x32xbf16>
    %cst_82 = arith.constant dense<0.000000e+00> : vector<2x128xf32>
    %448 = tpu.matmul %447, %367, %cst_82 {dimension_numbers = #tpu.dot_dimension_numbers<[1], [0], [0], [1], [0, 0, 1, 1], [], []>} : vector<2x32xbf16>, vector<32x128xbf16>, vector<2x128xf32> -> vector<2x128xf32>
    %449 = arith.addf %446, %448 : vector<2x128xf32>
    %450 = arith.negf %449 : vector<2x128xf32>
    %451 = math.exp %450 : vector<2x128xf32>
    %cst_83 = arith.constant 1.000000e+00 : f32
    %452 = vector.broadcast %cst_83 : f32 to vector<2x128xf32>
    %453 = arith.addf %452, %451 : vector<2x128xf32>
    %454 = arith.divf %452, %453 : vector<2x128xf32>
    %455 = math.tanh %449 : vector<2x128xf32>
    %456 = vector.extract_strided_slice %454 {offsets = [0, 0], sizes = [2, 32], strides = [1, 1]} : vector<2x128xf32> to vector<2x32xf32>
    %457 = vector.extract_strided_slice %454 {offsets = [0, 32], sizes = [2, 32], strides = [1, 1]} : vector<2x128xf32> to vector<2x32xf32>
    %458 = vector.extract_strided_slice %455 {offsets = [0, 64], sizes = [2, 32], strides = [1, 1]} : vector<2x128xf32> to vector<2x32xf32>
    %459 = vector.extract_strided_slice %454 {offsets = [0, 96], sizes = [2, 32], strides = [1, 1]} : vector<2x128xf32> to vector<2x32xf32>
    %460 = arith.mulf %457, %443 : vector<2x32xf32>
    %461 = arith.mulf %456, %458 : vector<2x32xf32>
    %462 = arith.addf %460, %461 : vector<2x32xf32>
    %463 = math.tanh %462 : vector<2x32xf32>
    %464 = arith.mulf %459, %463 : vector<2x32xf32>
    %465 = vector.extract_strided_slice %364 {offsets = [10, 0], sizes = [2, 128], strides = [1, 1]} : vector<32x128xf32> to vector<2x128xf32>
    %466 = arith.truncf %464 : vector<2x32xf32> to vector<2x32xbf16>
    %cst_84 = arith.constant dense<0.000000e+00> : vector<2x128xf32>
    %467 = tpu.matmul %466, %367, %cst_84 {dimension_numbers = #tpu.dot_dimension_numbers<[1], [0], [0], [1], [0, 0, 1, 1], [], []>} : vector<2x32xbf16>, vector<32x128xbf16>, vector<2x128xf32> -> vector<2x128xf32>
    %468 = arith.addf %465, %467 : vector<2x128xf32>
    %469 = arith.negf %468 : vector<2x128xf32>
    %470 = math.exp %469 : vector<2x128xf32>
    %cst_85 = arith.constant 1.000000e+00 : f32
    %471 = vector.broadcast %cst_85 : f32 to vector<2x128xf32>
    %472 = arith.addf %471, %470 : vector<2x128xf32>
    %473 = arith.divf %471, %472 : vector<2x128xf32>
    %474 = math.tanh %468 : vector<2x128xf32>
    %475 = vector.extract_strided_slice %473 {offsets = [0, 0], sizes = [2, 32], strides = [1, 1]} : vector<2x128xf32> to vector<2x32xf32>
    %476 = vector.extract_strided_slice %473 {offsets = [0, 32], sizes = [2, 32], strides = [1, 1]} : vector<2x128xf32> to vector<2x32xf32>
    %477 = vector.extract_strided_slice %474 {offsets = [0, 64], sizes = [2, 32], strides = [1, 1]} : vector<2x128xf32> to vector<2x32xf32>
    %478 = vector.extract_strided_slice %473 {offsets = [0, 96], sizes = [2, 32], strides = [1, 1]} : vector<2x128xf32> to vector<2x32xf32>
    %479 = arith.mulf %476, %462 : vector<2x32xf32>
    %480 = arith.mulf %475, %477 : vector<2x32xf32>
    %481 = arith.addf %479, %480 : vector<2x32xf32>
    %482 = math.tanh %481 : vector<2x32xf32>
    %483 = arith.mulf %478, %482 : vector<2x32xf32>
    %484 = vector.extract_strided_slice %364 {offsets = [12, 0], sizes = [2, 128], strides = [1, 1]} : vector<32x128xf32> to vector<2x128xf32>
    %485 = arith.truncf %483 : vector<2x32xf32> to vector<2x32xbf16>
    %cst_86 = arith.constant dense<0.000000e+00> : vector<2x128xf32>
    %486 = tpu.matmul %485, %367, %cst_86 {dimension_numbers = #tpu.dot_dimension_numbers<[1], [0], [0], [1], [0, 0, 1, 1], [], []>} : vector<2x32xbf16>, vector<32x128xbf16>, vector<2x128xf32> -> vector<2x128xf32>
    %487 = arith.addf %484, %486 : vector<2x128xf32>
    %488 = arith.negf %487 : vector<2x128xf32>
    %489 = math.exp %488 : vector<2x128xf32>
    %cst_87 = arith.constant 1.000000e+00 : f32
    %490 = vector.broadcast %cst_87 : f32 to vector<2x128xf32>
    %491 = arith.addf %490, %489 : vector<2x128xf32>
    %492 = arith.divf %490, %491 : vector<2x128xf32>
    %493 = math.tanh %487 : vector<2x128xf32>
    %494 = vector.extract_strided_slice %492 {offsets = [0, 0], sizes = [2, 32], strides = [1, 1]} : vector<2x128xf32> to vector<2x32xf32>
    %495 = vector.extract_strided_slice %492 {offsets = [0, 32], sizes = [2, 32], strides = [1, 1]} : vector<2x128xf32> to vector<2x32xf32>
    %496 = vector.extract_strided_slice %493 {offsets = [0, 64], sizes = [2, 32], strides = [1, 1]} : vector<2x128xf32> to vector<2x32xf32>
    %497 = vector.extract_strided_slice %492 {offsets = [0, 96], sizes = [2, 32], strides = [1, 1]} : vector<2x128xf32> to vector<2x32xf32>
    %498 = arith.mulf %495, %481 : vector<2x32xf32>
    %499 = arith.mulf %494, %496 : vector<2x32xf32>
    %500 = arith.addf %498, %499 : vector<2x32xf32>
    %501 = math.tanh %500 : vector<2x32xf32>
    %502 = arith.mulf %497, %501 : vector<2x32xf32>
    %503 = vector.extract_strided_slice %364 {offsets = [14, 0], sizes = [2, 128], strides = [1, 1]} : vector<32x128xf32> to vector<2x128xf32>
    %504 = arith.truncf %502 : vector<2x32xf32> to vector<2x32xbf16>
    %cst_88 = arith.constant dense<0.000000e+00> : vector<2x128xf32>
    %505 = tpu.matmul %504, %367, %cst_88 {dimension_numbers = #tpu.dot_dimension_numbers<[1], [0], [0], [1], [0, 0, 1, 1], [], []>} : vector<2x32xbf16>, vector<32x128xbf16>, vector<2x128xf32> -> vector<2x128xf32>
    %506 = arith.addf %503, %505 : vector<2x128xf32>
    %507 = arith.negf %506 : vector<2x128xf32>
    %508 = math.exp %507 : vector<2x128xf32>
    %cst_89 = arith.constant 1.000000e+00 : f32
    %509 = vector.broadcast %cst_89 : f32 to vector<2x128xf32>
    %510 = arith.addf %509, %508 : vector<2x128xf32>
    %511 = arith.divf %509, %510 : vector<2x128xf32>
    %512 = math.tanh %506 : vector<2x128xf32>
    %513 = vector.extract_strided_slice %511 {offsets = [0, 0], sizes = [2, 32], strides = [1, 1]} : vector<2x128xf32> to vector<2x32xf32>
    %514 = vector.extract_strided_slice %511 {offsets = [0, 32], sizes = [2, 32], strides = [1, 1]} : vector<2x128xf32> to vector<2x32xf32>
    %515 = vector.extract_strided_slice %512 {offsets = [0, 64], sizes = [2, 32], strides = [1, 1]} : vector<2x128xf32> to vector<2x32xf32>
    %516 = vector.extract_strided_slice %511 {offsets = [0, 96], sizes = [2, 32], strides = [1, 1]} : vector<2x128xf32> to vector<2x32xf32>
    %517 = arith.mulf %514, %500 : vector<2x32xf32>
    %518 = arith.mulf %513, %515 : vector<2x32xf32>
    %519 = arith.addf %517, %518 : vector<2x32xf32>
    %520 = math.tanh %519 : vector<2x32xf32>
    %521 = arith.mulf %516, %520 : vector<2x32xf32>
    %522 = vector.extract_strided_slice %364 {offsets = [16, 0], sizes = [2, 128], strides = [1, 1]} : vector<32x128xf32> to vector<2x128xf32>
    %523 = arith.truncf %521 : vector<2x32xf32> to vector<2x32xbf16>
    %cst_90 = arith.constant dense<0.000000e+00> : vector<2x128xf32>
    %524 = tpu.matmul %523, %367, %cst_90 {dimension_numbers = #tpu.dot_dimension_numbers<[1], [0], [0], [1], [0, 0, 1, 1], [], []>} : vector<2x32xbf16>, vector<32x128xbf16>, vector<2x128xf32> -> vector<2x128xf32>
    %525 = arith.addf %522, %524 : vector<2x128xf32>
    %526 = arith.negf %525 : vector<2x128xf32>
    %527 = math.exp %526 : vector<2x128xf32>
    %cst_91 = arith.constant 1.000000e+00 : f32
    %528 = vector.broadcast %cst_91 : f32 to vector<2x128xf32>
    %529 = arith.addf %528, %527 : vector<2x128xf32>
    %530 = arith.divf %528, %529 : vector<2x128xf32>
    %531 = math.tanh %525 : vector<2x128xf32>
    %532 = vector.extract_strided_slice %530 {offsets = [0, 0], sizes = [2, 32], strides = [1, 1]} : vector<2x128xf32> to vector<2x32xf32>
    %533 = vector.extract_strided_slice %530 {offsets = [0, 32], sizes = [2, 32], strides = [1, 1]} : vector<2x128xf32> to vector<2x32xf32>
    %534 = vector.extract_strided_slice %531 {offsets = [0, 64], sizes = [2, 32], strides = [1, 1]} : vector<2x128xf32> to vector<2x32xf32>
    %535 = vector.extract_strided_slice %530 {offsets = [0, 96], sizes = [2, 32], strides = [1, 1]} : vector<2x128xf32> to vector<2x32xf32>
    %536 = arith.mulf %533, %519 : vector<2x32xf32>
    %537 = arith.mulf %532, %534 : vector<2x32xf32>
    %538 = arith.addf %536, %537 : vector<2x32xf32>
    %539 = math.tanh %538 : vector<2x32xf32>
    %540 = arith.mulf %535, %539 : vector<2x32xf32>
    %541 = vector.extract_strided_slice %364 {offsets = [18, 0], sizes = [2, 128], strides = [1, 1]} : vector<32x128xf32> to vector<2x128xf32>
    %542 = arith.truncf %540 : vector<2x32xf32> to vector<2x32xbf16>
    %cst_92 = arith.constant dense<0.000000e+00> : vector<2x128xf32>
    %543 = tpu.matmul %542, %367, %cst_92 {dimension_numbers = #tpu.dot_dimension_numbers<[1], [0], [0], [1], [0, 0, 1, 1], [], []>} : vector<2x32xbf16>, vector<32x128xbf16>, vector<2x128xf32> -> vector<2x128xf32>
    %544 = arith.addf %541, %543 : vector<2x128xf32>
    %545 = arith.negf %544 : vector<2x128xf32>
    %546 = math.exp %545 : vector<2x128xf32>
    %cst_93 = arith.constant 1.000000e+00 : f32
    %547 = vector.broadcast %cst_93 : f32 to vector<2x128xf32>
    %548 = arith.addf %547, %546 : vector<2x128xf32>
    %549 = arith.divf %547, %548 : vector<2x128xf32>
    %550 = math.tanh %544 : vector<2x128xf32>
    %551 = vector.extract_strided_slice %549 {offsets = [0, 0], sizes = [2, 32], strides = [1, 1]} : vector<2x128xf32> to vector<2x32xf32>
    %552 = vector.extract_strided_slice %549 {offsets = [0, 32], sizes = [2, 32], strides = [1, 1]} : vector<2x128xf32> to vector<2x32xf32>
    %553 = vector.extract_strided_slice %550 {offsets = [0, 64], sizes = [2, 32], strides = [1, 1]} : vector<2x128xf32> to vector<2x32xf32>
    %554 = vector.extract_strided_slice %549 {offsets = [0, 96], sizes = [2, 32], strides = [1, 1]} : vector<2x128xf32> to vector<2x32xf32>
    %555 = arith.mulf %552, %538 : vector<2x32xf32>
    %556 = arith.mulf %551, %553 : vector<2x32xf32>
    %557 = arith.addf %555, %556 : vector<2x32xf32>
    %558 = math.tanh %557 : vector<2x32xf32>
    %559 = arith.mulf %554, %558 : vector<2x32xf32>
    %560 = vector.extract_strided_slice %364 {offsets = [20, 0], sizes = [2, 128], strides = [1, 1]} : vector<32x128xf32> to vector<2x128xf32>
    %561 = arith.truncf %559 : vector<2x32xf32> to vector<2x32xbf16>
    %cst_94 = arith.constant dense<0.000000e+00> : vector<2x128xf32>
    %562 = tpu.matmul %561, %367, %cst_94 {dimension_numbers = #tpu.dot_dimension_numbers<[1], [0], [0], [1], [0, 0, 1, 1], [], []>} : vector<2x32xbf16>, vector<32x128xbf16>, vector<2x128xf32> -> vector<2x128xf32>
    %563 = arith.addf %560, %562 : vector<2x128xf32>
    %564 = arith.negf %563 : vector<2x128xf32>
    %565 = math.exp %564 : vector<2x128xf32>
    %cst_95 = arith.constant 1.000000e+00 : f32
    %566 = vector.broadcast %cst_95 : f32 to vector<2x128xf32>
    %567 = arith.addf %566, %565 : vector<2x128xf32>
    %568 = arith.divf %566, %567 : vector<2x128xf32>
    %569 = math.tanh %563 : vector<2x128xf32>
    %570 = vector.extract_strided_slice %568 {offsets = [0, 0], sizes = [2, 32], strides = [1, 1]} : vector<2x128xf32> to vector<2x32xf32>
    %571 = vector.extract_strided_slice %568 {offsets = [0, 32], sizes = [2, 32], strides = [1, 1]} : vector<2x128xf32> to vector<2x32xf32>
    %572 = vector.extract_strided_slice %569 {offsets = [0, 64], sizes = [2, 32], strides = [1, 1]} : vector<2x128xf32> to vector<2x32xf32>
    %573 = vector.extract_strided_slice %568 {offsets = [0, 96], sizes = [2, 32], strides = [1, 1]} : vector<2x128xf32> to vector<2x32xf32>
    %574 = arith.mulf %571, %557 : vector<2x32xf32>
    %575 = arith.mulf %570, %572 : vector<2x32xf32>
    %576 = arith.addf %574, %575 : vector<2x32xf32>
    %577 = math.tanh %576 : vector<2x32xf32>
    %578 = arith.mulf %573, %577 : vector<2x32xf32>
    %579 = vector.extract_strided_slice %364 {offsets = [22, 0], sizes = [2, 128], strides = [1, 1]} : vector<32x128xf32> to vector<2x128xf32>
    %580 = arith.truncf %578 : vector<2x32xf32> to vector<2x32xbf16>
    %cst_96 = arith.constant dense<0.000000e+00> : vector<2x128xf32>
    %581 = tpu.matmul %580, %367, %cst_96 {dimension_numbers = #tpu.dot_dimension_numbers<[1], [0], [0], [1], [0, 0, 1, 1], [], []>} : vector<2x32xbf16>, vector<32x128xbf16>, vector<2x128xf32> -> vector<2x128xf32>
    %582 = arith.addf %579, %581 : vector<2x128xf32>
    %583 = arith.negf %582 : vector<2x128xf32>
    %584 = math.exp %583 : vector<2x128xf32>
    %cst_97 = arith.constant 1.000000e+00 : f32
    %585 = vector.broadcast %cst_97 : f32 to vector<2x128xf32>
    %586 = arith.addf %585, %584 : vector<2x128xf32>
    %587 = arith.divf %585, %586 : vector<2x128xf32>
    %588 = math.tanh %582 : vector<2x128xf32>
    %589 = vector.extract_strided_slice %587 {offsets = [0, 0], sizes = [2, 32], strides = [1, 1]} : vector<2x128xf32> to vector<2x32xf32>
    %590 = vector.extract_strided_slice %587 {offsets = [0, 32], sizes = [2, 32], strides = [1, 1]} : vector<2x128xf32> to vector<2x32xf32>
    %591 = vector.extract_strided_slice %588 {offsets = [0, 64], sizes = [2, 32], strides = [1, 1]} : vector<2x128xf32> to vector<2x32xf32>
    %592 = vector.extract_strided_slice %587 {offsets = [0, 96], sizes = [2, 32], strides = [1, 1]} : vector<2x128xf32> to vector<2x32xf32>
    %593 = arith.mulf %590, %576 : vector<2x32xf32>
    %594 = arith.mulf %589, %591 : vector<2x32xf32>
    %595 = arith.addf %593, %594 : vector<2x32xf32>
    %596 = math.tanh %595 : vector<2x32xf32>
    %597 = arith.mulf %592, %596 : vector<2x32xf32>
    %598 = vector.extract_strided_slice %364 {offsets = [24, 0], sizes = [2, 128], strides = [1, 1]} : vector<32x128xf32> to vector<2x128xf32>
    %599 = arith.truncf %597 : vector<2x32xf32> to vector<2x32xbf16>
    %cst_98 = arith.constant dense<0.000000e+00> : vector<2x128xf32>
    %600 = tpu.matmul %599, %367, %cst_98 {dimension_numbers = #tpu.dot_dimension_numbers<[1], [0], [0], [1], [0, 0, 1, 1], [], []>} : vector<2x32xbf16>, vector<32x128xbf16>, vector<2x128xf32> -> vector<2x128xf32>
    %601 = arith.addf %598, %600 : vector<2x128xf32>
    %602 = arith.negf %601 : vector<2x128xf32>
    %603 = math.exp %602 : vector<2x128xf32>
    %cst_99 = arith.constant 1.000000e+00 : f32
    %604 = vector.broadcast %cst_99 : f32 to vector<2x128xf32>
    %605 = arith.addf %604, %603 : vector<2x128xf32>
    %606 = arith.divf %604, %605 : vector<2x128xf32>
    %607 = math.tanh %601 : vector<2x128xf32>
    %608 = vector.extract_strided_slice %606 {offsets = [0, 0], sizes = [2, 32], strides = [1, 1]} : vector<2x128xf32> to vector<2x32xf32>
    %609 = vector.extract_strided_slice %606 {offsets = [0, 32], sizes = [2, 32], strides = [1, 1]} : vector<2x128xf32> to vector<2x32xf32>
    %610 = vector.extract_strided_slice %607 {offsets = [0, 64], sizes = [2, 32], strides = [1, 1]} : vector<2x128xf32> to vector<2x32xf32>
    %611 = vector.extract_strided_slice %606 {offsets = [0, 96], sizes = [2, 32], strides = [1, 1]} : vector<2x128xf32> to vector<2x32xf32>
    %612 = arith.mulf %609, %595 : vector<2x32xf32>
    %613 = arith.mulf %608, %610 : vector<2x32xf32>
    %614 = arith.addf %612, %613 : vector<2x32xf32>
    %615 = math.tanh %614 : vector<2x32xf32>
    %616 = arith.mulf %611, %615 : vector<2x32xf32>
    %617 = vector.extract_strided_slice %364 {offsets = [26, 0], sizes = [2, 128], strides = [1, 1]} : vector<32x128xf32> to vector<2x128xf32>
    %618 = arith.truncf %616 : vector<2x32xf32> to vector<2x32xbf16>
    %cst_100 = arith.constant dense<0.000000e+00> : vector<2x128xf32>
    %619 = tpu.matmul %618, %367, %cst_100 {dimension_numbers = #tpu.dot_dimension_numbers<[1], [0], [0], [1], [0, 0, 1, 1], [], []>} : vector<2x32xbf16>, vector<32x128xbf16>, vector<2x128xf32> -> vector<2x128xf32>
    %620 = arith.addf %617, %619 : vector<2x128xf32>
    %621 = arith.negf %620 : vector<2x128xf32>
    %622 = math.exp %621 : vector<2x128xf32>
    %cst_101 = arith.constant 1.000000e+00 : f32
    %623 = vector.broadcast %cst_101 : f32 to vector<2x128xf32>
    %624 = arith.addf %623, %622 : vector<2x128xf32>
    %625 = arith.divf %623, %624 : vector<2x128xf32>
    %626 = math.tanh %620 : vector<2x128xf32>
    %627 = vector.extract_strided_slice %625 {offsets = [0, 0], sizes = [2, 32], strides = [1, 1]} : vector<2x128xf32> to vector<2x32xf32>
    %628 = vector.extract_strided_slice %625 {offsets = [0, 32], sizes = [2, 32], strides = [1, 1]} : vector<2x128xf32> to vector<2x32xf32>
    %629 = vector.extract_strided_slice %626 {offsets = [0, 64], sizes = [2, 32], strides = [1, 1]} : vector<2x128xf32> to vector<2x32xf32>
    %630 = vector.extract_strided_slice %625 {offsets = [0, 96], sizes = [2, 32], strides = [1, 1]} : vector<2x128xf32> to vector<2x32xf32>
    %631 = arith.mulf %628, %614 : vector<2x32xf32>
    %632 = arith.mulf %627, %629 : vector<2x32xf32>
    %633 = arith.addf %631, %632 : vector<2x32xf32>
    %634 = math.tanh %633 : vector<2x32xf32>
    %635 = arith.mulf %630, %634 : vector<2x32xf32>
    %636 = vector.extract_strided_slice %364 {offsets = [28, 0], sizes = [2, 128], strides = [1, 1]} : vector<32x128xf32> to vector<2x128xf32>
    %637 = arith.truncf %635 : vector<2x32xf32> to vector<2x32xbf16>
    %cst_102 = arith.constant dense<0.000000e+00> : vector<2x128xf32>
    %638 = tpu.matmul %637, %367, %cst_102 {dimension_numbers = #tpu.dot_dimension_numbers<[1], [0], [0], [1], [0, 0, 1, 1], [], []>} : vector<2x32xbf16>, vector<32x128xbf16>, vector<2x128xf32> -> vector<2x128xf32>
    %639 = arith.addf %636, %638 : vector<2x128xf32>
    %640 = arith.negf %639 : vector<2x128xf32>
    %641 = math.exp %640 : vector<2x128xf32>
    %cst_103 = arith.constant 1.000000e+00 : f32
    %642 = vector.broadcast %cst_103 : f32 to vector<2x128xf32>
    %643 = arith.addf %642, %641 : vector<2x128xf32>
    %644 = arith.divf %642, %643 : vector<2x128xf32>
    %645 = math.tanh %639 : vector<2x128xf32>
    %646 = vector.extract_strided_slice %644 {offsets = [0, 0], sizes = [2, 32], strides = [1, 1]} : vector<2x128xf32> to vector<2x32xf32>
    %647 = vector.extract_strided_slice %644 {offsets = [0, 32], sizes = [2, 32], strides = [1, 1]} : vector<2x128xf32> to vector<2x32xf32>
    %648 = vector.extract_strided_slice %645 {offsets = [0, 64], sizes = [2, 32], strides = [1, 1]} : vector<2x128xf32> to vector<2x32xf32>
    %649 = vector.extract_strided_slice %644 {offsets = [0, 96], sizes = [2, 32], strides = [1, 1]} : vector<2x128xf32> to vector<2x32xf32>
    %650 = arith.mulf %647, %633 : vector<2x32xf32>
    %651 = arith.mulf %646, %648 : vector<2x32xf32>
    %652 = arith.addf %650, %651 : vector<2x32xf32>
    %653 = math.tanh %652 : vector<2x32xf32>
    %654 = arith.mulf %649, %653 : vector<2x32xf32>
    %655 = vector.extract_strided_slice %364 {offsets = [30, 0], sizes = [2, 128], strides = [1, 1]} : vector<32x128xf32> to vector<2x128xf32>
    %656 = arith.truncf %654 : vector<2x32xf32> to vector<2x32xbf16>
    %cst_104 = arith.constant dense<0.000000e+00> : vector<2x128xf32>
    %657 = tpu.matmul %656, %367, %cst_104 {dimension_numbers = #tpu.dot_dimension_numbers<[1], [0], [0], [1], [0, 0, 1, 1], [], []>} : vector<2x32xbf16>, vector<32x128xbf16>, vector<2x128xf32> -> vector<2x128xf32>
    %658 = arith.addf %655, %657 : vector<2x128xf32>
    %659 = arith.negf %658 : vector<2x128xf32>
    %660 = math.exp %659 : vector<2x128xf32>
    %cst_105 = arith.constant 1.000000e+00 : f32
    %661 = vector.broadcast %cst_105 : f32 to vector<2x128xf32>
    %662 = arith.addf %661, %660 : vector<2x128xf32>
    %663 = arith.divf %661, %662 : vector<2x128xf32>
    %664 = math.tanh %658 : vector<2x128xf32>
    %665 = vector.extract_strided_slice %663 {offsets = [0, 0], sizes = [2, 32], strides = [1, 1]} : vector<2x128xf32> to vector<2x32xf32>
    %666 = vector.extract_strided_slice %663 {offsets = [0, 32], sizes = [2, 32], strides = [1, 1]} : vector<2x128xf32> to vector<2x32xf32>
    %667 = vector.extract_strided_slice %664 {offsets = [0, 64], sizes = [2, 32], strides = [1, 1]} : vector<2x128xf32> to vector<2x32xf32>
    %668 = vector.extract_strided_slice %663 {offsets = [0, 96], sizes = [2, 32], strides = [1, 1]} : vector<2x128xf32> to vector<2x32xf32>
    %669 = arith.mulf %666, %652 : vector<2x32xf32>
    %670 = arith.mulf %665, %667 : vector<2x32xf32>
    %671 = arith.addf %669, %670 : vector<2x32xf32>
    %672 = math.tanh %671 : vector<2x32xf32>
    %673 = arith.mulf %668, %672 : vector<2x32xf32>
    %674 = tpu.concatenate %388, %407, %426, %445, %464, %483, %502, %521, %540, %559, %578, %597, %616, %635, %654, %673 in 0 : vector<2x32xf32>, vector<2x32xf32>, vector<2x32xf32>, vector<2x32xf32>, vector<2x32xf32>, vector<2x32xf32>, vector<2x32xf32>, vector<2x32xf32>, vector<2x32xf32>, vector<2x32xf32>, vector<2x32xf32>, vector<2x32xf32>, vector<2x32xf32>, vector<2x32xf32>, vector<2x32xf32>, vector<2x32xf32> -> vector<32x32xf32>
    %c1_106 = arith.constant 1 : index
    %c0_107 = arith.constant 0 : index
    %c0_108 = arith.constant 0 : index
    %675 = vector.load %arg4[%c1_106, %c0_107, %c0_108] : memref<3x32x32xf32, #tpu.memory_space<vmem>>, vector<1x32x32xf32>
    %676 = vector.shape_cast %675 : vector<1x32x32xf32> to vector<32x32xf32>
    %cst_109 = arith.constant dense<0.000000e+00> : vector<32x32xf32>
    %677 = tpu.matmul %674, %676, %cst_109 {dimension_numbers = #tpu.dot_dimension_numbers<[1], [0], [0], [1], [0, 0, 1, 1], [], []>} : vector<32x32xf32>, vector<32x32xf32>, vector<32x32xf32> -> vector<32x32xf32>
    %c1_110 = arith.constant 1 : index
    %c0_111 = arith.constant 0 : index
    %c0_112 = arith.constant 0 : index
    %678 = vector.load %arg5[%c1_110, %c0_111, %c0_112] : memref<3x1x32xf32, #tpu.memory_space<vmem>>, vector<1x1x32xf32>
    %679 = vector.shape_cast %678 : vector<1x1x32xf32> to vector<1x32xf32>
    %680 = vector.broadcast %679 : vector<1x32xf32> to vector<32x32xf32>
    %681 = arith.addf %677, %680 : vector<32x32xf32>
    %682 = arith.negf %681 : vector<32x32xf32>
    %683 = math.exp %682 : vector<32x32xf32>
    %cst_113 = arith.constant 1.000000e+00 : f32
    %684 = vector.broadcast %cst_113 : f32 to vector<32x32xf32>
    %685 = arith.addf %684, %683 : vector<32x32xf32>
    %686 = arith.divf %684, %685 : vector<32x32xf32>
    %687 = arith.mulf %686, %674 : vector<32x32xf32>
    %688 = arith.addf %357, %687 : vector<32x32xf32>
    %cst_114 = arith.constant dense<0.000000e+00> : vector<32xf32>
    %689 = vector.multi_reduction <add>, %688, %cst_114 [1] : vector<32x32xf32> to vector<32xf32>
    %690 = vector.shape_cast %689 : vector<32xf32> to vector<32x1xf32>
    %cst_115 = arith.constant 3.200000e+01 : f32
    %691 = vector.broadcast %cst_115 : f32 to vector<32x1xf32>
    %692 = arith.divf %690, %691 : vector<32x1xf32>
    %693 = vector.broadcast %692 : vector<32x1xf32> to vector<32x32xf32>
    %694 = arith.subf %688, %693 : vector<32x32xf32>
    %695 = arith.mulf %694, %694 : vector<32x32xf32>
    %cst_116 = arith.constant dense<0.000000e+00> : vector<32xf32>
    %696 = vector.multi_reduction <add>, %695, %cst_116 [1] : vector<32x32xf32> to vector<32xf32>
    %697 = vector.shape_cast %696 : vector<32xf32> to vector<32x1xf32>
    %cst_117 = arith.constant 3.200000e+01 : f32
    %698 = vector.broadcast %cst_117 : f32 to vector<32x1xf32>
    %699 = arith.divf %697, %698 : vector<32x1xf32>
    %700 = vector.broadcast %692 : vector<32x1xf32> to vector<32x32xf32>
    %701 = arith.subf %688, %700 : vector<32x32xf32>
    %cst_118 = arith.constant 9.99999974E-6 : f32
    %702 = vector.broadcast %cst_118 : f32 to vector<32x1xf32>
    %703 = arith.addf %699, %702 : vector<32x1xf32>
    %704 = math.rsqrt %703 : vector<32x1xf32>
    %705 = vector.broadcast %704 : vector<32x1xf32> to vector<32x32xf32>
    %706 = arith.mulf %701, %705 : vector<32x32xf32>
    %c1_119 = arith.constant 1 : index
    %c0_120 = arith.constant 0 : index
    %c0_121 = arith.constant 0 : index
    %707 = vector.load %arg6[%c1_119, %c0_120, %c0_121] : memref<3x1x32xf32, #tpu.memory_space<vmem>>, vector<1x1x32xf32>
    %708 = vector.shape_cast %707 : vector<1x1x32xf32> to vector<1x32xf32>
    %709 = vector.broadcast %708 : vector<1x32xf32> to vector<32x32xf32>
    %710 = arith.mulf %706, %709 : vector<32x32xf32>
    %c1_122 = arith.constant 1 : index
    %c0_123 = arith.constant 0 : index
    %c0_124 = arith.constant 0 : index
    %711 = vector.load %arg7[%c1_122, %c0_123, %c0_124] : memref<3x1x32xf32, #tpu.memory_space<vmem>>, vector<1x1x32xf32>
    %712 = vector.shape_cast %711 : vector<1x1x32xf32> to vector<1x32xf32>
    %713 = vector.broadcast %712 : vector<1x32xf32> to vector<32x32xf32>
    %714 = arith.addf %710, %713 : vector<32x32xf32>
    %c2 = arith.constant 2 : index
    %c0_125 = arith.constant 0 : index
    %c0_126 = arith.constant 0 : index
    %715 = vector.load %arg1[%c2, %c0_125, %c0_126] : memref<3x32x128xf32, #tpu.memory_space<vmem>>, vector<1x32x128xf32>
    %716 = vector.shape_cast %715 : vector<1x32x128xf32> to vector<32x128xf32>
    %cst_127 = arith.constant dense<0.000000e+00> : vector<32x128xf32>
    %717 = tpu.matmul %714, %716, %cst_127 {dimension_numbers = #tpu.dot_dimension_numbers<[1], [0], [0], [1], [0, 0, 1, 1], [], []>} : vector<32x32xf32>, vector<32x128xf32>, vector<32x128xf32> -> vector<32x128xf32>
    %c2_128 = arith.constant 2 : index
    %c0_129 = arith.constant 0 : index
    %c0_130 = arith.constant 0 : index
    %718 = vector.load %arg3[%c2_128, %c0_129, %c0_130] : memref<3x1x128xf32, #tpu.memory_space<vmem>>, vector<1x1x128xf32>
    %719 = vector.shape_cast %718 : vector<1x1x128xf32> to vector<1x128xf32>
    %720 = vector.broadcast %719 : vector<1x128xf32> to vector<32x128xf32>
    %721 = arith.addf %717, %720 : vector<32x128xf32>
    %c2_131 = arith.constant 2 : index
    %c0_132 = arith.constant 0 : index
    %c0_133 = arith.constant 0 : index
    %722 = vector.load %arg2[%c2_131, %c0_132, %c0_133] : memref<3x32x128xf32, #tpu.memory_space<vmem>>, vector<1x32x128xf32>
    %723 = vector.shape_cast %722 : vector<1x32x128xf32> to vector<32x128xf32>
    %724 = arith.truncf %723 : vector<32x128xf32> to vector<32x128xbf16>
    %cst_134 = arith.constant 0.000000e+00 : f32
    %725 = vector.broadcast %cst_134 : f32 to vector<2x32xf32>
    %cst_135 = arith.constant 0.000000e+00 : f32
    %726 = vector.broadcast %cst_135 : f32 to vector<2x32xf32>
    %727 = vector.extract_strided_slice %721 {offsets = [0, 0], sizes = [2, 128], strides = [1, 1]} : vector<32x128xf32> to vector<2x128xf32>
    %728 = arith.truncf %725 : vector<2x32xf32> to vector<2x32xbf16>
    %cst_136 = arith.constant dense<0.000000e+00> : vector<2x128xf32>
    %729 = tpu.matmul %728, %724, %cst_136 {dimension_numbers = #tpu.dot_dimension_numbers<[1], [0], [0], [1], [0, 0, 1, 1], [], []>} : vector<2x32xbf16>, vector<32x128xbf16>, vector<2x128xf32> -> vector<2x128xf32>
    %730 = arith.addf %727, %729 : vector<2x128xf32>
    %731 = arith.negf %730 : vector<2x128xf32>
    %732 = math.exp %731 : vector<2x128xf32>
    %cst_137 = arith.constant 1.000000e+00 : f32
    %733 = vector.broadcast %cst_137 : f32 to vector<2x128xf32>
    %734 = arith.addf %733, %732 : vector<2x128xf32>
    %735 = arith.divf %733, %734 : vector<2x128xf32>
    %736 = math.tanh %730 : vector<2x128xf32>
    %737 = vector.extract_strided_slice %735 {offsets = [0, 0], sizes = [2, 32], strides = [1, 1]} : vector<2x128xf32> to vector<2x32xf32>
    %738 = vector.extract_strided_slice %735 {offsets = [0, 32], sizes = [2, 32], strides = [1, 1]} : vector<2x128xf32> to vector<2x32xf32>
    %739 = vector.extract_strided_slice %736 {offsets = [0, 64], sizes = [2, 32], strides = [1, 1]} : vector<2x128xf32> to vector<2x32xf32>
    %740 = vector.extract_strided_slice %735 {offsets = [0, 96], sizes = [2, 32], strides = [1, 1]} : vector<2x128xf32> to vector<2x32xf32>
    %741 = arith.mulf %738, %726 : vector<2x32xf32>
    %742 = arith.mulf %737, %739 : vector<2x32xf32>
    %743 = arith.addf %741, %742 : vector<2x32xf32>
    %744 = math.tanh %743 : vector<2x32xf32>
    %745 = arith.mulf %740, %744 : vector<2x32xf32>
    %746 = vector.extract_strided_slice %721 {offsets = [2, 0], sizes = [2, 128], strides = [1, 1]} : vector<32x128xf32> to vector<2x128xf32>
    %747 = arith.truncf %745 : vector<2x32xf32> to vector<2x32xbf16>
    %cst_138 = arith.constant dense<0.000000e+00> : vector<2x128xf32>
    %748 = tpu.matmul %747, %724, %cst_138 {dimension_numbers = #tpu.dot_dimension_numbers<[1], [0], [0], [1], [0, 0, 1, 1], [], []>} : vector<2x32xbf16>, vector<32x128xbf16>, vector<2x128xf32> -> vector<2x128xf32>
    %749 = arith.addf %746, %748 : vector<2x128xf32>
    %750 = arith.negf %749 : vector<2x128xf32>
    %751 = math.exp %750 : vector<2x128xf32>
    %cst_139 = arith.constant 1.000000e+00 : f32
    %752 = vector.broadcast %cst_139 : f32 to vector<2x128xf32>
    %753 = arith.addf %752, %751 : vector<2x128xf32>
    %754 = arith.divf %752, %753 : vector<2x128xf32>
    %755 = math.tanh %749 : vector<2x128xf32>
    %756 = vector.extract_strided_slice %754 {offsets = [0, 0], sizes = [2, 32], strides = [1, 1]} : vector<2x128xf32> to vector<2x32xf32>
    %757 = vector.extract_strided_slice %754 {offsets = [0, 32], sizes = [2, 32], strides = [1, 1]} : vector<2x128xf32> to vector<2x32xf32>
    %758 = vector.extract_strided_slice %755 {offsets = [0, 64], sizes = [2, 32], strides = [1, 1]} : vector<2x128xf32> to vector<2x32xf32>
    %759 = vector.extract_strided_slice %754 {offsets = [0, 96], sizes = [2, 32], strides = [1, 1]} : vector<2x128xf32> to vector<2x32xf32>
    %760 = arith.mulf %757, %743 : vector<2x32xf32>
    %761 = arith.mulf %756, %758 : vector<2x32xf32>
    %762 = arith.addf %760, %761 : vector<2x32xf32>
    %763 = math.tanh %762 : vector<2x32xf32>
    %764 = arith.mulf %759, %763 : vector<2x32xf32>
    %765 = vector.extract_strided_slice %721 {offsets = [4, 0], sizes = [2, 128], strides = [1, 1]} : vector<32x128xf32> to vector<2x128xf32>
    %766 = arith.truncf %764 : vector<2x32xf32> to vector<2x32xbf16>
    %cst_140 = arith.constant dense<0.000000e+00> : vector<2x128xf32>
    %767 = tpu.matmul %766, %724, %cst_140 {dimension_numbers = #tpu.dot_dimension_numbers<[1], [0], [0], [1], [0, 0, 1, 1], [], []>} : vector<2x32xbf16>, vector<32x128xbf16>, vector<2x128xf32> -> vector<2x128xf32>
    %768 = arith.addf %765, %767 : vector<2x128xf32>
    %769 = arith.negf %768 : vector<2x128xf32>
    %770 = math.exp %769 : vector<2x128xf32>
    %cst_141 = arith.constant 1.000000e+00 : f32
    %771 = vector.broadcast %cst_141 : f32 to vector<2x128xf32>
    %772 = arith.addf %771, %770 : vector<2x128xf32>
    %773 = arith.divf %771, %772 : vector<2x128xf32>
    %774 = math.tanh %768 : vector<2x128xf32>
    %775 = vector.extract_strided_slice %773 {offsets = [0, 0], sizes = [2, 32], strides = [1, 1]} : vector<2x128xf32> to vector<2x32xf32>
    %776 = vector.extract_strided_slice %773 {offsets = [0, 32], sizes = [2, 32], strides = [1, 1]} : vector<2x128xf32> to vector<2x32xf32>
    %777 = vector.extract_strided_slice %774 {offsets = [0, 64], sizes = [2, 32], strides = [1, 1]} : vector<2x128xf32> to vector<2x32xf32>
    %778 = vector.extract_strided_slice %773 {offsets = [0, 96], sizes = [2, 32], strides = [1, 1]} : vector<2x128xf32> to vector<2x32xf32>
    %779 = arith.mulf %776, %762 : vector<2x32xf32>
    %780 = arith.mulf %775, %777 : vector<2x32xf32>
    %781 = arith.addf %779, %780 : vector<2x32xf32>
    %782 = math.tanh %781 : vector<2x32xf32>
    %783 = arith.mulf %778, %782 : vector<2x32xf32>
    %784 = vector.extract_strided_slice %721 {offsets = [6, 0], sizes = [2, 128], strides = [1, 1]} : vector<32x128xf32> to vector<2x128xf32>
    %785 = arith.truncf %783 : vector<2x32xf32> to vector<2x32xbf16>
    %cst_142 = arith.constant dense<0.000000e+00> : vector<2x128xf32>
    %786 = tpu.matmul %785, %724, %cst_142 {dimension_numbers = #tpu.dot_dimension_numbers<[1], [0], [0], [1], [0, 0, 1, 1], [], []>} : vector<2x32xbf16>, vector<32x128xbf16>, vector<2x128xf32> -> vector<2x128xf32>
    %787 = arith.addf %784, %786 : vector<2x128xf32>
    %788 = arith.negf %787 : vector<2x128xf32>
    %789 = math.exp %788 : vector<2x128xf32>
    %cst_143 = arith.constant 1.000000e+00 : f32
    %790 = vector.broadcast %cst_143 : f32 to vector<2x128xf32>
    %791 = arith.addf %790, %789 : vector<2x128xf32>
    %792 = arith.divf %790, %791 : vector<2x128xf32>
    %793 = math.tanh %787 : vector<2x128xf32>
    %794 = vector.extract_strided_slice %792 {offsets = [0, 0], sizes = [2, 32], strides = [1, 1]} : vector<2x128xf32> to vector<2x32xf32>
    %795 = vector.extract_strided_slice %792 {offsets = [0, 32], sizes = [2, 32], strides = [1, 1]} : vector<2x128xf32> to vector<2x32xf32>
    %796 = vector.extract_strided_slice %793 {offsets = [0, 64], sizes = [2, 32], strides = [1, 1]} : vector<2x128xf32> to vector<2x32xf32>
    %797 = vector.extract_strided_slice %792 {offsets = [0, 96], sizes = [2, 32], strides = [1, 1]} : vector<2x128xf32> to vector<2x32xf32>
    %798 = arith.mulf %795, %781 : vector<2x32xf32>
    %799 = arith.mulf %794, %796 : vector<2x32xf32>
    %800 = arith.addf %798, %799 : vector<2x32xf32>
    %801 = math.tanh %800 : vector<2x32xf32>
    %802 = arith.mulf %797, %801 : vector<2x32xf32>
    %803 = vector.extract_strided_slice %721 {offsets = [8, 0], sizes = [2, 128], strides = [1, 1]} : vector<32x128xf32> to vector<2x128xf32>
    %804 = arith.truncf %802 : vector<2x32xf32> to vector<2x32xbf16>
    %cst_144 = arith.constant dense<0.000000e+00> : vector<2x128xf32>
    %805 = tpu.matmul %804, %724, %cst_144 {dimension_numbers = #tpu.dot_dimension_numbers<[1], [0], [0], [1], [0, 0, 1, 1], [], []>} : vector<2x32xbf16>, vector<32x128xbf16>, vector<2x128xf32> -> vector<2x128xf32>
    %806 = arith.addf %803, %805 : vector<2x128xf32>
    %807 = arith.negf %806 : vector<2x128xf32>
    %808 = math.exp %807 : vector<2x128xf32>
    %cst_145 = arith.constant 1.000000e+00 : f32
    %809 = vector.broadcast %cst_145 : f32 to vector<2x128xf32>
    %810 = arith.addf %809, %808 : vector<2x128xf32>
    %811 = arith.divf %809, %810 : vector<2x128xf32>
    %812 = math.tanh %806 : vector<2x128xf32>
    %813 = vector.extract_strided_slice %811 {offsets = [0, 0], sizes = [2, 32], strides = [1, 1]} : vector<2x128xf32> to vector<2x32xf32>
    %814 = vector.extract_strided_slice %811 {offsets = [0, 32], sizes = [2, 32], strides = [1, 1]} : vector<2x128xf32> to vector<2x32xf32>
    %815 = vector.extract_strided_slice %812 {offsets = [0, 64], sizes = [2, 32], strides = [1, 1]} : vector<2x128xf32> to vector<2x32xf32>
    %816 = vector.extract_strided_slice %811 {offsets = [0, 96], sizes = [2, 32], strides = [1, 1]} : vector<2x128xf32> to vector<2x32xf32>
    %817 = arith.mulf %814, %800 : vector<2x32xf32>
    %818 = arith.mulf %813, %815 : vector<2x32xf32>
    %819 = arith.addf %817, %818 : vector<2x32xf32>
    %820 = math.tanh %819 : vector<2x32xf32>
    %821 = arith.mulf %816, %820 : vector<2x32xf32>
    %822 = vector.extract_strided_slice %721 {offsets = [10, 0], sizes = [2, 128], strides = [1, 1]} : vector<32x128xf32> to vector<2x128xf32>
    %823 = arith.truncf %821 : vector<2x32xf32> to vector<2x32xbf16>
    %cst_146 = arith.constant dense<0.000000e+00> : vector<2x128xf32>
    %824 = tpu.matmul %823, %724, %cst_146 {dimension_numbers = #tpu.dot_dimension_numbers<[1], [0], [0], [1], [0, 0, 1, 1], [], []>} : vector<2x32xbf16>, vector<32x128xbf16>, vector<2x128xf32> -> vector<2x128xf32>
    %825 = arith.addf %822, %824 : vector<2x128xf32>
    %826 = arith.negf %825 : vector<2x128xf32>
    %827 = math.exp %826 : vector<2x128xf32>
    %cst_147 = arith.constant 1.000000e+00 : f32
    %828 = vector.broadcast %cst_147 : f32 to vector<2x128xf32>
    %829 = arith.addf %828, %827 : vector<2x128xf32>
    %830 = arith.divf %828, %829 : vector<2x128xf32>
    %831 = math.tanh %825 : vector<2x128xf32>
    %832 = vector.extract_strided_slice %830 {offsets = [0, 0], sizes = [2, 32], strides = [1, 1]} : vector<2x128xf32> to vector<2x32xf32>
    %833 = vector.extract_strided_slice %830 {offsets = [0, 32], sizes = [2, 32], strides = [1, 1]} : vector<2x128xf32> to vector<2x32xf32>
    %834 = vector.extract_strided_slice %831 {offsets = [0, 64], sizes = [2, 32], strides = [1, 1]} : vector<2x128xf32> to vector<2x32xf32>
    %835 = vector.extract_strided_slice %830 {offsets = [0, 96], sizes = [2, 32], strides = [1, 1]} : vector<2x128xf32> to vector<2x32xf32>
    %836 = arith.mulf %833, %819 : vector<2x32xf32>
    %837 = arith.mulf %832, %834 : vector<2x32xf32>
    %838 = arith.addf %836, %837 : vector<2x32xf32>
    %839 = math.tanh %838 : vector<2x32xf32>
    %840 = arith.mulf %835, %839 : vector<2x32xf32>
    %841 = vector.extract_strided_slice %721 {offsets = [12, 0], sizes = [2, 128], strides = [1, 1]} : vector<32x128xf32> to vector<2x128xf32>
    %842 = arith.truncf %840 : vector<2x32xf32> to vector<2x32xbf16>
    %cst_148 = arith.constant dense<0.000000e+00> : vector<2x128xf32>
    %843 = tpu.matmul %842, %724, %cst_148 {dimension_numbers = #tpu.dot_dimension_numbers<[1], [0], [0], [1], [0, 0, 1, 1], [], []>} : vector<2x32xbf16>, vector<32x128xbf16>, vector<2x128xf32> -> vector<2x128xf32>
    %844 = arith.addf %841, %843 : vector<2x128xf32>
    %845 = arith.negf %844 : vector<2x128xf32>
    %846 = math.exp %845 : vector<2x128xf32>
    %cst_149 = arith.constant 1.000000e+00 : f32
    %847 = vector.broadcast %cst_149 : f32 to vector<2x128xf32>
    %848 = arith.addf %847, %846 : vector<2x128xf32>
    %849 = arith.divf %847, %848 : vector<2x128xf32>
    %850 = math.tanh %844 : vector<2x128xf32>
    %851 = vector.extract_strided_slice %849 {offsets = [0, 0], sizes = [2, 32], strides = [1, 1]} : vector<2x128xf32> to vector<2x32xf32>
    %852 = vector.extract_strided_slice %849 {offsets = [0, 32], sizes = [2, 32], strides = [1, 1]} : vector<2x128xf32> to vector<2x32xf32>
    %853 = vector.extract_strided_slice %850 {offsets = [0, 64], sizes = [2, 32], strides = [1, 1]} : vector<2x128xf32> to vector<2x32xf32>
    %854 = vector.extract_strided_slice %849 {offsets = [0, 96], sizes = [2, 32], strides = [1, 1]} : vector<2x128xf32> to vector<2x32xf32>
    %855 = arith.mulf %852, %838 : vector<2x32xf32>
    %856 = arith.mulf %851, %853 : vector<2x32xf32>
    %857 = arith.addf %855, %856 : vector<2x32xf32>
    %858 = math.tanh %857 : vector<2x32xf32>
    %859 = arith.mulf %854, %858 : vector<2x32xf32>
    %860 = vector.extract_strided_slice %721 {offsets = [14, 0], sizes = [2, 128], strides = [1, 1]} : vector<32x128xf32> to vector<2x128xf32>
    %861 = arith.truncf %859 : vector<2x32xf32> to vector<2x32xbf16>
    %cst_150 = arith.constant dense<0.000000e+00> : vector<2x128xf32>
    %862 = tpu.matmul %861, %724, %cst_150 {dimension_numbers = #tpu.dot_dimension_numbers<[1], [0], [0], [1], [0, 0, 1, 1], [], []>} : vector<2x32xbf16>, vector<32x128xbf16>, vector<2x128xf32> -> vector<2x128xf32>
    %863 = arith.addf %860, %862 : vector<2x128xf32>
    %864 = arith.negf %863 : vector<2x128xf32>
    %865 = math.exp %864 : vector<2x128xf32>
    %cst_151 = arith.constant 1.000000e+00 : f32
    %866 = vector.broadcast %cst_151 : f32 to vector<2x128xf32>
    %867 = arith.addf %866, %865 : vector<2x128xf32>
    %868 = arith.divf %866, %867 : vector<2x128xf32>
    %869 = math.tanh %863 : vector<2x128xf32>
    %870 = vector.extract_strided_slice %868 {offsets = [0, 0], sizes = [2, 32], strides = [1, 1]} : vector<2x128xf32> to vector<2x32xf32>
    %871 = vector.extract_strided_slice %868 {offsets = [0, 32], sizes = [2, 32], strides = [1, 1]} : vector<2x128xf32> to vector<2x32xf32>
    %872 = vector.extract_strided_slice %869 {offsets = [0, 64], sizes = [2, 32], strides = [1, 1]} : vector<2x128xf32> to vector<2x32xf32>
    %873 = vector.extract_strided_slice %868 {offsets = [0, 96], sizes = [2, 32], strides = [1, 1]} : vector<2x128xf32> to vector<2x32xf32>
    %874 = arith.mulf %871, %857 : vector<2x32xf32>
    %875 = arith.mulf %870, %872 : vector<2x32xf32>
    %876 = arith.addf %874, %875 : vector<2x32xf32>
    %877 = math.tanh %876 : vector<2x32xf32>
    %878 = arith.mulf %873, %877 : vector<2x32xf32>
    %879 = vector.extract_strided_slice %721 {offsets = [16, 0], sizes = [2, 128], strides = [1, 1]} : vector<32x128xf32> to vector<2x128xf32>
    %880 = arith.truncf %878 : vector<2x32xf32> to vector<2x32xbf16>
    %cst_152 = arith.constant dense<0.000000e+00> : vector<2x128xf32>
    %881 = tpu.matmul %880, %724, %cst_152 {dimension_numbers = #tpu.dot_dimension_numbers<[1], [0], [0], [1], [0, 0, 1, 1], [], []>} : vector<2x32xbf16>, vector<32x128xbf16>, vector<2x128xf32> -> vector<2x128xf32>
    %882 = arith.addf %879, %881 : vector<2x128xf32>
    %883 = arith.negf %882 : vector<2x128xf32>
    %884 = math.exp %883 : vector<2x128xf32>
    %cst_153 = arith.constant 1.000000e+00 : f32
    %885 = vector.broadcast %cst_153 : f32 to vector<2x128xf32>
    %886 = arith.addf %885, %884 : vector<2x128xf32>
    %887 = arith.divf %885, %886 : vector<2x128xf32>
    %888 = math.tanh %882 : vector<2x128xf32>
    %889 = vector.extract_strided_slice %887 {offsets = [0, 0], sizes = [2, 32], strides = [1, 1]} : vector<2x128xf32> to vector<2x32xf32>
    %890 = vector.extract_strided_slice %887 {offsets = [0, 32], sizes = [2, 32], strides = [1, 1]} : vector<2x128xf32> to vector<2x32xf32>
    %891 = vector.extract_strided_slice %888 {offsets = [0, 64], sizes = [2, 32], strides = [1, 1]} : vector<2x128xf32> to vector<2x32xf32>
    %892 = vector.extract_strided_slice %887 {offsets = [0, 96], sizes = [2, 32], strides = [1, 1]} : vector<2x128xf32> to vector<2x32xf32>
    %893 = arith.mulf %890, %876 : vector<2x32xf32>
    %894 = arith.mulf %889, %891 : vector<2x32xf32>
    %895 = arith.addf %893, %894 : vector<2x32xf32>
    %896 = math.tanh %895 : vector<2x32xf32>
    %897 = arith.mulf %892, %896 : vector<2x32xf32>
    %898 = vector.extract_strided_slice %721 {offsets = [18, 0], sizes = [2, 128], strides = [1, 1]} : vector<32x128xf32> to vector<2x128xf32>
    %899 = arith.truncf %897 : vector<2x32xf32> to vector<2x32xbf16>
    %cst_154 = arith.constant dense<0.000000e+00> : vector<2x128xf32>
    %900 = tpu.matmul %899, %724, %cst_154 {dimension_numbers = #tpu.dot_dimension_numbers<[1], [0], [0], [1], [0, 0, 1, 1], [], []>} : vector<2x32xbf16>, vector<32x128xbf16>, vector<2x128xf32> -> vector<2x128xf32>
    %901 = arith.addf %898, %900 : vector<2x128xf32>
    %902 = arith.negf %901 : vector<2x128xf32>
    %903 = math.exp %902 : vector<2x128xf32>
    %cst_155 = arith.constant 1.000000e+00 : f32
    %904 = vector.broadcast %cst_155 : f32 to vector<2x128xf32>
    %905 = arith.addf %904, %903 : vector<2x128xf32>
    %906 = arith.divf %904, %905 : vector<2x128xf32>
    %907 = math.tanh %901 : vector<2x128xf32>
    %908 = vector.extract_strided_slice %906 {offsets = [0, 0], sizes = [2, 32], strides = [1, 1]} : vector<2x128xf32> to vector<2x32xf32>
    %909 = vector.extract_strided_slice %906 {offsets = [0, 32], sizes = [2, 32], strides = [1, 1]} : vector<2x128xf32> to vector<2x32xf32>
    %910 = vector.extract_strided_slice %907 {offsets = [0, 64], sizes = [2, 32], strides = [1, 1]} : vector<2x128xf32> to vector<2x32xf32>
    %911 = vector.extract_strided_slice %906 {offsets = [0, 96], sizes = [2, 32], strides = [1, 1]} : vector<2x128xf32> to vector<2x32xf32>
    %912 = arith.mulf %909, %895 : vector<2x32xf32>
    %913 = arith.mulf %908, %910 : vector<2x32xf32>
    %914 = arith.addf %912, %913 : vector<2x32xf32>
    %915 = math.tanh %914 : vector<2x32xf32>
    %916 = arith.mulf %911, %915 : vector<2x32xf32>
    %917 = vector.extract_strided_slice %721 {offsets = [20, 0], sizes = [2, 128], strides = [1, 1]} : vector<32x128xf32> to vector<2x128xf32>
    %918 = arith.truncf %916 : vector<2x32xf32> to vector<2x32xbf16>
    %cst_156 = arith.constant dense<0.000000e+00> : vector<2x128xf32>
    %919 = tpu.matmul %918, %724, %cst_156 {dimension_numbers = #tpu.dot_dimension_numbers<[1], [0], [0], [1], [0, 0, 1, 1], [], []>} : vector<2x32xbf16>, vector<32x128xbf16>, vector<2x128xf32> -> vector<2x128xf32>
    %920 = arith.addf %917, %919 : vector<2x128xf32>
    %921 = arith.negf %920 : vector<2x128xf32>
    %922 = math.exp %921 : vector<2x128xf32>
    %cst_157 = arith.constant 1.000000e+00 : f32
    %923 = vector.broadcast %cst_157 : f32 to vector<2x128xf32>
    %924 = arith.addf %923, %922 : vector<2x128xf32>
    %925 = arith.divf %923, %924 : vector<2x128xf32>
    %926 = math.tanh %920 : vector<2x128xf32>
    %927 = vector.extract_strided_slice %925 {offsets = [0, 0], sizes = [2, 32], strides = [1, 1]} : vector<2x128xf32> to vector<2x32xf32>
    %928 = vector.extract_strided_slice %925 {offsets = [0, 32], sizes = [2, 32], strides = [1, 1]} : vector<2x128xf32> to vector<2x32xf32>
    %929 = vector.extract_strided_slice %926 {offsets = [0, 64], sizes = [2, 32], strides = [1, 1]} : vector<2x128xf32> to vector<2x32xf32>
    %930 = vector.extract_strided_slice %925 {offsets = [0, 96], sizes = [2, 32], strides = [1, 1]} : vector<2x128xf32> to vector<2x32xf32>
    %931 = arith.mulf %928, %914 : vector<2x32xf32>
    %932 = arith.mulf %927, %929 : vector<2x32xf32>
    %933 = arith.addf %931, %932 : vector<2x32xf32>
    %934 = math.tanh %933 : vector<2x32xf32>
    %935 = arith.mulf %930, %934 : vector<2x32xf32>
    %936 = vector.extract_strided_slice %721 {offsets = [22, 0], sizes = [2, 128], strides = [1, 1]} : vector<32x128xf32> to vector<2x128xf32>
    %937 = arith.truncf %935 : vector<2x32xf32> to vector<2x32xbf16>
    %cst_158 = arith.constant dense<0.000000e+00> : vector<2x128xf32>
    %938 = tpu.matmul %937, %724, %cst_158 {dimension_numbers = #tpu.dot_dimension_numbers<[1], [0], [0], [1], [0, 0, 1, 1], [], []>} : vector<2x32xbf16>, vector<32x128xbf16>, vector<2x128xf32> -> vector<2x128xf32>
    %939 = arith.addf %936, %938 : vector<2x128xf32>
    %940 = arith.negf %939 : vector<2x128xf32>
    %941 = math.exp %940 : vector<2x128xf32>
    %cst_159 = arith.constant 1.000000e+00 : f32
    %942 = vector.broadcast %cst_159 : f32 to vector<2x128xf32>
    %943 = arith.addf %942, %941 : vector<2x128xf32>
    %944 = arith.divf %942, %943 : vector<2x128xf32>
    %945 = math.tanh %939 : vector<2x128xf32>
    %946 = vector.extract_strided_slice %944 {offsets = [0, 0], sizes = [2, 32], strides = [1, 1]} : vector<2x128xf32> to vector<2x32xf32>
    %947 = vector.extract_strided_slice %944 {offsets = [0, 32], sizes = [2, 32], strides = [1, 1]} : vector<2x128xf32> to vector<2x32xf32>
    %948 = vector.extract_strided_slice %945 {offsets = [0, 64], sizes = [2, 32], strides = [1, 1]} : vector<2x128xf32> to vector<2x32xf32>
    %949 = vector.extract_strided_slice %944 {offsets = [0, 96], sizes = [2, 32], strides = [1, 1]} : vector<2x128xf32> to vector<2x32xf32>
    %950 = arith.mulf %947, %933 : vector<2x32xf32>
    %951 = arith.mulf %946, %948 : vector<2x32xf32>
    %952 = arith.addf %950, %951 : vector<2x32xf32>
    %953 = math.tanh %952 : vector<2x32xf32>
    %954 = arith.mulf %949, %953 : vector<2x32xf32>
    %955 = vector.extract_strided_slice %721 {offsets = [24, 0], sizes = [2, 128], strides = [1, 1]} : vector<32x128xf32> to vector<2x128xf32>
    %956 = arith.truncf %954 : vector<2x32xf32> to vector<2x32xbf16>
    %cst_160 = arith.constant dense<0.000000e+00> : vector<2x128xf32>
    %957 = tpu.matmul %956, %724, %cst_160 {dimension_numbers = #tpu.dot_dimension_numbers<[1], [0], [0], [1], [0, 0, 1, 1], [], []>} : vector<2x32xbf16>, vector<32x128xbf16>, vector<2x128xf32> -> vector<2x128xf32>
    %958 = arith.addf %955, %957 : vector<2x128xf32>
    %959 = arith.negf %958 : vector<2x128xf32>
    %960 = math.exp %959 : vector<2x128xf32>
    %cst_161 = arith.constant 1.000000e+00 : f32
    %961 = vector.broadcast %cst_161 : f32 to vector<2x128xf32>
    %962 = arith.addf %961, %960 : vector<2x128xf32>
    %963 = arith.divf %961, %962 : vector<2x128xf32>
    %964 = math.tanh %958 : vector<2x128xf32>
    %965 = vector.extract_strided_slice %963 {offsets = [0, 0], sizes = [2, 32], strides = [1, 1]} : vector<2x128xf32> to vector<2x32xf32>
    %966 = vector.extract_strided_slice %963 {offsets = [0, 32], sizes = [2, 32], strides = [1, 1]} : vector<2x128xf32> to vector<2x32xf32>
    %967 = vector.extract_strided_slice %964 {offsets = [0, 64], sizes = [2, 32], strides = [1, 1]} : vector<2x128xf32> to vector<2x32xf32>
    %968 = vector.extract_strided_slice %963 {offsets = [0, 96], sizes = [2, 32], strides = [1, 1]} : vector<2x128xf32> to vector<2x32xf32>
    %969 = arith.mulf %966, %952 : vector<2x32xf32>
    %970 = arith.mulf %965, %967 : vector<2x32xf32>
    %971 = arith.addf %969, %970 : vector<2x32xf32>
    %972 = math.tanh %971 : vector<2x32xf32>
    %973 = arith.mulf %968, %972 : vector<2x32xf32>
    %974 = vector.extract_strided_slice %721 {offsets = [26, 0], sizes = [2, 128], strides = [1, 1]} : vector<32x128xf32> to vector<2x128xf32>
    %975 = arith.truncf %973 : vector<2x32xf32> to vector<2x32xbf16>
    %cst_162 = arith.constant dense<0.000000e+00> : vector<2x128xf32>
    %976 = tpu.matmul %975, %724, %cst_162 {dimension_numbers = #tpu.dot_dimension_numbers<[1], [0], [0], [1], [0, 0, 1, 1], [], []>} : vector<2x32xbf16>, vector<32x128xbf16>, vector<2x128xf32> -> vector<2x128xf32>
    %977 = arith.addf %974, %976 : vector<2x128xf32>
    %978 = arith.negf %977 : vector<2x128xf32>
    %979 = math.exp %978 : vector<2x128xf32>
    %cst_163 = arith.constant 1.000000e+00 : f32
    %980 = vector.broadcast %cst_163 : f32 to vector<2x128xf32>
    %981 = arith.addf %980, %979 : vector<2x128xf32>
    %982 = arith.divf %980, %981 : vector<2x128xf32>
    %983 = math.tanh %977 : vector<2x128xf32>
    %984 = vector.extract_strided_slice %982 {offsets = [0, 0], sizes = [2, 32], strides = [1, 1]} : vector<2x128xf32> to vector<2x32xf32>
    %985 = vector.extract_strided_slice %982 {offsets = [0, 32], sizes = [2, 32], strides = [1, 1]} : vector<2x128xf32> to vector<2x32xf32>
    %986 = vector.extract_strided_slice %983 {offsets = [0, 64], sizes = [2, 32], strides = [1, 1]} : vector<2x128xf32> to vector<2x32xf32>
    %987 = vector.extract_strided_slice %982 {offsets = [0, 96], sizes = [2, 32], strides = [1, 1]} : vector<2x128xf32> to vector<2x32xf32>
    %988 = arith.mulf %985, %971 : vector<2x32xf32>
    %989 = arith.mulf %984, %986 : vector<2x32xf32>
    %990 = arith.addf %988, %989 : vector<2x32xf32>
    %991 = math.tanh %990 : vector<2x32xf32>
    %992 = arith.mulf %987, %991 : vector<2x32xf32>
    %993 = vector.extract_strided_slice %721 {offsets = [28, 0], sizes = [2, 128], strides = [1, 1]} : vector<32x128xf32> to vector<2x128xf32>
    %994 = arith.truncf %992 : vector<2x32xf32> to vector<2x32xbf16>
    %cst_164 = arith.constant dense<0.000000e+00> : vector<2x128xf32>
    %995 = tpu.matmul %994, %724, %cst_164 {dimension_numbers = #tpu.dot_dimension_numbers<[1], [0], [0], [1], [0, 0, 1, 1], [], []>} : vector<2x32xbf16>, vector<32x128xbf16>, vector<2x128xf32> -> vector<2x128xf32>
    %996 = arith.addf %993, %995 : vector<2x128xf32>
    %997 = arith.negf %996 : vector<2x128xf32>
    %998 = math.exp %997 : vector<2x128xf32>
    %cst_165 = arith.constant 1.000000e+00 : f32
    %999 = vector.broadcast %cst_165 : f32 to vector<2x128xf32>
    %1000 = arith.addf %999, %998 : vector<2x128xf32>
    %1001 = arith.divf %999, %1000 : vector<2x128xf32>
    %1002 = math.tanh %996 : vector<2x128xf32>
    %1003 = vector.extract_strided_slice %1001 {offsets = [0, 0], sizes = [2, 32], strides = [1, 1]} : vector<2x128xf32> to vector<2x32xf32>
    %1004 = vector.extract_strided_slice %1001 {offsets = [0, 32], sizes = [2, 32], strides = [1, 1]} : vector<2x128xf32> to vector<2x32xf32>
    %1005 = vector.extract_strided_slice %1002 {offsets = [0, 64], sizes = [2, 32], strides = [1, 1]} : vector<2x128xf32> to vector<2x32xf32>
    %1006 = vector.extract_strided_slice %1001 {offsets = [0, 96], sizes = [2, 32], strides = [1, 1]} : vector<2x128xf32> to vector<2x32xf32>
    %1007 = arith.mulf %1004, %990 : vector<2x32xf32>
    %1008 = arith.mulf %1003, %1005 : vector<2x32xf32>
    %1009 = arith.addf %1007, %1008 : vector<2x32xf32>
    %1010 = math.tanh %1009 : vector<2x32xf32>
    %1011 = arith.mulf %1006, %1010 : vector<2x32xf32>
    %1012 = vector.extract_strided_slice %721 {offsets = [30, 0], sizes = [2, 128], strides = [1, 1]} : vector<32x128xf32> to vector<2x128xf32>
    %1013 = arith.truncf %1011 : vector<2x32xf32> to vector<2x32xbf16>
    %cst_166 = arith.constant dense<0.000000e+00> : vector<2x128xf32>
    %1014 = tpu.matmul %1013, %724, %cst_166 {dimension_numbers = #tpu.dot_dimension_numbers<[1], [0], [0], [1], [0, 0, 1, 1], [], []>} : vector<2x32xbf16>, vector<32x128xbf16>, vector<2x128xf32> -> vector<2x128xf32>
    %1015 = arith.addf %1012, %1014 : vector<2x128xf32>
    %1016 = arith.negf %1015 : vector<2x128xf32>
    %1017 = math.exp %1016 : vector<2x128xf32>
    %cst_167 = arith.constant 1.000000e+00 : f32
    %1018 = vector.broadcast %cst_167 : f32 to vector<2x128xf32>
    %1019 = arith.addf %1018, %1017 : vector<2x128xf32>
    %1020 = arith.divf %1018, %1019 : vector<2x128xf32>
    %1021 = math.tanh %1015 : vector<2x128xf32>
    %1022 = vector.extract_strided_slice %1020 {offsets = [0, 0], sizes = [2, 32], strides = [1, 1]} : vector<2x128xf32> to vector<2x32xf32>
    %1023 = vector.extract_strided_slice %1020 {offsets = [0, 32], sizes = [2, 32], strides = [1, 1]} : vector<2x128xf32> to vector<2x32xf32>
    %1024 = vector.extract_strided_slice %1021 {offsets = [0, 64], sizes = [2, 32], strides = [1, 1]} : vector<2x128xf32> to vector<2x32xf32>
    %1025 = vector.extract_strided_slice %1020 {offsets = [0, 96], sizes = [2, 32], strides = [1, 1]} : vector<2x128xf32> to vector<2x32xf32>
    %1026 = arith.mulf %1023, %1009 : vector<2x32xf32>
    %1027 = arith.mulf %1022, %1024 : vector<2x32xf32>
    %1028 = arith.addf %1026, %1027 : vector<2x32xf32>
    %1029 = math.tanh %1028 : vector<2x32xf32>
    %1030 = arith.mulf %1025, %1029 : vector<2x32xf32>
    %1031 = tpu.concatenate %745, %764, %783, %802, %821, %840, %859, %878, %897, %916, %935, %954, %973, %992, %1011, %1030 in 0 : vector<2x32xf32>, vector<2x32xf32>, vector<2x32xf32>, vector<2x32xf32>, vector<2x32xf32>, vector<2x32xf32>, vector<2x32xf32>, vector<2x32xf32>, vector<2x32xf32>, vector<2x32xf32>, vector<2x32xf32>, vector<2x32xf32>, vector<2x32xf32>, vector<2x32xf32>, vector<2x32xf32>, vector<2x32xf32> -> vector<32x32xf32>
    %c2_168 = arith.constant 2 : index
    %c0_169 = arith.constant 0 : index
    %c0_170 = arith.constant 0 : index
    %1032 = vector.load %arg4[%c2_168, %c0_169, %c0_170] : memref<3x32x32xf32, #tpu.memory_space<vmem>>, vector<1x32x32xf32>
    %1033 = vector.shape_cast %1032 : vector<1x32x32xf32> to vector<32x32xf32>
    %cst_171 = arith.constant dense<0.000000e+00> : vector<32x32xf32>
    %1034 = tpu.matmul %1031, %1033, %cst_171 {dimension_numbers = #tpu.dot_dimension_numbers<[1], [0], [0], [1], [0, 0, 1, 1], [], []>} : vector<32x32xf32>, vector<32x32xf32>, vector<32x32xf32> -> vector<32x32xf32>
    %c2_172 = arith.constant 2 : index
    %c0_173 = arith.constant 0 : index
    %c0_174 = arith.constant 0 : index
    %1035 = vector.load %arg5[%c2_172, %c0_173, %c0_174] : memref<3x1x32xf32, #tpu.memory_space<vmem>>, vector<1x1x32xf32>
    %1036 = vector.shape_cast %1035 : vector<1x1x32xf32> to vector<1x32xf32>
    %1037 = vector.broadcast %1036 : vector<1x32xf32> to vector<32x32xf32>
    %1038 = arith.addf %1034, %1037 : vector<32x32xf32>
    %1039 = arith.negf %1038 : vector<32x32xf32>
    %1040 = math.exp %1039 : vector<32x32xf32>
    %cst_175 = arith.constant 1.000000e+00 : f32
    %1041 = vector.broadcast %cst_175 : f32 to vector<32x32xf32>
    %1042 = arith.addf %1041, %1040 : vector<32x32xf32>
    %1043 = arith.divf %1041, %1042 : vector<32x32xf32>
    %1044 = arith.mulf %1043, %1031 : vector<32x32xf32>
    %1045 = arith.addf %714, %1044 : vector<32x32xf32>
    %cst_176 = arith.constant dense<0.000000e+00> : vector<32xf32>
    %1046 = vector.multi_reduction <add>, %1045, %cst_176 [1] : vector<32x32xf32> to vector<32xf32>
    %1047 = vector.shape_cast %1046 : vector<32xf32> to vector<32x1xf32>
    %cst_177 = arith.constant 3.200000e+01 : f32
    %1048 = vector.broadcast %cst_177 : f32 to vector<32x1xf32>
    %1049 = arith.divf %1047, %1048 : vector<32x1xf32>
    %1050 = vector.broadcast %1049 : vector<32x1xf32> to vector<32x32xf32>
    %1051 = arith.subf %1045, %1050 : vector<32x32xf32>
    %1052 = arith.mulf %1051, %1051 : vector<32x32xf32>
    %cst_178 = arith.constant dense<0.000000e+00> : vector<32xf32>
    %1053 = vector.multi_reduction <add>, %1052, %cst_178 [1] : vector<32x32xf32> to vector<32xf32>
    %1054 = vector.shape_cast %1053 : vector<32xf32> to vector<32x1xf32>
    %cst_179 = arith.constant 3.200000e+01 : f32
    %1055 = vector.broadcast %cst_179 : f32 to vector<32x1xf32>
    %1056 = arith.divf %1054, %1055 : vector<32x1xf32>
    %1057 = vector.broadcast %1049 : vector<32x1xf32> to vector<32x32xf32>
    %1058 = arith.subf %1045, %1057 : vector<32x32xf32>
    %cst_180 = arith.constant 9.99999974E-6 : f32
    %1059 = vector.broadcast %cst_180 : f32 to vector<32x1xf32>
    %1060 = arith.addf %1056, %1059 : vector<32x1xf32>
    %1061 = math.rsqrt %1060 : vector<32x1xf32>
    %1062 = vector.broadcast %1061 : vector<32x1xf32> to vector<32x32xf32>
    %1063 = arith.mulf %1058, %1062 : vector<32x32xf32>
    %c2_181 = arith.constant 2 : index
    %c0_182 = arith.constant 0 : index
    %c0_183 = arith.constant 0 : index
    %1064 = vector.load %arg6[%c2_181, %c0_182, %c0_183] : memref<3x1x32xf32, #tpu.memory_space<vmem>>, vector<1x1x32xf32>
    %1065 = vector.shape_cast %1064 : vector<1x1x32xf32> to vector<1x32xf32>
    %1066 = vector.broadcast %1065 : vector<1x32xf32> to vector<32x32xf32>
    %1067 = arith.mulf %1063, %1066 : vector<32x32xf32>
    %c2_184 = arith.constant 2 : index
    %c0_185 = arith.constant 0 : index
    %c0_186 = arith.constant 0 : index
    %1068 = vector.load %arg7[%c2_184, %c0_185, %c0_186] : memref<3x1x32xf32, #tpu.memory_space<vmem>>, vector<1x1x32xf32>
    %1069 = vector.shape_cast %1068 : vector<1x1x32xf32> to vector<1x32xf32>
    %1070 = vector.broadcast %1069 : vector<1x32xf32> to vector<32x32xf32>
    %1071 = arith.addf %1067, %1070 : vector<32x32xf32>
    %cst_187 = arith.constant dense<0.000000e+00> : vector<32xf32>
    %1072 = vector.multi_reduction <add>, %1071, %cst_187 [1] : vector<32x32xf32> to vector<32xf32>
    %1073 = vector.shape_cast %1072 : vector<32xf32> to vector<32x1xf32>
    %cst_188 = arith.constant 3.200000e+01 : f32
    %1074 = vector.broadcast %cst_188 : f32 to vector<32x1xf32>
    %1075 = arith.divf %1073, %1074 : vector<32x1xf32>
    %1076 = vector.broadcast %1075 : vector<32x1xf32> to vector<32x32xf32>
    %1077 = arith.subf %1071, %1076 : vector<32x32xf32>
    %1078 = arith.mulf %1077, %1077 : vector<32x32xf32>
    %cst_189 = arith.constant dense<0.000000e+00> : vector<32xf32>
    %1079 = vector.multi_reduction <add>, %1078, %cst_189 [1] : vector<32x32xf32> to vector<32xf32>
    %1080 = vector.shape_cast %1079 : vector<32xf32> to vector<32x1xf32>
    %cst_190 = arith.constant 3.200000e+01 : f32
    %1081 = vector.broadcast %cst_190 : f32 to vector<32x1xf32>
    %1082 = arith.divf %1080, %1081 : vector<32x1xf32>
    %1083 = vector.broadcast %1075 : vector<32x1xf32> to vector<32x32xf32>
    %1084 = arith.subf %1071, %1083 : vector<32x32xf32>
    %cst_191 = arith.constant 9.99999974E-6 : f32
    %1085 = vector.broadcast %cst_191 : f32 to vector<32x1xf32>
    %1086 = arith.addf %1082, %1085 : vector<32x1xf32>
    %1087 = math.rsqrt %1086 : vector<32x1xf32>
    %1088 = vector.broadcast %1087 : vector<32x1xf32> to vector<32x32xf32>
    %1089 = arith.mulf %1084, %1088 : vector<32x32xf32>
    %c0_192 = arith.constant 0 : index
    %c0_193 = arith.constant 0 : index
    %1090 = vector.load %arg8[%c0_192, %c0_193] : memref<1x32xf32, #tpu.memory_space<vmem>>, vector<1x32xf32>
    %1091 = vector.broadcast %1090 : vector<1x32xf32> to vector<32x32xf32>
    %1092 = arith.mulf %1089, %1091 : vector<32x32xf32>
    %c0_194 = arith.constant 0 : index
    %c0_195 = arith.constant 0 : index
    %1093 = vector.load %arg9[%c0_194, %c0_195] : memref<1x32xf32, #tpu.memory_space<vmem>>, vector<1x32xf32>
    %1094 = vector.broadcast %1093 : vector<1x32xf32> to vector<32x32xf32>
    %1095 = arith.addf %1092, %1094 : vector<32x32xf32>
    %c0_196 = arith.constant 0 : index
    %c0_197 = arith.constant 0 : index
    %1096 = vector.load %arg10[%c0_196, %c0_197] : memref<32x32xf32, #tpu.memory_space<vmem>>, vector<32x32xf32>
    tpu.vector_store %arg10[%c0_196, %c0_197], %1095 {strides = array<i32>} : memref<32x32xf32, #tpu.memory_space<vmem>>, vector<32x32xf32>,
    return
  }
}

</mosaic_0001>

<llo_original>
// kernel: xlstm_forward.1
$region0: #{xlstm_forward.1}
  #allocation0 [shape = 'u32[]', space=smem, size = 0x4, offset = 0x4, fixed_abs, tag = 'smem constant byte address 0x4 - core index']
  #allocation1 [shape = 'u32[72,128]{1,0:T(1,128)}', space=vmem, size = 0x9000, scoped, tag = 'internal scratch']
  %s0 = inlined_call_operand.vmem [shape: f32[32,32], index: 0, kind: input, shape index: {}]
  %s1 = inlined_call_operand.vmem [shape: f32[3,32,128], index: 1, kind: input, shape index: {}]
  %s2 = inlined_call_operand.vmem [shape: f32[3,32,128], index: 2, kind: input, shape index: {}]
  %s3 = inlined_call_operand.vmem [shape: f32[3,1,128], index: 3, kind: input, shape index: {}]
  %s4 = inlined_call_operand.hbm [shape: f32[3,32,32], index: 4, kind: input, shape index: {}]
  %s5 = inlined_call_operand.vmem [shape: f32[3,1,32], index: 5, kind: input, shape index: {}]
  %s6 = inlined_call_operand.vmem [shape: f32[3,1,32], index: 6, kind: input, shape index: {}]
  %s7 = inlined_call_operand.vmem [shape: f32[3,1,32], index: 7, kind: input, shape index: {}]
  %s8 = inlined_call_operand.vmem [shape: f32[1,32], index: 8, kind: input, shape index: {}]
  %s9 = inlined_call_operand.vmem [shape: f32[1,32], index: 9, kind: input, shape index: {}]
  %s10 = inlined_call_operand.vmem [shape: f32[32,32], index: 10, kind: output, shape index: {}]
  %s11 = sld [smem:[#allocation0]]
  $region54: #{xlstm_forward.1} parent=0
    _
  %s13 = ssub.s32 1, %s11
  %s14 = scalar_select 0, %s13, %s11
  $region1: #{xlstm_forward.1} parent=0
    #allocation2 [shape = 'u8[49152]{0}', space=vmem, size = 0xc000, scoped, tag = 'input window, operand 4, single buffered']
    #allocation3 [shape = 's32[1]{0}', space=sflag, size = 0x4, scoped, tag = 'scoped memory for xlstm_forward.1']
    %15 = vsyncpa [#allocation3], 0
    // Predicated region
    $region2: #{xlstm_forward.1} parent=1 // pred_check
      _
    $region3: #{xlstm_forward.1} parent=1 // pred_check_branch
      %17 = sbr.rel (0) target = $region5
    $region4: #{xlstm_forward.1} parent=1 // pred_region
      _
    $region5: #{xlstm_forward.1} parent=1 // pred_fallthru
      _
    // Predicated region
    $region6: #{xlstm_forward.1} parent=1 // pred_check
      _
    $region7: #{xlstm_forward.1} parent=1 // pred_check_branch
      %19 = sbr.rel (0) target = $region9
    $region8: #{xlstm_forward.1} parent=1 // pred_region
      _
    $region9: #{xlstm_forward.1} parent=1 // pred_fallthru
      _
    // Predicated region
    $region10: #{xlstm_forward.1} parent=1 // pred_check
      _
    $region11: #{xlstm_forward.1} parent=1 // pred_check_branch
      %21 = sbr.rel (0) target = $region13
    $region12: #{xlstm_forward.1} parent=1 // pred_region
      _
    $region13: #{xlstm_forward.1} parent=1 // pred_fallthru
      _
    // Predicated region
    $region14: #{xlstm_forward.1} parent=1 // pred_check
      _
    $region15: #{xlstm_forward.1} parent=1 // pred_check_branch
      %23 = sbr.rel (0) target = $region17
    $region16: #{xlstm_forward.1} parent=1 // pred_region
      _
    $region17: #{xlstm_forward.1} parent=1 // pred_fallthru
      _
    // Predicated region
    $region18: #{xlstm_forward.1} parent=1 // pred_check
      _
    $region19: #{xlstm_forward.1} parent=1 // pred_check_branch
      %25 = sbr.rel (0) target = $region21
    $region20: #{xlstm_forward.1} parent=1 // pred_region
      %27 = vsyncadd [#allocation3], 0
      %s28 = sshll.u32 %s4, 4
      %s29 = int_to_ptr.hbm [resolvable:$true] %s28
      %s30 = sshll.u32 [#allocation2], 4
      %s31 = int_to_ptr.vmem [resolvable:$true] %s30
      %36 = dma.hbm_to_vmem [thread:$0]  %s29, 1536, %s31, [#allocation3], 128, 128, 8
    $region21: #{xlstm_forward.1} parent=1 // pred_fallthru
      _
    // Predicated region
    $region22: #{xlstm_forward.1} parent=1 // pred_check
      _
    $region23: #{xlstm_forward.1} parent=1 // pred_check_branch
      %38 = sbr.rel (0) target = $region25
    $region24: #{xlstm_forward.1} parent=1 // pred_region
      _
    $region25: #{xlstm_forward.1} parent=1 // pred_fallthru
      _
    // Predicated region
    $region26: #{xlstm_forward.1} parent=1 // pred_check
      _
    $region27: #{xlstm_forward.1} parent=1 // pred_check_branch
      %40 = sbr.rel (0) target = $region29
    $region28: #{xlstm_forward.1} parent=1 // pred_region
      _
    $region29: #{xlstm_forward.1} parent=1 // pred_fallthru
      _
    // Predicated region
    $region30: #{xlstm_forward.1} parent=1 // pred_check
      _
    $region31: #{xlstm_forward.1} parent=1 // pred_check_branch
      %42 = sbr.rel (0) target = $region33
    $region32: #{xlstm_forward.1} parent=1 // pred_region
      _
    $region33: #{xlstm_forward.1} parent=1 // pred_fallthru
      _
    // Predicated region
    $region34: #{xlstm_forward.1} parent=1 // pred_check
      _
    $region35: #{xlstm_forward.1} parent=1 // pred_check_branch
      %44 = sbr.rel (0) target = $region37
    $region36: #{xlstm_forward.1} parent=1 // pred_region
      _
    $region37: #{xlstm_forward.1} parent=1 // pred_fallthru
      _
    // Predicated region
    $region38: #{xlstm_forward.1} parent=1 // pred_check
      _
    $region39: #{xlstm_forward.1} parent=1 // pred_check_branch
      %46 = sbr.rel (0) target = $region41
    $region40: #{xlstm_forward.1} parent=1 // pred_region
      _
    $region41: #{xlstm_forward.1} parent=1 // pred_fallthru
      _
    // Predicated region
    $region42: #{xlstm_forward.1} parent=1 // pred_check
      _
    $region43: #{xlstm_forward.1} parent=1 // pred_check_branch
      %48 = sbr.rel (0) target = $region45
    $region44: #{xlstm_forward.1} parent=1 // pred_region
      %50 = dma.done [#allocation3], 1536
    $region45: #{xlstm_forward.1} parent=1 // pred_fallthru
      _
    %v52 = vld [vmem:[%s0] sm:$0xff]
    %v53 = vld [vmem:[%s0 + $0x8] sm:$0xff]
    %v54 = vld [vmem:[%s0 + $0x10] sm:$0xff]
    %v55 = vld [vmem:[%s0 + $0x18] sm:$0xff]
    %v56 = vld [vmem:[%s1] sm:$0xff]
    %v57 = vld [vmem:[%s1 + $0x8] sm:$0xff]
    %v58 = vld [vmem:[%s1 + $0x10] sm:$0xff]
    %v59 = vld [vmem:[%s1 + $0x18] sm:$0xff]
    %v60 = vld [vmem:[%s3] sm:$0x1]
    %v62 = vperm.slane %v60, 0
    %vm64 = vcmask 261120
    %v66 = vsel %vm64, %v52, 0
    %v69 = vsel %vm64, %v53, 0
    %v72 = vsel %vm64, %v54, 0
    %v75 = vsel %vm64, %v55, 0
    %77 = vmatpush.msra.mxu0 0.0
    %78 = vmatpush.msra.mxu0 0.0
    %79 = vmatpush.msra.mxu0 0.0
    %80 = vmatpush.msra.mxu0 0.0
    %81 = vmatpush.msra.mxu0 0.0
    %82 = vmatpush.msra.mxu0 0.0
    %83 = vmatpush.msra.mxu0 0.0
    %84 = vmatpush.msra.mxu0 0.0
    %85 = vmatpush.msra.mxu0 0.0
    %86 = vmatpush.msra.mxu0 0.0
    %87 = vmatpush.msra.mxu0 0.0
    %88 = vmatpush.msra.mxu0 0.0
    %89 = vmatpush.msra.mxu0 %v59
    %90 = vmatpush.msra.mxu0 %v58
    %91 = vmatpush.msra.mxu0 %v57
    %92 = vmatpush.msra.mxu0 %v56
    %93 = vmatmul.f32.gmra.mxu0 %v66
    %v94 = vpop.f32.mrf.mxu0
    %v95 = vadd.f32 %v62, %v94
    %96 = vmatmul.f32.gmra.mxu0 %v69
    %v97 = vpop.f32.mrf.mxu0
    %v98 = vadd.f32 %v62, %v97
    %99 = vmatmul.f32.gmra.mxu0 %v72
    %v100 = vpop.f32.mrf.mxu0
    %v101 = vadd.f32 %v62, %v100
    %102 = vmatmul.f32.gmra.mxu0 %v75
    %v103 = vpop.f32.mrf.mxu0
    %v104 = vadd.f32 %v62, %v103
    %105 = vdwg.mxu0
    %v106 = vld [vmem:[%s2] sm:$0xff]
    %v107 = vld [vmem:[%s2 + $0x8] sm:$0xff]
    %v108 = vld [vmem:[%s2 + $0x10] sm:$0xff]
    %v109 = vld [vmem:[%s2 + $0x18] sm:$0xff]
    %v110 = vpack.c.bf16 %v107, %v106
    %v111 = vpack.c.bf16 %v109, %v108
    %v113 = vsel %vm64, 0, 0
    %115 = vmatpush.bf16.msra.mxu0 0
    %116 = vmatpush.bf16.msra.mxu0 0
    %117 = vmatpush.bf16.msra.mxu0 0
    %118 = vmatpush.bf16.msra.mxu0 0
    %119 = vmatpush.bf16.msra.mxu0 0
    %120 = vmatpush.bf16.msra.mxu0 0
    %121 = vmatpush.bf16.msra.mxu0 %v111
    %122 = vmatpush.bf16.msra.mxu0 %v110
    %123 = vmatmul.bf16.gmra.mxu0 %v113
    %v124 = vpop.f32.mrf.mxu0
    %v125 = vadd.f32 0.0, %v124
    %v126 = vpop.f32.mrf.mxu0
    %127 = vdwg.mxu0
    %v128 = vadd.f32 %v95, %v125
    %v129 = vxor.u32 %v128, 2147483648
    %v130 = vmul.f32 %v129, 1.442695
    %v131 = vpow.pop %v130
    %v132 = vadd.f32 %v131, 1.0
    %v133 = vrcp.pop %v132
    %v134 = vmul.f32 %v132, %v133
    %v135 = vsub.f32 1.0, %v134
    %v136 = vmul.f32 %v133, %v135
    %v137 = vadd.f32 %v133, %v136
    %vm138 = vweird.f32 %v132
    %vm139 = vweird.f32 %v133
    %vm140 = vmor %vm138, %vm139
    %v141 = vsel %vm140, %v133, %v137
    %v142 = vand.u32 2147483647, %v132
    %vm143 = vcmp.eq.f32.partialorder %v142, 8.507059e+37
    %v144 = vand.u32 %v132, 2147483648
    %v145 = vor.u32 1.1754944e-38, %v144
    %v146 = vsel %vm143, %v145, %v141
    %v147 = vmul.f32 1.0, %v146
    %v148 = vtanh.pop %v128
    %v149 = vmul.f32 %v147, 0.0
    %151 = vrot.lane.b32.xlu0 %v148, 64
    %v152 = vpop.permute.xlu0 %151
    %v154 = vmul.f32 %v147, %v152
    %156 = vrot.lane.b32.xlu0 %v154, 32
    %v157 = vpop.permute.xlu0 %156
    %v159 = vadd.f32 %v149, %v157
    %v160 = vtanh.pop %v159
    %162 = vrot.lane.b32.xlu0 %v160, 64
    %v163 = vpop.permute.xlu0 %162
    %v165 = vmul.f32 %v147, %v163
    %v166 = vpack.c.bf16 %v165, %v165
    %168 = vrot.lane.b32.xlu0 %v166, 32
    %v169 = vpop.permute.xlu0 %168
    %v171 = vsel %vm64, %v169, 0
    %173 = vmatpush.bf16.msra.mxu0 0
    %174 = vmatpush.bf16.msra.mxu0 0
    %175 = vmatpush.bf16.msra.mxu0 0
    %176 = vmatpush.bf16.msra.mxu0 0
    %177 = vmatpush.bf16.msra.mxu0 0
    %178 = vmatpush.bf16.msra.mxu0 0
    %179 = vmatpush.bf16.msra.mxu0 %v111
    %180 = vmatpush.bf16.msra.mxu0 %v110
    %181 = vmatmul.bf16.gmra.mxu0 %v171
    %v182 = vpop.f32.mrf.mxu0
    %v183 = vadd.f32 0.0, %v182
    %v184 = vpop.f32.mrf.mxu0
    %185 = vdwg.mxu0
    %v187 = vrot.slane %v183, 6
    %v189 = vadd.f32 %v95, %v187
    %v190 = vxor.u32 %v189, 2147483648
    %v191 = vmul.f32 %v190, 1.442695
    %v192 = vpow.pop %v191
    %v193 = vadd.f32 %v192, 1.0
    %v194 = vrcp.pop %v193
    %v195 = vmul.f32 %v193, %v194
    %v196 = vsub.f32 1.0, %v195
    %v197 = vmul.f32 %v194, %v196
    %v198 = vadd.f32 %v194, %v197
    %vm199 = vweird.f32 %v193
    %vm200 = vweird.f32 %v194
    %vm201 = vmor %vm199, %vm200
    %v202 = vsel %vm201, %v194, %v198
    %v203 = vand.u32 2147483647, %v193
    %vm204 = vcmp.eq.f32.partialorder %v203, 8.507059e+37
    %v205 = vand.u32 %v193, 2147483648
    %v206 = vor.u32 1.1754944e-38, %v205
    %v207 = vsel %vm204, %v206, %v202
    %v208 = vmul.f32 1.0, %v207
    %v209 = vtanh.pop %v189
    %v211 = vrot.slane %v159, 6
    %v213 = vmul.f32 %v208, %v211
    %215 = vrot.lane.b32.xlu0 %v209, 64
    %v216 = vpop.permute.xlu0 %215
    %v218 = vmul.f32 %v208, %v216
    %220 = vrot.lane.b32.xlu0 %v218, 32
    %v221 = vpop.permute.xlu0 %220
    %v223 = vadd.f32 %v213, %v221
    %v224 = vtanh.pop %v223
    %226 = vrot.lane.b32.xlu0 %v224, 64
    %v227 = vpop.permute.xlu0 %226
    %v229 = vmul.f32 %v208, %v227
    %v230 = vpack.c.bf16 %v229, %v229
    %v232 = vrot.slane %v230, 1
    %233 = vrot.lane.b32.xlu0 %v232, 32
    %v234 = vpop.permute.xlu0 %233
    %v236 = vsel %vm64, %v234, 0
    %238 = vmatpush.bf16.msra.mxu0 0
    %239 = vmatpush.bf16.msra.mxu0 0
    %240 = vmatpush.bf16.msra.mxu0 0
    %241 = vmatpush.bf16.msra.mxu0 0
    %242 = vmatpush.bf16.msra.mxu0 0
    %243 = vmatpush.bf16.msra.mxu0 0
    %244 = vmatpush.bf16.msra.mxu0 %v111
    %245 = vmatpush.bf16.msra.mxu0 %v110
    %246 = vmatmul.bf16.gmra.mxu0 %v236
    %v247 = vpop.f32.mrf.mxu0
    %v248 = vadd.f32 0.0, %v247
    %v249 = vpop.f32.mrf.mxu0
    %250 = vdwg.mxu0
    %v252 = vrot.slane %v248, 4
    %v254 = vadd.f32 %v95, %v252
    %v255 = vxor.u32 %v254, 2147483648
    %v256 = vmul.f32 %v255, 1.442695
    %v257 = vpow.pop %v256
    %v258 = vadd.f32 %v257, 1.0
    %v259 = vrcp.pop %v258
    %v260 = vmul.f32 %v258, %v259
    %v261 = vsub.f32 1.0, %v260
    %v262 = vmul.f32 %v259, %v261
    %v263 = vadd.f32 %v259, %v262
    %vm264 = vweird.f32 %v258
    %vm265 = vweird.f32 %v259
    %vm266 = vmor %vm264, %vm265
    %v267 = vsel %vm266, %v259, %v263
    %v268 = vand.u32 2147483647, %v258
    %vm269 = vcmp.eq.f32.partialorder %v268, 8.507059e+37
    %v270 = vand.u32 %v258, 2147483648
    %v271 = vor.u32 1.1754944e-38, %v270
    %v272 = vsel %vm269, %v271, %v267
    %v273 = vmul.f32 1.0, %v272
    %v274 = vtanh.pop %v254
    %v276 = vrot.slane %v223, 6
    %v278 = vmul.f32 %v273, %v276
    %280 = vrot.lane.b32.xlu0 %v274, 64
    %v281 = vpop.permute.xlu0 %280
    %v283 = vmul.f32 %v273, %v281
    %285 = vrot.lane.b32.xlu0 %v283, 32
    %v286 = vpop.permute.xlu0 %285
    %v288 = vadd.f32 %v278, %v286
    %v289 = vtanh.pop %v288
    %291 = vrot.lane.b32.xlu0 %v289, 64
    %v292 = vpop.permute.xlu0 %291
    %v294 = vmul.f32 %v273, %v292
    %v295 = vpack.c.bf16 %v294, %v294
    %v297 = vrot.slane %v295, 2
    %298 = vrot.lane.b32.xlu0 %v297, 32
    %v299 = vpop.permute.xlu0 %298
    %v301 = vsel %vm64, %v299, 0
    %303 = vmatpush.bf16.msra.mxu0 0
    %304 = vmatpush.bf16.msra.mxu0 0
    %305 = vmatpush.bf16.msra.mxu0 0
    %306 = vmatpush.bf16.msra.mxu0 0
    %307 = vmatpush.bf16.msra.mxu0 0
    %308 = vmatpush.bf16.msra.mxu0 0
    %309 = vmatpush.bf16.msra.mxu0 %v111
    %310 = vmatpush.bf16.msra.mxu0 %v110
    %311 = vmatmul.bf16.gmra.mxu0 %v301
    %v312 = vpop.f32.mrf.mxu0
    %v313 = vadd.f32 0.0, %v312
    %v314 = vpop.f32.mrf.mxu0
    %315 = vdwg.mxu0
    %v317 = vrot.slane %v313, 2
    %v319 = vadd.f32 %v95, %v317
    %v320 = vxor.u32 %v319, 2147483648
    %v321 = vmul.f32 %v320, 1.442695
    %v322 = vpow.pop %v321
    %v323 = vadd.f32 %v322, 1.0
    %v324 = vrcp.pop %v323
    %v325 = vmul.f32 %v323, %v324
    %v326 = vsub.f32 1.0, %v325
    %v327 = vmul.f32 %v324, %v326
    %v328 = vadd.f32 %v324, %v327
    %vm329 = vweird.f32 %v323
    %vm330 = vweird.f32 %v324
    %vm331 = vmor %vm329, %vm330
    %v332 = vsel %vm331, %v324, %v328
    %v333 = vand.u32 2147483647, %v323
    %vm334 = vcmp.eq.f32.partialorder %v333, 8.507059e+37
    %v335 = vand.u32 %v323, 2147483648
    %v336 = vor.u32 1.1754944e-38, %v335
    %v337 = vsel %vm334, %v336, %v332
    %v338 = vmul.f32 1.0, %v337
    %v339 = vtanh.pop %v319
    %v341 = vrot.slane %v288, 6
    %v343 = vmul.f32 %v338, %v341
    %345 = vrot.lane.b32.xlu0 %v339, 64
    %v346 = vpop.permute.xlu0 %345
    %v348 = vmul.f32 %v338, %v346
    %350 = vrot.lane.b32.xlu0 %v348, 32
    %v351 = vpop.permute.xlu0 %350
    %v353 = vadd.f32 %v343, %v351
    %v354 = vtanh.pop %v353
    %356 = vrot.lane.b32.xlu0 %v354, 64
    %v357 = vpop.permute.xlu0 %356
    %v359 = vmul.f32 %v338, %v357
    %v360 = vpack.c.bf16 %v359, %v359
    %v362 = vrot.slane %v360, 3
    %363 = vrot.lane.b32.xlu0 %v362, 32
    %v364 = vpop.permute.xlu0 %363
    %v366 = vsel %vm64, %v364, 0
    %368 = vmatpush.bf16.msra.mxu0 0
    %369 = vmatpush.bf16.msra.mxu0 0
    %370 = vmatpush.bf16.msra.mxu0 0
    %371 = vmatpush.bf16.msra.mxu0 0
    %372 = vmatpush.bf16.msra.mxu0 0
    %373 = vmatpush.bf16.msra.mxu0 0
    %374 = vmatpush.bf16.msra.mxu0 %v111
    %375 = vmatpush.bf16.msra.mxu0 %v110
    %376 = vmatmul.bf16.gmra.mxu0 %v366
    %v377 = vpop.f32.mrf.mxu0
    %v378 = vadd.f32 0.0, %v377
    %v379 = vpop.f32.mrf.mxu0
    %380 = vdwg.mxu0
    %v381 = vadd.f32 %v98, %v378
    %v382 = vxor.u32 %v381, 2147483648
    %v383 = vmul.f32 %v382, 1.442695
    %v384 = vpow.pop %v383
    %v385 = vadd.f32 %v384, 1.0
    %v386 = vrcp.pop %v385
    %v387 = vmul.f32 %v385, %v386
    %v388 = vsub.f32 1.0, %v387
    %v389 = vmul.f32 %v386, %v388
    %v390 = vadd.f32 %v386, %v389
    %vm391 = vweird.f32 %v385
    %vm392 = vweird.f32 %v386
    %vm393 = vmor %vm391, %vm392
    %v394 = vsel %vm393, %v386, %v390
    %v395 = vand.u32 2147483647, %v385
    %vm396 = vcmp.eq.f32.partialorder %v395, 8.507059e+37
    %v397 = vand.u32 %v385, 2147483648
    %v398 = vor.u32 1.1754944e-38, %v397
    %v399 = vsel %vm396, %v398, %v394
    %v400 = vmul.f32 1.0, %v399
    %v401 = vtanh.pop %v381
    %v403 = vrot.slane %v353, 6
    %v405 = vmul.f32 %v400, %v403
    %407 = vrot.lane.b32.xlu0 %v401, 64
    %v408 = vpop.permute.xlu0 %407
    %v410 = vmul.f32 %v400, %v408
    %412 = vrot.lane.b32.xlu0 %v410, 32
    %v413 = vpop.permute.xlu0 %412
    %v415 = vadd.f32 %v405, %v413
    %v416 = vtanh.pop %v415
    %418 = vrot.lane.b32.xlu0 %v416, 64
    %v419 = vpop.permute.xlu0 %418
    %v421 = vmul.f32 %v400, %v419
    %v422 = vpack.c.bf16 %v421, %v421
    %424 = vrot.lane.b32.xlu0 %v422, 32
    %v425 = vpop.permute.xlu0 %424
    %v427 = vsel %vm64, %v425, 0
    %429 = vmatpush.bf16.msra.mxu0 0
    %430 = vmatpush.bf16.msra.mxu0 0
    %431 = vmatpush.bf16.msra.mxu0 0
    %432 = vmatpush.bf16.msra.mxu0 0
    %433 = vmatpush.bf16.msra.mxu0 0
    %434 = vmatpush.bf16.msra.mxu0 0
    %435 = vmatpush.bf16.msra.mxu0 %v111
    %436 = vmatpush.bf16.msra.mxu0 %v110
    %437 = vmatmul.bf16.gmra.mxu0 %v427
    %v438 = vpop.f32.mrf.mxu0
    %v439 = vadd.f32 0.0, %v438
    %v440 = vpop.f32.mrf.mxu0
    %441 = vdwg.mxu0
    %v443 = vrot.slane %v439, 6
    %v445 = vadd.f32 %v98, %v443
    %v446 = vxor.u32 %v445, 2147483648
    %v447 = vmul.f32 %v446, 1.442695
    %v448 = vpow.pop %v447
    %v449 = vadd.f32 %v448, 1.0
    %v450 = vrcp.pop %v449
    %v451 = vmul.f32 %v449, %v450
    %v452 = vsub.f32 1.0, %v451
    %v453 = vmul.f32 %v450, %v452
    %v454 = vadd.f32 %v450, %v453
    %vm455 = vweird.f32 %v449
    %vm456 = vweird.f32 %v450
    %vm457 = vmor %vm455, %vm456
    %v458 = vsel %vm457, %v450, %v454
    %v459 = vand.u32 2147483647, %v449
    %vm460 = vcmp.eq.f32.partialorder %v459, 8.507059e+37
    %v461 = vand.u32 %v449, 2147483648
    %v462 = vor.u32 1.1754944e-38, %v461
    %v463 = vsel %vm460, %v462, %v458
    %v464 = vmul.f32 1.0, %v463
    %v465 = vtanh.pop %v445
    %v467 = vrot.slane %v415, 6
    %v469 = vmul.f32 %v464, %v467
    %471 = vrot.lane.b32.xlu0 %v465, 64
    %v472 = vpop.permute.xlu0 %471
    %v474 = vmul.f32 %v464, %v472
    %476 = vrot.lane.b32.xlu0 %v474, 32
    %v477 = vpop.permute.xlu0 %476
    %v479 = vadd.f32 %v469, %v477
    %v480 = vtanh.pop %v479
    %482 = vrot.lane.b32.xlu0 %v480, 64
    %v483 = vpop.permute.xlu0 %482
    %v485 = vmul.f32 %v464, %v483
    %v486 = vpack.c.bf16 %v485, %v485
    %v488 = vrot.slane %v486, 1
    %489 = vrot.lane.b32.xlu0 %v488, 32
    %v490 = vpop.permute.xlu0 %489
    %v492 = vsel %vm64, %v490, 0
    %494 = vmatpush.bf16.msra.mxu0 0
    %495 = vmatpush.bf16.msra.mxu0 0
    %496 = vmatpush.bf16.msra.mxu0 0
    %497 = vmatpush.bf16.msra.mxu0 0
    %498 = vmatpush.bf16.msra.mxu0 0
    %499 = vmatpush.bf16.msra.mxu0 0
    %500 = vmatpush.bf16.msra.mxu0 %v111
    %501 = vmatpush.bf16.msra.mxu0 %v110
    %502 = vmatmul.bf16.gmra.mxu0 %v492
    %v503 = vpop.f32.mrf.mxu0
    %v504 = vadd.f32 0.0, %v503
    %v505 = vpop.f32.mrf.mxu0
    %506 = vdwg.mxu0
    %v508 = vrot.slane %v504, 4
    %v510 = vadd.f32 %v98, %v508
    %v511 = vxor.u32 %v510, 2147483648
    %v512 = vmul.f32 %v511, 1.442695
    %v513 = vpow.pop %v512
    %v514 = vadd.f32 %v513, 1.0
    %v515 = vrcp.pop %v514
    %v516 = vmul.f32 %v514, %v515
    %v517 = vsub.f32 1.0, %v516
    %v518 = vmul.f32 %v515, %v517
    %v519 = vadd.f32 %v515, %v518
    %vm520 = vweird.f32 %v514
    %vm521 = vweird.f32 %v515
    %vm522 = vmor %vm520, %vm521
    %v523 = vsel %vm522, %v515, %v519
    %v524 = vand.u32 2147483647, %v514
    %vm525 = vcmp.eq.f32.partialorder %v524, 8.507059e+37
    %v526 = vand.u32 %v514, 2147483648
    %v527 = vor.u32 1.1754944e-38, %v526
    %v528 = vsel %vm525, %v527, %v523
    %v529 = vmul.f32 1.0, %v528
    %v530 = vtanh.pop %v510
    %v532 = vrot.slane %v479, 6
    %v534 = vmul.f32 %v529, %v532
    %536 = vrot.lane.b32.xlu0 %v530, 64
    %v537 = vpop.permute.xlu0 %536
    %v539 = vmul.f32 %v529, %v537
    %541 = vrot.lane.b32.xlu0 %v539, 32
    %v542 = vpop.permute.xlu0 %541
    %v544 = vadd.f32 %v534, %v542
    %v545 = vtanh.pop %v544
    %547 = vrot.lane.b32.xlu0 %v545, 64
    %v548 = vpop.permute.xlu0 %547
    %v550 = vmul.f32 %v529, %v548
    %v551 = vpack.c.bf16 %v550, %v550
    %v553 = vrot.slane %v551, 2
    %554 = vrot.lane.b32.xlu0 %v553, 32
    %v555 = vpop.permute.xlu0 %554
    %v557 = vsel %vm64, %v555, 0
    %559 = vmatpush.bf16.msra.mxu0 0
    %560 = vmatpush.bf16.msra.mxu0 0
    %561 = vmatpush.bf16.msra.mxu0 0
    %562 = vmatpush.bf16.msra.mxu0 0
    %563 = vmatpush.bf16.msra.mxu0 0
    %564 = vmatpush.bf16.msra.mxu0 0
    %565 = vmatpush.bf16.msra.mxu0 %v111
    %566 = vmatpush.bf16.msra.mxu0 %v110
    %567 = vmatmul.bf16.gmra.mxu0 %v557
    %v568 = vpop.f32.mrf.mxu0
    %v569 = vadd.f32 0.0, %v568
    %v570 = vpop.f32.mrf.mxu0
    %571 = vdwg.mxu0
    %v573 = vrot.slane %v569, 2
    %v575 = vadd.f32 %v98, %v573
    %v576 = vxor.u32 %v575, 2147483648
    %v577 = vmul.f32 %v576, 1.442695
    %v578 = vpow.pop %v577
    %v579 = vadd.f32 %v578, 1.0
    %v580 = vrcp.pop %v579
    %v581 = vmul.f32 %v579, %v580
    %v582 = vsub.f32 1.0, %v581
    %v583 = vmul.f32 %v580, %v582
    %v584 = vadd.f32 %v580, %v583
    %vm585 = vweird.f32 %v579
    %vm586 = vweird.f32 %v580
    %vm587 = vmor %vm585, %vm586
    %v588 = vsel %vm587, %v580, %v584
    %v589 = vand.u32 2147483647, %v579
    %vm590 = vcmp.eq.f32.partialorder %v589, 8.507059e+37
    %v591 = vand.u32 %v579, 2147483648
    %v592 = vor.u32 1.1754944e-38, %v591
    %v593 = vsel %vm590, %v592, %v588
    %v594 = vmul.f32 1.0, %v593
    %v595 = vtanh.pop %v575
    %v597 = vrot.slane %v544, 6
    %v599 = vmul.f32 %v594, %v597
    %601 = vrot.lane.b32.xlu0 %v595, 64
    %v602 = vpop.permute.xlu0 %601
    %v604 = vmul.f32 %v594, %v602
    %606 = vrot.lane.b32.xlu0 %v604, 32
    %v607 = vpop.permute.xlu0 %606
    %v609 = vadd.f32 %v599, %v607
    %v610 = vtanh.pop %v609
    %612 = vrot.lane.b32.xlu0 %v610, 64
    %v613 = vpop.permute.xlu0 %612
    %v615 = vmul.f32 %v594, %v613
    %v616 = vpack.c.bf16 %v615, %v615
    %v618 = vrot.slane %v616, 3
    %619 = vrot.lane.b32.xlu0 %v618, 32
    %v620 = vpop.permute.xlu0 %619
    %v622 = vsel %vm64, %v620, 0
    %624 = vmatpush.bf16.msra.mxu0 0
    %625 = vmatpush.bf16.msra.mxu0 0
    %626 = vmatpush.bf16.msra.mxu0 0
    %627 = vmatpush.bf16.msra.mxu0 0
    %628 = vmatpush.bf16.msra.mxu0 0
    %629 = vmatpush.bf16.msra.mxu0 0
    %630 = vmatpush.bf16.msra.mxu0 %v111
    %631 = vmatpush.bf16.msra.mxu0 %v110
    %632 = vmatmul.bf16.gmra.mxu0 %v622
    %v633 = vpop.f32.mrf.mxu0
    %v634 = vadd.f32 0.0, %v633
    %v635 = vpop.f32.mrf.mxu0
    %636 = vdwg.mxu0
    %v637 = vadd.f32 %v101, %v634
    %v638 = vxor.u32 %v637, 2147483648
    %v639 = vmul.f32 %v638, 1.442695
    %v640 = vpow.pop %v639
    %v641 = vadd.f32 %v640, 1.0
    %v642 = vrcp.pop %v641
    %v643 = vmul.f32 %v641, %v642
    %v644 = vsub.f32 1.0, %v643
    %v645 = vmul.f32 %v642, %v644
    %v646 = vadd.f32 %v642, %v645
    %vm647 = vweird.f32 %v641
    %vm648 = vweird.f32 %v642
    %vm649 = vmor %vm647, %vm648
    %v650 = vsel %vm649, %v642, %v646
    %v651 = vand.u32 2147483647, %v641
    %vm652 = vcmp.eq.f32.partialorder %v651, 8.507059e+37
    %v653 = vand.u32 %v641, 2147483648
    %v654 = vor.u32 1.1754944e-38, %v653
    %v655 = vsel %vm652, %v654, %v650
    %v656 = vmul.f32 1.0, %v655
    %v657 = vtanh.pop %v637
    %v659 = vrot.slane %v609, 6
    %v661 = vmul.f32 %v656, %v659
    %663 = vrot.lane.b32.xlu0 %v657, 64
    %v664 = vpop.permute.xlu0 %663
    %v666 = vmul.f32 %v656, %v664
    %668 = vrot.lane.b32.xlu0 %v666, 32
    %v669 = vpop.permute.xlu0 %668
    %v671 = vadd.f32 %v661, %v669
    %v672 = vtanh.pop %v671
    %674 = vrot.lane.b32.xlu0 %v672, 64
    %v675 = vpop.permute.xlu0 %674
    %v677 = vmul.f32 %v656, %v675
    %v678 = vpack.c.bf16 %v677, %v677
    %680 = vrot.lane.b32.xlu0 %v678, 32
    %v681 = vpop.permute.xlu0 %680
    %v683 = vsel %vm64, %v681, 0
    %685 = vmatpush.bf16.msra.mxu0 0
    %686 = vmatpush.bf16.msra.mxu0 0
    %687 = vmatpush.bf16.msra.mxu0 0
    %688 = vmatpush.bf16.msra.mxu0 0
    %689 = vmatpush.bf16.msra.mxu0 0
    %690 = vmatpush.bf16.msra.mxu0 0
    %691 = vmatpush.bf16.msra.mxu0 %v111
    %692 = vmatpush.bf16.msra.mxu0 %v110
    %693 = vmatmul.bf16.gmra.mxu0 %v683
    %v694 = vpop.f32.mrf.mxu0
    %v695 = vadd.f32 0.0, %v694
    %v696 = vpop.f32.mrf.mxu0
    %697 = vdwg.mxu0
    %v699 = vrot.slane %v695, 6
    %v701 = vadd.f32 %v101, %v699
    %v702 = vxor.u32 %v701, 2147483648
    %v703 = vmul.f32 %v702, 1.442695
    %v704 = vpow.pop %v703
    %v705 = vadd.f32 %v704, 1.0
    %v706 = vrcp.pop %v705
    %v707 = vmul.f32 %v705, %v706
    %v708 = vsub.f32 1.0, %v707
    %v709 = vmul.f32 %v706, %v708
    %v710 = vadd.f32 %v706, %v709
    %vm711 = vweird.f32 %v705
    %vm712 = vweird.f32 %v706
    %vm713 = vmor %vm711, %vm712
    %v714 = vsel %vm713, %v706, %v710
    %v715 = vand.u32 2147483647, %v705
    %vm716 = vcmp.eq.f32.partialorder %v715, 8.507059e+37
    %v717 = vand.u32 %v705, 2147483648
    %v718 = vor.u32 1.1754944e-38, %v717
    %v719 = vsel %vm716, %v718, %v714
    %v720 = vmul.f32 1.0, %v719
    %v721 = vtanh.pop %v701
    %v723 = vrot.slane %v671, 6
    %v725 = vmul.f32 %v720, %v723
    %727 = vrot.lane.b32.xlu0 %v721, 64
    %v728 = vpop.permute.xlu0 %727
    %v730 = vmul.f32 %v720, %v728
    %732 = vrot.lane.b32.xlu0 %v730, 32
    %v733 = vpop.permute.xlu0 %732
    %v735 = vadd.f32 %v725, %v733
    %v736 = vtanh.pop %v735
    %738 = vrot.lane.b32.xlu0 %v736, 64
    %v739 = vpop.permute.xlu0 %738
    %v741 = vmul.f32 %v720, %v739
    %v742 = vpack.c.bf16 %v741, %v741
    %v744 = vrot.slane %v742, 1
    %745 = vrot.lane.b32.xlu0 %v744, 32
    %v746 = vpop.permute.xlu0 %745
    %v748 = vsel %vm64, %v746, 0
    %750 = vmatpush.bf16.msra.mxu0 0
    %751 = vmatpush.bf16.msra.mxu0 0
    %752 = vmatpush.bf16.msra.mxu0 0
    %753 = vmatpush.bf16.msra.mxu0 0
    %754 = vmatpush.bf16.msra.mxu0 0
    %755 = vmatpush.bf16.msra.mxu0 0
    %756 = vmatpush.bf16.msra.mxu0 %v111
    %757 = vmatpush.bf16.msra.mxu0 %v110
    %758 = vmatmul.bf16.gmra.mxu0 %v748
    %v759 = vpop.f32.mrf.mxu0
    %v760 = vadd.f32 0.0, %v759
    %v761 = vpop.f32.mrf.mxu0
    %762 = vdwg.mxu0
    %v764 = vrot.slane %v760, 4
    %v766 = vadd.f32 %v101, %v764
    %v767 = vxor.u32 %v766, 2147483648
    %v768 = vmul.f32 %v767, 1.442695
    %v769 = vpow.pop %v768
    %v770 = vadd.f32 %v769, 1.0
    %v771 = vrcp.pop %v770
    %v772 = vmul.f32 %v770, %v771
    %v773 = vsub.f32 1.0, %v772
    %v774 = vmul.f32 %v771, %v773
    %v775 = vadd.f32 %v771, %v774
    %vm776 = vweird.f32 %v770
    %vm777 = vweird.f32 %v771
    %vm778 = vmor %vm776, %vm777
    %v779 = vsel %vm778, %v771, %v775
    %v780 = vand.u32 2147483647, %v770
    %vm781 = vcmp.eq.f32.partialorder %v780, 8.507059e+37
    %v782 = vand.u32 %v770, 2147483648
    %v783 = vor.u32 1.1754944e-38, %v782
    %v784 = vsel %vm781, %v783, %v779
    %v785 = vmul.f32 1.0, %v784
    %v786 = vtanh.pop %v766
    %v788 = vrot.slane %v735, 6
    %v790 = vmul.f32 %v785, %v788
    %792 = vrot.lane.b32.xlu0 %v786, 64
    %v793 = vpop.permute.xlu0 %792
    %v795 = vmul.f32 %v785, %v793
    %797 = vrot.lane.b32.xlu0 %v795, 32
    %v798 = vpop.permute.xlu0 %797
    %v800 = vadd.f32 %v790, %v798
    %v801 = vtanh.pop %v800
    %803 = vrot.lane.b32.xlu0 %v801, 64
    %v804 = vpop.permute.xlu0 %803
    %v806 = vmul.f32 %v785, %v804
    %v807 = vpack.c.bf16 %v806, %v806
    %v809 = vrot.slane %v807, 2
    %810 = vrot.lane.b32.xlu0 %v809, 32
    %v811 = vpop.permute.xlu0 %810
    %v813 = vsel %vm64, %v811, 0
    %815 = vmatpush.bf16.msra.mxu0 0
    %816 = vmatpush.bf16.msra.mxu0 0
    %817 = vmatpush.bf16.msra.mxu0 0
    %818 = vmatpush.bf16.msra.mxu0 0
    %819 = vmatpush.bf16.msra.mxu0 0
    %820 = vmatpush.bf16.msra.mxu0 0
    %821 = vmatpush.bf16.msra.mxu0 %v111
    %822 = vmatpush.bf16.msra.mxu0 %v110
    %823 = vmatmul.bf16.gmra.mxu0 %v813
    %v824 = vpop.f32.mrf.mxu0
    %v825 = vadd.f32 0.0, %v824
    %v826 = vpop.f32.mrf.mxu0
    %827 = vdwg.mxu0
    %v829 = vrot.slane %v825, 2
    %v831 = vadd.f32 %v101, %v829
    %v832 = vxor.u32 %v831, 2147483648
    %v833 = vmul.f32 %v832, 1.442695
    %v834 = vpow.pop %v833
    %v835 = vadd.f32 %v834, 1.0
    %v836 = vrcp.pop %v835
    %v837 = vmul.f32 %v835, %v836
    %v838 = vsub.f32 1.0, %v837
    %v839 = vmul.f32 %v836, %v838
    %v840 = vadd.f32 %v836, %v839
    %vm841 = vweird.f32 %v835
    %vm842 = vweird.f32 %v836
    %vm843 = vmor %vm841, %vm842
    %v844 = vsel %vm843, %v836, %v840
    %v845 = vand.u32 2147483647, %v835
    %vm846 = vcmp.eq.f32.partialorder %v845, 8.507059e+37
    %v847 = vand.u32 %v835, 2147483648
    %v848 = vor.u32 1.1754944e-38, %v847
    %v849 = vsel %vm846, %v848, %v844
    %v850 = vmul.f32 1.0, %v849
    %v851 = vtanh.pop %v831
    %v853 = vrot.slane %v800, 6
    %v855 = vmul.f32 %v850, %v853
    %857 = vrot.lane.b32.xlu0 %v851, 64
    %v858 = vpop.permute.xlu0 %857
    %v860 = vmul.f32 %v850, %v858
    %862 = vrot.lane.b32.xlu0 %v860, 32
    %v863 = vpop.permute.xlu0 %862
    %v865 = vadd.f32 %v855, %v863
    %v866 = vtanh.pop %v865
    %868 = vrot.lane.b32.xlu0 %v866, 64
    %v869 = vpop.permute.xlu0 %868
    %v871 = vmul.f32 %v850, %v869
    %v872 = vpack.c.bf16 %v871, %v871
    %v874 = vrot.slane %v872, 3
    %875 = vrot.lane.b32.xlu0 %v874, 32
    %v876 = vpop.permute.xlu0 %875
    %v878 = vsel %vm64, %v876, 0
    %880 = vmatpush.bf16.msra.mxu0 0
    %881 = vmatpush.bf16.msra.mxu0 0
    %882 = vmatpush.bf16.msra.mxu0 0
    %883 = vmatpush.bf16.msra.mxu0 0
    %884 = vmatpush.bf16.msra.mxu0 0
    %885 = vmatpush.bf16.msra.mxu0 0
    %886 = vmatpush.bf16.msra.mxu0 %v111
    %887 = vmatpush.bf16.msra.mxu0 %v110
    %888 = vmatmul.bf16.gmra.mxu0 %v878
    %v889 = vpop.f32.mrf.mxu0
    %v890 = vadd.f32 0.0, %v889
    %v891 = vpop.f32.mrf.mxu0
    %892 = vdwg.mxu0
    %v893 = vadd.f32 %v104, %v890
    %v894 = vxor.u32 %v893, 2147483648
    %v895 = vmul.f32 %v894, 1.442695
    %v896 = vpow.pop %v895
    %v897 = vadd.f32 %v896, 1.0
    %v898 = vrcp.pop %v897
    %v899 = vmul.f32 %v897, %v898
    %v900 = vsub.f32 1.0, %v899
    %v901 = vmul.f32 %v898, %v900
    %v902 = vadd.f32 %v898, %v901
    %vm903 = vweird.f32 %v897
    %vm904 = vweird.f32 %v898
    %vm905 = vmor %vm903, %vm904
    %v906 = vsel %vm905, %v898, %v902
    %v907 = vand.u32 2147483647, %v897
    %vm908 = vcmp.eq.f32.partialorder %v907, 8.507059e+37
    %v909 = vand.u32 %v897, 2147483648
    %v910 = vor.u32 1.1754944e-38, %v909
    %v911 = vsel %vm908, %v910, %v906
    %v912 = vmul.f32 1.0, %v911
    %v913 = vtanh.pop %v893
    %v915 = vrot.slane %v865, 6
    %v917 = vmul.f32 %v912, %v915
    %919 = vrot.lane.b32.xlu0 %v913, 64
    %v920 = vpop.permute.xlu0 %919
    %v922 = vmul.f32 %v912, %v920
    %924 = vrot.lane.b32.xlu0 %v922, 32
    %v925 = vpop.permute.xlu0 %924
    %v927 = vadd.f32 %v917, %v925
    %v928 = vtanh.pop %v927
    %930 = vrot.lane.b32.xlu0 %v928, 64
    %v931 = vpop.permute.xlu0 %930
    %v933 = vmul.f32 %v912, %v931
    %v934 = vpack.c.bf16 %v933, %v933
    %936 = vrot.lane.b32.xlu0 %v934, 32
    %v937 = vpop.permute.xlu0 %936
    %v939 = vsel %vm64, %v937, 0
    %941 = vmatpush.bf16.msra.mxu0 0
    %942 = vmatpush.bf16.msra.mxu0 0
    %943 = vmatpush.bf16.msra.mxu0 0
    %944 = vmatpush.bf16.msra.mxu0 0
    %945 = vmatpush.bf16.msra.mxu0 0
    %946 = vmatpush.bf16.msra.mxu0 0
    %947 = vmatpush.bf16.msra.mxu0 %v111
    %948 = vmatpush.bf16.msra.mxu0 %v110
    %949 = vmatmul.bf16.gmra.mxu0 %v939
    %v950 = vpop.f32.mrf.mxu0
    %v951 = vadd.f32 0.0, %v950
    %v952 = vpop.f32.mrf.mxu0
    %953 = vdwg.mxu0
    %v955 = vrot.slane %v951, 6
    %v957 = vadd.f32 %v104, %v955
    %v958 = vxor.u32 %v957, 2147483648
    %v959 = vmul.f32 %v958, 1.442695
    %v960 = vpow.pop %v959
    %v961 = vadd.f32 %v960, 1.0
    %v962 = vrcp.pop %v961
    %v963 = vmul.f32 %v961, %v962
    %v964 = vsub.f32 1.0, %v963
    %v965 = vmul.f32 %v962, %v964
    %v966 = vadd.f32 %v962, %v965
    %vm967 = vweird.f32 %v961
    %vm968 = vweird.f32 %v962
    %vm969 = vmor %vm967, %vm968
    %v970 = vsel %vm969, %v962, %v966
    %v971 = vand.u32 2147483647, %v961
    %vm972 = vcmp.eq.f32.partialorder %v971, 8.507059e+37
    %v973 = vand.u32 %v961, 2147483648
    %v974 = vor.u32 1.1754944e-38, %v973
    %v975 = vsel %vm972, %v974, %v970
    %v976 = vmul.f32 1.0, %v975
    %v977 = vtanh.pop %v957
    %v979 = vrot.slane %v927, 6
    %v981 = vmul.f32 %v976, %v979
    %983 = vrot.lane.b32.xlu0 %v977, 64
    %v984 = vpop.permute.xlu0 %983
    %v986 = vmul.f32 %v976, %v984
    %988 = vrot.lane.b32.xlu0 %v986, 32
    %v989 = vpop.permute.xlu0 %988
    %v991 = vadd.f32 %v981, %v989
    %v992 = vtanh.pop %v991
    %994 = vrot.lane.b32.xlu0 %v992, 64
    %v995 = vpop.permute.xlu0 %994
    %v997 = vmul.f32 %v976, %v995
    %v998 = vpack.c.bf16 %v997, %v997
    %v1000 = vrot.slane %v998, 1
    %1001 = vrot.lane.b32.xlu0 %v1000, 32
    %v1002 = vpop.permute.xlu0 %1001
    %v1004 = vsel %vm64, %v1002, 0
    %1006 = vmatpush.bf16.msra.mxu0 0
    %1007 = vmatpush.bf16.msra.mxu0 0
    %1008 = vmatpush.bf16.msra.mxu0 0
    %1009 = vmatpush.bf16.msra.mxu0 0
    %1010 = vmatpush.bf16.msra.mxu0 0
    %1011 = vmatpush.bf16.msra.mxu0 0
    %1012 = vmatpush.bf16.msra.mxu0 %v111
    %1013 = vmatpush.bf16.msra.mxu0 %v110
    %1014 = vmatmul.bf16.gmra.mxu0 %v1004
    %v1015 = vpop.f32.mrf.mxu0
    %v1016 = vadd.f32 0.0, %v1015
    %v1017 = vpop.f32.mrf.mxu0
    %1018 = vdwg.mxu0
    %v1020 = vrot.slane %v1016, 4
    %v1022 = vadd.f32 %v104, %v1020
    %v1023 = vxor.u32 %v1022, 2147483648
    %v1024 = vmul.f32 %v1023, 1.442695
    %v1025 = vpow.pop %v1024
    %v1026 = vadd.f32 %v1025, 1.0
    %v1027 = vrcp.pop %v1026
    %v1028 = vmul.f32 %v1026, %v1027
    %v1029 = vsub.f32 1.0, %v1028
    %v1030 = vmul.f32 %v1027, %v1029
    %v1031 = vadd.f32 %v1027, %v1030
    %vm1032 = vweird.f32 %v1026
    %vm1033 = vweird.f32 %v1027
    %vm1034 = vmor %vm1032, %vm1033
    %v1035 = vsel %vm1034, %v1027, %v1031
    %v1036 = vand.u32 2147483647, %v1026
    %vm1037 = vcmp.eq.f32.partialorder %v1036, 8.507059e+37
    %v1038 = vand.u32 %v1026, 2147483648
    %v1039 = vor.u32 1.1754944e-38, %v1038
    %v1040 = vsel %vm1037, %v1039, %v1035
    %v1041 = vmul.f32 1.0, %v1040
    %v1042 = vtanh.pop %v1022
    %v1044 = vrot.slane %v991, 6
    %v1046 = vmul.f32 %v1041, %v1044
    %1048 = vrot.lane.b32.xlu0 %v1042, 64
    %v1049 = vpop.permute.xlu0 %1048
    %v1051 = vmul.f32 %v1041, %v1049
    %1053 = vrot.lane.b32.xlu0 %v1051, 32
    %v1054 = vpop.permute.xlu0 %1053
    %v1056 = vadd.f32 %v1046, %v1054
    %v1057 = vtanh.pop %v1056
    %1059 = vrot.lane.b32.xlu0 %v1057, 64
    %v1060 = vpop.permute.xlu0 %1059
    %v1062 = vmul.f32 %v1041, %v1060
    %v1063 = vpack.c.bf16 %v1062, %v1062
    %v1065 = vrot.slane %v1063, 2
    %1066 = vrot.lane.b32.xlu0 %v1065, 32
    %v1067 = vpop.permute.xlu0 %1066
    %v1069 = vsel %vm64, %v1067, 0
    %1071 = vmatpush.bf16.msra.mxu0 0
    %1072 = vmatpush.bf16.msra.mxu0 0
    %1073 = vmatpush.bf16.msra.mxu0 0
    %1074 = vmatpush.bf16.msra.mxu0 0
    %1075 = vmatpush.bf16.msra.mxu0 0
    %1076 = vmatpush.bf16.msra.mxu0 0
    %1077 = vmatpush.bf16.msra.mxu0 %v111
    %1078 = vmatpush.bf16.msra.mxu0 %v110
    %1079 = vmatmul.bf16.gmra.mxu0 %v1069
    %v1080 = vpop.f32.mrf.mxu0
    %v1081 = vadd.f32 0.0, %v1080
    %v1082 = vpop.f32.mrf.mxu0
    %1083 = vdwg.mxu0
    %v1085 = vrot.slane %v1081, 2
    %v1087 = vadd.f32 %v104, %v1085
    %v1088 = vxor.u32 %v1087, 2147483648
    %v1089 = vmul.f32 %v1088, 1.442695
    %v1090 = vpow.pop %v1089
    %v1091 = vadd.f32 %v1090, 1.0
    %v1092 = vrcp.pop %v1091
    %v1093 = vmul.f32 %v1091, %v1092
    %v1094 = vsub.f32 1.0, %v1093
    %v1095 = vmul.f32 %v1092, %v1094
    %v1096 = vadd.f32 %v1092, %v1095
    %vm1097 = vweird.f32 %v1091
    %vm1098 = vweird.f32 %v1092
    %vm1099 = vmor %vm1097, %vm1098
    %v1100 = vsel %vm1099, %v1092, %v1096
    %v1101 = vand.u32 2147483647, %v1091
    %vm1102 = vcmp.eq.f32.partialorder %v1101, 8.507059e+37
    %v1103 = vand.u32 %v1091, 2147483648
    %v1104 = vor.u32 1.1754944e-38, %v1103
    %v1105 = vsel %vm1102, %v1104, %v1100
    %v1106 = vmul.f32 1.0, %v1105
    %v1107 = vtanh.pop %v1087
    %v1109 = vrot.slane %v1056, 6
    %v1111 = vmul.f32 %v1106, %v1109
    %1113 = vrot.lane.b32.xlu0 %v1107, 64
    %v1114 = vpop.permute.xlu0 %1113
    %v1116 = vmul.f32 %v1106, %v1114
    %1118 = vrot.lane.b32.xlu0 %v1116, 32
    %v1119 = vpop.permute.xlu0 %1118
    %v1121 = vadd.f32 %v1111, %v1119
    %v1122 = vtanh.pop %v1121
    %1124 = vrot.lane.b32.xlu0 %v1122, 64
    %v1125 = vpop.permute.xlu0 %1124
    %v1127 = vmul.f32 %v1106, %v1125
    %vm1128 = vcmask 1041408
    %v1129 = vsel %vm1128, %v165, %v229
    %vm1130 = vcmask 1043456
    %v1131 = vsel %vm1130, %v1129, %v294
    %vm1132 = vcmask 1045504
    %v1133 = vsel %vm1132, %v1131, %v359
    %v1134 = vsel %vm1128, %v421, %v485
    %v1135 = vsel %vm1130, %v1134, %v550
    %v1136 = vsel %vm1132, %v1135, %v615
    %v1137 = vsel %vm1128, %v677, %v741
    %v1138 = vsel %vm1130, %v1137, %v806
    %v1139 = vsel %vm1132, %v1138, %v871
    %v1140 = vsel %vm1128, %v933, %v997
    %v1141 = vsel %vm1130, %v1140, %v1062
    %v1142 = vsel %vm1132, %v1141, %v1127
    %v1143 = vld [vmem:[#allocation2] sm:$0xff]
    %v1144 = vld [vmem:[#allocation2 + $0x8] sm:$0xff]
    %v1145 = vld [vmem:[#allocation2 + $0x10] sm:$0xff]
    %v1146 = vld [vmem:[#allocation2 + $0x18] sm:$0xff]
    %v1147 = vld [vmem:[%s5] sm:$0x1]
    %v1149 = vperm.slane %v1147, 0
    %1155 = vrot.lane.b32.xlu0 %v1133, 32
    %v1156 = vpop.permute.xlu0 %1155
    %1157 = vrot.lane.b32.xlu0 %v1136, 32
    %v1158 = vpop.permute.xlu0 %1157
    %1159 = vrot.lane.b32.xlu0 %v1139, 32
    %v1160 = vpop.permute.xlu0 %1159
    %1161 = vrot.lane.b32.xlu0 %v1142, 32
    %v1162 = vpop.permute.xlu0 %1161
    %v1163 = vsel %vm64, %v1156, 0
    %v1165 = vsel %vm64, %v1158, 0
    %v1167 = vsel %vm64, %v1160, 0
    %v1169 = vsel %vm64, %v1162, 0
    %1171 = vmatpush.msra.mxu0 0.0
    %1172 = vmatpush.msra.mxu0 0.0
    %1173 = vmatpush.msra.mxu0 0.0
    %1174 = vmatpush.msra.mxu0 0.0
    %1175 = vmatpush.msra.mxu0 0.0
    %1176 = vmatpush.msra.mxu0 0.0
    %1177 = vmatpush.msra.mxu0 0.0
    %1178 = vmatpush.msra.mxu0 0.0
    %1179 = vmatpush.msra.mxu0 0.0
    %1180 = vmatpush.msra.mxu0 0.0
    %1181 = vmatpush.msra.mxu0 0.0
    %1182 = vmatpush.msra.mxu0 0.0
    %1183 = vmatpush.msra.mxu0 %v1146
    %1184 = vmatpush.msra.mxu0 %v1145
    %1185 = vmatpush.msra.mxu0 %v1144
    %1186 = vmatpush.msra.mxu0 %v1143
    %1187 = vmatmul.f32.gmra.mxu0 %v1163
    %v1188 = vpop.f32.mrf.mxu0
    %v1189 = vadd.f32 %v1149, %v1188
    %1190 = vmatmul.f32.gmra.mxu0 %v1165
    %v1191 = vpop.f32.mrf.mxu0
    %v1192 = vadd.f32 %v1149, %v1191
    %1193 = vmatmul.f32.gmra.mxu0 %v1167
    %v1194 = vpop.f32.mrf.mxu0
    %v1195 = vadd.f32 %v1149, %v1194
    %1196 = vmatmul.f32.gmra.mxu0 %v1169
    %v1197 = vpop.f32.mrf.mxu0
    %v1198 = vadd.f32 %v1149, %v1197
    %1199 = vdwg.mxu0
    %v1200 = vxor.u32 %v1189, 2147483648
    %v1201 = vxor.u32 %v1192, 2147483648
    %v1202 = vxor.u32 %v1195, 2147483648
    %v1203 = vxor.u32 %v1198, 2147483648
    %v1204 = vmul.f32 %v1200, 1.442695
    %v1205 = vpow.pop %v1204
    %v1206 = vmul.f32 %v1201, 1.442695
    %v1207 = vpow.pop %v1206
    %v1208 = vmul.f32 %v1202, 1.442695
    %v1209 = vpow.pop %v1208
    %v1210 = vmul.f32 %v1203, 1.442695
    %v1211 = vpow.pop %v1210
    %v1212 = vadd.f32 %v1205, 1.0
    %v1213 = vadd.f32 %v1207, 1.0
    %v1214 = vadd.f32 %v1209, 1.0
    %v1215 = vadd.f32 %v1211, 1.0
    %v1216 = vrcp.pop %v1212
    %v1217 = vmul.f32 %v1212, %v1216
    %v1218 = vsub.f32 1.0, %v1217
    %v1219 = vmul.f32 %v1216, %v1218
    %v1220 = vadd.f32 %v1216, %v1219
    %vm1221 = vweird.f32 %v1212
    %vm1222 = vweird.f32 %v1216
    %vm1223 = vmor %vm1221, %vm1222
    %v1224 = vsel %vm1223, %v1216, %v1220
    %v1225 = vand.u32 2147483647, %v1212
    %vm1226 = vcmp.eq.f32.partialorder %v1225, 8.507059e+37
    %v1227 = vand.u32 %v1212, 2147483648
    %v1228 = vor.u32 1.1754944e-38, %v1227
    %v1229 = vsel %vm1226, %v1228, %v1224
    %v1230 = vmul.f32 1.0, %v1229
    %v1231 = vrcp.pop %v1213
    %v1232 = vmul.f32 %v1213, %v1231
    %v1233 = vsub.f32 1.0, %v1232
    %v1234 = vmul.f32 %v1231, %v1233
    %v1235 = vadd.f32 %v1231, %v1234
    %vm1236 = vweird.f32 %v1213
    %vm1237 = vweird.f32 %v1231
    %vm1238 = vmor %vm1236, %vm1237
    %v1239 = vsel %vm1238, %v1231, %v1235
    %v1240 = vand.u32 2147483647, %v1213
    %vm1241 = vcmp.eq.f32.partialorder %v1240, 8.507059e+37
    %v1242 = vand.u32 %v1213, 2147483648
    %v1243 = vor.u32 1.1754944e-38, %v1242
    %v1244 = vsel %vm1241, %v1243, %v1239
    %v1245 = vmul.f32 1.0, %v1244
    %v1246 = vrcp.pop %v1214
    %v1247 = vmul.f32 %v1214, %v1246
    %v1248 = vsub.f32 1.0, %v1247
    %v1249 = vmul.f32 %v1246, %v1248
    %v1250 = vadd.f32 %v1246, %v1249
    %vm1251 = vweird.f32 %v1214
    %vm1252 = vweird.f32 %v1246
    %vm1253 = vmor %vm1251, %vm1252
    %v1254 = vsel %vm1253, %v1246, %v1250
    %v1255 = vand.u32 2147483647, %v1214
    %vm1256 = vcmp.eq.f32.partialorder %v1255, 8.507059e+37
    %v1257 = vand.u32 %v1214, 2147483648
    %v1258 = vor.u32 1.1754944e-38, %v1257
    %v1259 = vsel %vm1256, %v1258, %v1254
    %v1260 = vmul.f32 1.0, %v1259
    %v1261 = vrcp.pop %v1215
    %v1262 = vmul.f32 %v1215, %v1261
    %v1263 = vsub.f32 1.0, %v1262
    %v1264 = vmul.f32 %v1261, %v1263
    %v1265 = vadd.f32 %v1261, %v1264
    %vm1266 = vweird.f32 %v1215
    %vm1267 = vweird.f32 %v1261
    %vm1268 = vmor %vm1266, %vm1267
    %v1269 = vsel %vm1268, %v1261, %v1265
    %v1270 = vand.u32 2147483647, %v1215
    %vm1271 = vcmp.eq.f32.partialorder %v1270, 8.507059e+37
    %v1272 = vand.u32 %v1215, 2147483648
    %v1273 = vor.u32 1.1754944e-38, %v1272
    %v1274 = vsel %vm1271, %v1273, %v1269
    %v1275 = vmul.f32 1.0, %v1274
    %v1280 = vmul.f32 %v1230, %v1156
    %v1281 = vmul.f32 %v1245, %v1158
    %v1282 = vmul.f32 %v1260, %v1160
    %v1283 = vmul.f32 %v1275, %v1162
    %v1284 = vadd.f32 %v52, %v1280
    %v1285 = vadd.f32 %v53, %v1281
    %v1286 = vadd.f32 %v54, %v1282
    %v1287 = vadd.f32 %v55, %v1283
    %v1288 = vsel %vm64, %v1284, 0.0
    %1289 = vadd.xlane.f32.xlu0 %v1288
    %v1290 = vpop.xlane.xlu0 %1289
    %v1291 = vsel %vm64, %v1285, 0.0
    %1292 = vadd.xlane.f32.xlu0 %v1291
    %v1293 = vpop.xlane.xlu0 %1292
    %v1294 = vsel %vm64, %v1286, 0.0
    %1295 = vadd.xlane.f32.xlu0 %v1294
    %v1296 = vpop.xlane.xlu0 %1295
    %v1297 = vsel %vm64, %v1287, 0.0
    %1298 = vadd.xlane.f32.xlu0 %v1297
    %v1299 = vpop.xlane.xlu0 %1298
    %v1300 = vrcp.pop 32.0
    %v1301 = vmul.f32 32.0, %v1300
    %v1302 = vsub.f32 1.0, %v1301
    %v1303 = vmul.f32 %v1300, %v1302
    %v1304 = vadd.f32 %v1300, %v1303
    %vm1305 = vweird.f32 %v1300
    %v1306 = vsel %vm1305, %v1300, %v1304
    %v1307 = vmul.f32 %v1290, %v1306
    %v1308 = vmul.f32 %v1293, %v1306
    %v1309 = vmul.f32 %v1296, %v1306
    %v1310 = vmul.f32 %v1299, %v1306
    %v1311 = vsub.f32 %v1284, %v1307
    %v1312 = vsub.f32 %v1285, %v1308
    %v1313 = vsub.f32 %v1286, %v1309
    %v1314 = vsub.f32 %v1287, %v1310
    %v1315 = vmul.f32 %v1311, %v1311
    %v1316 = vmul.f32 %v1312, %v1312
    %v1317 = vmul.f32 %v1313, %v1313
    %v1318 = vmul.f32 %v1314, %v1314
    %v1319 = vsel %vm64, %v1315, 0.0
    %1320 = vadd.xlane.f32.xlu0 %v1319
    %v1321 = vpop.xlane.xlu0 %1320
    %v1322 = vsel %vm64, %v1316, 0.0
    %1323 = vadd.xlane.f32.xlu0 %v1322
    %v1324 = vpop.xlane.xlu0 %1323
    %v1325 = vsel %vm64, %v1317, 0.0
    %1326 = vadd.xlane.f32.xlu0 %v1325
    %v1327 = vpop.xlane.xlu0 %1326
    %v1328 = vsel %vm64, %v1318, 0.0
    %1329 = vadd.xlane.f32.xlu0 %v1328
    %v1330 = vpop.xlane.xlu0 %1329
    %v1331 = vmul.f32 %v1321, %v1306
    %v1332 = vmul.f32 %v1324, %v1306
    %v1333 = vmul.f32 %v1327, %v1306
    %v1334 = vmul.f32 %v1330, %v1306
    %v1335 = vadd.f32 %v1331, 1e-05
    %v1336 = vadd.f32 %v1332, 1e-05
    %v1337 = vadd.f32 %v1333, 1e-05
    %v1338 = vadd.f32 %v1334, 1e-05
    %v1339 = vrsqrt.pop %v1335
    %v1340 = vmul.f32 %v1339, %v1335
    %v1341 = vmul.f32 %v1340, %v1339
    %v1342 = vmul.f32 0.5, %v1341
    %v1343 = vsub.f32 1.5, %v1342
    %v1344 = vmul.f32 %v1339, %v1343
    %vm1345 = vweird.f32 %v1335
    %vm1346 = vweird.f32 %v1339
    %vm1347 = vmor %vm1345, %vm1346
    %v1348 = vsel %vm1347, %v1339, %v1344
    %v1349 = vrsqrt.pop %v1336
    %v1350 = vmul.f32 %v1349, %v1336
    %v1351 = vmul.f32 %v1350, %v1349
    %v1352 = vmul.f32 0.5, %v1351
    %v1353 = vsub.f32 1.5, %v1352
    %v1354 = vmul.f32 %v1349, %v1353
    %vm1355 = vweird.f32 %v1336
    %vm1356 = vweird.f32 %v1349
    %vm1357 = vmor %vm1355, %vm1356
    %v1358 = vsel %vm1357, %v1349, %v1354
    %v1359 = vrsqrt.pop %v1337
    %v1360 = vmul.f32 %v1359, %v1337
    %v1361 = vmul.f32 %v1360, %v1359
    %v1362 = vmul.f32 0.5, %v1361
    %v1363 = vsub.f32 1.5, %v1362
    %v1364 = vmul.f32 %v1359, %v1363
    %vm1365 = vweird.f32 %v1337
    %vm1366 = vweird.f32 %v1359
    %vm1367 = vmor %vm1365, %vm1366
    %v1368 = vsel %vm1367, %v1359, %v1364
    %v1369 = vrsqrt.pop %v1338
    %v1370 = vmul.f32 %v1369, %v1338
    %v1371 = vmul.f32 %v1370, %v1369
    %v1372 = vmul.f32 0.5, %v1371
    %v1373 = vsub.f32 1.5, %v1372
    %v1374 = vmul.f32 %v1369, %v1373
    %vm1375 = vweird.f32 %v1338
    %vm1376 = vweird.f32 %v1369
    %vm1377 = vmor %vm1375, %vm1376
    %v1378 = vsel %vm1377, %v1369, %v1374
    %v1379 = vmul.f32 %v1311, %v1348
    %v1380 = vmul.f32 %v1312, %v1358
    %v1381 = vmul.f32 %v1313, %v1368
    %v1382 = vmul.f32 %v1314, %v1378
    %v1383 = vld [vmem:[%s6] sm:$0x1]
    %v1385 = vperm.slane %v1383, 0
    %v1387 = vmul.f32 %v1379, %v1385
    %v1388 = vmul.f32 %v1380, %v1385
    %v1389 = vmul.f32 %v1381, %v1385
    %v1390 = vmul.f32 %v1382, %v1385
    %v1391 = vld [vmem:[%s7] sm:$0x1]
    %v1393 = vperm.slane %v1391, 0
    %v1395 = vadd.f32 %v1387, %v1393
    %v1396 = vadd.f32 %v1388, %v1393
    %v1397 = vadd.f32 %v1389, %v1393
    %v1398 = vadd.f32 %v1390, %v1393
    %s1399 = scalar_lea.vmem %s1, 32
    %v1400 = vld [vmem:[%s1399] sm:$0xff]
    %v1401 = vld [vmem:[%s1399 + $0x8] sm:$0xff]
    %v1402 = vld [vmem:[%s1399 + $0x10] sm:$0xff]
    %v1403 = vld [vmem:[%s1399 + $0x18] sm:$0xff]
    %s1404 = scalar_lea.vmem %s3, 1
    %v1405 = vld [vmem:[%s1404] sm:$0x1]
    %v1407 = vperm.slane %v1405, 0
    %v1410 = vsel %vm64, %v1395, 0
    %v1413 = vsel %vm64, %v1396, 0
    %v1416 = vsel %vm64, %v1397, 0
    %v1419 = vsel %vm64, %v1398, 0
    %1421 = vmatpush.msra.mxu0 0.0
    %1422 = vmatpush.msra.mxu0 0.0
    %1423 = vmatpush.msra.mxu0 0.0
    %1424 = vmatpush.msra.mxu0 0.0
    %1425 = vmatpush.msra.mxu0 0.0
    %1426 = vmatpush.msra.mxu0 0.0
    %1427 = vmatpush.msra.mxu0 0.0
    %1428 = vmatpush.msra.mxu0 0.0
    %1429 = vmatpush.msra.mxu0 0.0
    %1430 = vmatpush.msra.mxu0 0.0
    %1431 = vmatpush.msra.mxu0 0.0
    %1432 = vmatpush.msra.mxu0 0.0
    %1433 = vmatpush.msra.mxu0 %v1403
    %1434 = vmatpush.msra.mxu0 %v1402
    %1435 = vmatpush.msra.mxu0 %v1401
    %1436 = vmatpush.msra.mxu0 %v1400
    %1437 = vmatmul.f32.gmra.mxu0 %v1410
    %v1438 = vpop.f32.mrf.mxu0
    %v1439 = vadd.f32 %v1407, %v1438
    %1440 = vmatmul.f32.gmra.mxu0 %v1413
    %v1441 = vpop.f32.mrf.mxu0
    %v1442 = vadd.f32 %v1407, %v1441
    %1443 = vmatmul.f32.gmra.mxu0 %v1416
    %v1444 = vpop.f32.mrf.mxu0
    %v1445 = vadd.f32 %v1407, %v1444
    %1446 = vmatmul.f32.gmra.mxu0 %v1419
    %v1447 = vpop.f32.mrf.mxu0
    %v1448 = vadd.f32 %v1407, %v1447
    %1449 = vdwg.mxu0
    %s1450 = scalar_lea.vmem %s2, 32
    %v1451 = vld [vmem:[%s1450] sm:$0xff]
    %v1452 = vld [vmem:[%s1450 + $0x8] sm:$0xff]
    %v1453 = vld [vmem:[%s1450 + $0x10] sm:$0xff]
    %v1454 = vld [vmem:[%s1450 + $0x18] sm:$0xff]
    %v1455 = vpack.c.bf16 %v1452, %v1451
    %v1456 = vpack.c.bf16 %v1454, %v1453
    %1457 = vmatpush.bf16.msra.mxu0 0
    %1458 = vmatpush.bf16.msra.mxu0 0
    %1459 = vmatpush.bf16.msra.mxu0 0
    %1460 = vmatpush.bf16.msra.mxu0 0
    %1461 = vmatpush.bf16.msra.mxu0 0
    %1462 = vmatpush.bf16.msra.mxu0 0
    %1463 = vmatpush.bf16.msra.mxu0 %v1456
    %1464 = vmatpush.bf16.msra.mxu0 %v1455
    %1465 = vmatmul.bf16.gmra.mxu0 %v113
    %v1466 = vpop.f32.mrf.mxu0
    %v1467 = vadd.f32 0.0, %v1466
    %v1468 = vpop.f32.mrf.mxu0
    %1469 = vdwg.mxu0
    %v1470 = vadd.f32 %v1439, %v1467
    %v1471 = vxor.u32 %v1470, 2147483648
    %v1472 = vmul.f32 %v1471, 1.442695
    %v1473 = vpow.pop %v1472
    %v1474 = vadd.f32 %v1473, 1.0
    %v1475 = vrcp.pop %v1474
    %v1476 = vmul.f32 %v1474, %v1475
    %v1477 = vsub.f32 1.0, %v1476
    %v1478 = vmul.f32 %v1475, %v1477
    %v1479 = vadd.f32 %v1475, %v1478
    %vm1480 = vweird.f32 %v1474
    %vm1481 = vweird.f32 %v1475
    %vm1482 = vmor %vm1480, %vm1481
    %v1483 = vsel %vm1482, %v1475, %v1479
    %v1484 = vand.u32 2147483647, %v1474
    %vm1485 = vcmp.eq.f32.partialorder %v1484, 8.507059e+37
    %v1486 = vand.u32 %v1474, 2147483648
    %v1487 = vor.u32 1.1754944e-38, %v1486
    %v1488 = vsel %vm1485, %v1487, %v1483
    %v1489 = vmul.f32 1.0, %v1488
    %v1490 = vtanh.pop %v1470
    %v1491 = vmul.f32 %v1489, 0.0
    %1493 = vrot.lane.b32.xlu0 %v1490, 64
    %v1494 = vpop.permute.xlu0 %1493
    %v1496 = vmul.f32 %v1489, %v1494
    %1498 = vrot.lane.b32.xlu0 %v1496, 32
    %v1499 = vpop.permute.xlu0 %1498
    %v1501 = vadd.f32 %v1491, %v1499
    %v1502 = vtanh.pop %v1501
    %1504 = vrot.lane.b32.xlu0 %v1502, 64
    %v1505 = vpop.permute.xlu0 %1504
    %v1507 = vmul.f32 %v1489, %v1505
    %v1508 = vpack.c.bf16 %v1507, %v1507
    %1510 = vrot.lane.b32.xlu0 %v1508, 32
    %v1511 = vpop.permute.xlu0 %1510
    %v1513 = vsel %vm64, %v1511, 0
    %1515 = vmatpush.bf16.msra.mxu0 0
    %1516 = vmatpush.bf16.msra.mxu0 0
    %1517 = vmatpush.bf16.msra.mxu0 0
    %1518 = vmatpush.bf16.msra.mxu0 0
    %1519 = vmatpush.bf16.msra.mxu0 0
    %1520 = vmatpush.bf16.msra.mxu0 0
    %1521 = vmatpush.bf16.msra.mxu0 %v1456
    %1522 = vmatpush.bf16.msra.mxu0 %v1455
    %1523 = vmatmul.bf16.gmra.mxu0 %v1513
    %v1524 = vpop.f32.mrf.mxu0
    %v1525 = vadd.f32 0.0, %v1524
    %v1526 = vpop.f32.mrf.mxu0
    %1527 = vdwg.mxu0
    %v1529 = vrot.slane %v1525, 6
    %v1531 = vadd.f32 %v1439, %v1529
    %v1532 = vxor.u32 %v1531, 2147483648
    %v1533 = vmul.f32 %v1532, 1.442695
    %v1534 = vpow.pop %v1533
    %v1535 = vadd.f32 %v1534, 1.0
    %v1536 = vrcp.pop %v1535
    %v1537 = vmul.f32 %v1535, %v1536
    %v1538 = vsub.f32 1.0, %v1537
    %v1539 = vmul.f32 %v1536, %v1538
    %v1540 = vadd.f32 %v1536, %v1539
    %vm1541 = vweird.f32 %v1535
    %vm1542 = vweird.f32 %v1536
    %vm1543 = vmor %vm1541, %vm1542
    %v1544 = vsel %vm1543, %v1536, %v1540
    %v1545 = vand.u32 2147483647, %v1535
    %vm1546 = vcmp.eq.f32.partialorder %v1545, 8.507059e+37
    %v1547 = vand.u32 %v1535, 2147483648
    %v1548 = vor.u32 1.1754944e-38, %v1547
    %v1549 = vsel %vm1546, %v1548, %v1544
    %v1550 = vmul.f32 1.0, %v1549
    %v1551 = vtanh.pop %v1531
    %v1553 = vrot.slane %v1501, 6
    %v1555 = vmul.f32 %v1550, %v1553
    %1557 = vrot.lane.b32.xlu0 %v1551, 64
    %v1558 = vpop.permute.xlu0 %1557
    %v1560 = vmul.f32 %v1550, %v1558
    %1562 = vrot.lane.b32.xlu0 %v1560, 32
    %v1563 = vpop.permute.xlu0 %1562
    %v1565 = vadd.f32 %v1555, %v1563
    %v1566 = vtanh.pop %v1565
    %1568 = vrot.lane.b32.xlu0 %v1566, 64
    %v1569 = vpop.permute.xlu0 %1568
    %v1571 = vmul.f32 %v1550, %v1569
    %v1572 = vpack.c.bf16 %v1571, %v1571
    %v1574 = vrot.slane %v1572, 1
    %1575 = vrot.lane.b32.xlu0 %v1574, 32
    %v1576 = vpop.permute.xlu0 %1575
    %v1578 = vsel %vm64, %v1576, 0
    %1580 = vmatpush.bf16.msra.mxu0 0
    %1581 = vmatpush.bf16.msra.mxu0 0
    %1582 = vmatpush.bf16.msra.mxu0 0
    %1583 = vmatpush.bf16.msra.mxu0 0
    %1584 = vmatpush.bf16.msra.mxu0 0
    %1585 = vmatpush.bf16.msra.mxu0 0
    %1586 = vmatpush.bf16.msra.mxu0 %v1456
    %1587 = vmatpush.bf16.msra.mxu0 %v1455
    %1588 = vmatmul.bf16.gmra.mxu0 %v1578
    %v1589 = vpop.f32.mrf.mxu0
    %v1590 = vadd.f32 0.0, %v1589
    %v1591 = vpop.f32.mrf.mxu0
    %1592 = vdwg.mxu0
    %v1594 = vrot.slane %v1590, 4
    %v1596 = vadd.f32 %v1439, %v1594
    %v1597 = vxor.u32 %v1596, 2147483648
    %v1598 = vmul.f32 %v1597, 1.442695
    %v1599 = vpow.pop %v1598
    %v1600 = vadd.f32 %v1599, 1.0
    %v1601 = vrcp.pop %v1600
    %v1602 = vmul.f32 %v1600, %v1601
    %v1603 = vsub.f32 1.0, %v1602
    %v1604 = vmul.f32 %v1601, %v1603
    %v1605 = vadd.f32 %v1601, %v1604
    %vm1606 = vweird.f32 %v1600
    %vm1607 = vweird.f32 %v1601
    %vm1608 = vmor %vm1606, %vm1607
    %v1609 = vsel %vm1608, %v1601, %v1605
    %v1610 = vand.u32 2147483647, %v1600
    %vm1611 = vcmp.eq.f32.partialorder %v1610, 8.507059e+37
    %v1612 = vand.u32 %v1600, 2147483648
    %v1613 = vor.u32 1.1754944e-38, %v1612
    %v1614 = vsel %vm1611, %v1613, %v1609
    %v1615 = vmul.f32 1.0, %v1614
    %v1616 = vtanh.pop %v1596
    %v1618 = vrot.slane %v1565, 6
    %v1620 = vmul.f32 %v1615, %v1618
    %1622 = vrot.lane.b32.xlu0 %v1616, 64
    %v1623 = vpop.permute.xlu0 %1622
    %v1625 = vmul.f32 %v1615, %v1623
    %1627 = vrot.lane.b32.xlu0 %v1625, 32
    %v1628 = vpop.permute.xlu0 %1627
    %v1630 = vadd.f32 %v1620, %v1628
    %v1631 = vtanh.pop %v1630
    %1633 = vrot.lane.b32.xlu0 %v1631, 64
    %v1634 = vpop.permute.xlu0 %1633
    %v1636 = vmul.f32 %v1615, %v1634
    %v1637 = vpack.c.bf16 %v1636, %v1636
    %v1639 = vrot.slane %v1637, 2
    %1640 = vrot.lane.b32.xlu0 %v1639, 32
    %v1641 = vpop.permute.xlu0 %1640
    %v1643 = vsel %vm64, %v1641, 0
    %1645 = vmatpush.bf16.msra.mxu0 0
    %1646 = vmatpush.bf16.msra.mxu0 0
    %1647 = vmatpush.bf16.msra.mxu0 0
    %1648 = vmatpush.bf16.msra.mxu0 0
    %1649 = vmatpush.bf16.msra.mxu0 0
    %1650 = vmatpush.bf16.msra.mxu0 0
    %1651 = vmatpush.bf16.msra.mxu0 %v1456
    %1652 = vmatpush.bf16.msra.mxu0 %v1455
    %1653 = vmatmul.bf16.gmra.mxu0 %v1643
    %v1654 = vpop.f32.mrf.mxu0
    %v1655 = vadd.f32 0.0, %v1654
    %v1656 = vpop.f32.mrf.mxu0
    %1657 = vdwg.mxu0
    %v1659 = vrot.slane %v1655, 2
    %v1661 = vadd.f32 %v1439, %v1659
    %v1662 = vxor.u32 %v1661, 2147483648
    %v1663 = vmul.f32 %v1662, 1.442695
    %v1664 = vpow.pop %v1663
    %v1665 = vadd.f32 %v1664, 1.0
    %v1666 = vrcp.pop %v1665
    %v1667 = vmul.f32 %v1665, %v1666
    %v1668 = vsub.f32 1.0, %v1667
    %v1669 = vmul.f32 %v1666, %v1668
    %v1670 = vadd.f32 %v1666, %v1669
    %vm1671 = vweird.f32 %v1665
    %vm1672 = vweird.f32 %v1666
    %vm1673 = vmor %vm1671, %vm1672
    %v1674 = vsel %vm1673, %v1666, %v1670
    %v1675 = vand.u32 2147483647, %v1665
    %vm1676 = vcmp.eq.f32.partialorder %v1675, 8.507059e+37
    %v1677 = vand.u32 %v1665, 2147483648
    %v1678 = vor.u32 1.1754944e-38, %v1677
    %v1679 = vsel %vm1676, %v1678, %v1674
    %v1680 = vmul.f32 1.0, %v1679
    %v1681 = vtanh.pop %v1661
    %v1683 = vrot.slane %v1630, 6
    %v1685 = vmul.f32 %v1680, %v1683
    %1687 = vrot.lane.b32.xlu0 %v1681, 64
    %v1688 = vpop.permute.xlu0 %1687
    %v1690 = vmul.f32 %v1680, %v1688
    %1692 = vrot.lane.b32.xlu0 %v1690, 32
    %v1693 = vpop.permute.xlu0 %1692
    %v1695 = vadd.f32 %v1685, %v1693
    %v1696 = vtanh.pop %v1695
    %1698 = vrot.lane.b32.xlu0 %v1696, 64
    %v1699 = vpop.permute.xlu0 %1698
    %v1701 = vmul.f32 %v1680, %v1699
    %v1702 = vpack.c.bf16 %v1701, %v1701
    %v1704 = vrot.slane %v1702, 3
    %1705 = vrot.lane.b32.xlu0 %v1704, 32
    %v1706 = vpop.permute.xlu0 %1705
    %v1708 = vsel %vm64, %v1706, 0
    %1710 = vmatpush.bf16.msra.mxu0 0
    %1711 = vmatpush.bf16.msra.mxu0 0
    %1712 = vmatpush.bf16.msra.mxu0 0
    %1713 = vmatpush.bf16.msra.mxu0 0
    %1714 = vmatpush.bf16.msra.mxu0 0
    %1715 = vmatpush.bf16.msra.mxu0 0
    %1716 = vmatpush.bf16.msra.mxu0 %v1456
    %1717 = vmatpush.bf16.msra.mxu0 %v1455
    %1718 = vmatmul.bf16.gmra.mxu0 %v1708
    %v1719 = vpop.f32.mrf.mxu0
    %v1720 = vadd.f32 0.0, %v1719
    %v1721 = vpop.f32.mrf.mxu0
    %1722 = vdwg.mxu0
    %v1723 = vadd.f32 %v1442, %v1720
    %v1724 = vxor.u32 %v1723, 2147483648
    %v1725 = vmul.f32 %v1724, 1.442695
    %v1726 = vpow.pop %v1725
    %v1727 = vadd.f32 %v1726, 1.0
    %v1728 = vrcp.pop %v1727
    %v1729 = vmul.f32 %v1727, %v1728
    %v1730 = vsub.f32 1.0, %v1729
    %v1731 = vmul.f32 %v1728, %v1730
    %v1732 = vadd.f32 %v1728, %v1731
    %vm1733 = vweird.f32 %v1727
    %vm1734 = vweird.f32 %v1728
    %vm1735 = vmor %vm1733, %vm1734
    %v1736 = vsel %vm1735, %v1728, %v1732
    %v1737 = vand.u32 2147483647, %v1727
    %vm1738 = vcmp.eq.f32.partialorder %v1737, 8.507059e+37
    %v1739 = vand.u32 %v1727, 2147483648
    %v1740 = vor.u32 1.1754944e-38, %v1739
    %v1741 = vsel %vm1738, %v1740, %v1736
    %v1742 = vmul.f32 1.0, %v1741
    %v1743 = vtanh.pop %v1723
    %v1745 = vrot.slane %v1695, 6
    %v1747 = vmul.f32 %v1742, %v1745
    %1749 = vrot.lane.b32.xlu0 %v1743, 64
    %v1750 = vpop.permute.xlu0 %1749
    %v1752 = vmul.f32 %v1742, %v1750
    %1754 = vrot.lane.b32.xlu0 %v1752, 32
    %v1755 = vpop.permute.xlu0 %1754
    %v1757 = vadd.f32 %v1747, %v1755
    %v1758 = vtanh.pop %v1757
    %1760 = vrot.lane.b32.xlu0 %v1758, 64
    %v1761 = vpop.permute.xlu0 %1760
    %v1763 = vmul.f32 %v1742, %v1761
    %v1764 = vpack.c.bf16 %v1763, %v1763
    %1766 = vrot.lane.b32.xlu0 %v1764, 32
    %v1767 = vpop.permute.xlu0 %1766
    %v1769 = vsel %vm64, %v1767, 0
    %1771 = vmatpush.bf16.msra.mxu0 0
    %1772 = vmatpush.bf16.msra.mxu0 0
    %1773 = vmatpush.bf16.msra.mxu0 0
    %1774 = vmatpush.bf16.msra.mxu0 0
    %1775 = vmatpush.bf16.msra.mxu0 0
    %1776 = vmatpush.bf16.msra.mxu0 0
    %1777 = vmatpush.bf16.msra.mxu0 %v1456
    %1778 = vmatpush.bf16.msra.mxu0 %v1455
    %1779 = vmatmul.bf16.gmra.mxu0 %v1769
    %v1780 = vpop.f32.mrf.mxu0
    %v1781 = vadd.f32 0.0, %v1780
    %v1782 = vpop.f32.mrf.mxu0
    %1783 = vdwg.mxu0
    %v1785 = vrot.slane %v1781, 6
    %v1787 = vadd.f32 %v1442, %v1785
    %v1788 = vxor.u32 %v1787, 2147483648
    %v1789 = vmul.f32 %v1788, 1.442695
    %v1790 = vpow.pop %v1789
    %v1791 = vadd.f32 %v1790, 1.0
    %v1792 = vrcp.pop %v1791
    %v1793 = vmul.f32 %v1791, %v1792
    %v1794 = vsub.f32 1.0, %v1793
    %v1795 = vmul.f32 %v1792, %v1794
    %v1796 = vadd.f32 %v1792, %v1795
    %vm1797 = vweird.f32 %v1791
    %vm1798 = vweird.f32 %v1792
    %vm1799 = vmor %vm1797, %vm1798
    %v1800 = vsel %vm1799, %v1792, %v1796
    %v1801 = vand.u32 2147483647, %v1791
    %vm1802 = vcmp.eq.f32.partialorder %v1801, 8.507059e+37
    %v1803 = vand.u32 %v1791, 2147483648
    %v1804 = vor.u32 1.1754944e-38, %v1803
    %v1805 = vsel %vm1802, %v1804, %v1800
    %v1806 = vmul.f32 1.0, %v1805
    %v1807 = vtanh.pop %v1787
    %v1809 = vrot.slane %v1757, 6
    %v1811 = vmul.f32 %v1806, %v1809
    %1813 = vrot.lane.b32.xlu0 %v1807, 64
    %v1814 = vpop.permute.xlu0 %1813
    %v1816 = vmul.f32 %v1806, %v1814
    %1818 = vrot.lane.b32.xlu0 %v1816, 32
    %v1819 = vpop.permute.xlu0 %1818
    %v1821 = vadd.f32 %v1811, %v1819
    %v1822 = vtanh.pop %v1821
    %1824 = vrot.lane.b32.xlu0 %v1822, 64
    %v1825 = vpop.permute.xlu0 %1824
    %v1827 = vmul.f32 %v1806, %v1825
    %v1828 = vpack.c.bf16 %v1827, %v1827
    %v1830 = vrot.slane %v1828, 1
    %1831 = vrot.lane.b32.xlu0 %v1830, 32
    %v1832 = vpop.permute.xlu0 %1831
    %v1834 = vsel %vm64, %v1832, 0
    %1836 = vmatpush.bf16.msra.mxu0 0
    %1837 = vmatpush.bf16.msra.mxu0 0
    %1838 = vmatpush.bf16.msra.mxu0 0
    %1839 = vmatpush.bf16.msra.mxu0 0
    %1840 = vmatpush.bf16.msra.mxu0 0
    %1841 = vmatpush.bf16.msra.mxu0 0
    %1842 = vmatpush.bf16.msra.mxu0 %v1456
    %1843 = vmatpush.bf16.msra.mxu0 %v1455
    %1844 = vmatmul.bf16.gmra.mxu0 %v1834
    %v1845 = vpop.f32.mrf.mxu0
    %v1846 = vadd.f32 0.0, %v1845
    %v1847 = vpop.f32.mrf.mxu0
    %1848 = vdwg.mxu0
    %v1850 = vrot.slane %v1846, 4
    %v1852 = vadd.f32 %v1442, %v1850
    %v1853 = vxor.u32 %v1852, 2147483648
    %v1854 = vmul.f32 %v1853, 1.442695
    %v1855 = vpow.pop %v1854
    %v1856 = vadd.f32 %v1855, 1.0
    %v1857 = vrcp.pop %v1856
    %v1858 = vmul.f32 %v1856, %v1857
    %v1859 = vsub.f32 1.0, %v1858
    %v1860 = vmul.f32 %v1857, %v1859
    %v1861 = vadd.f32 %v1857, %v1860
    %vm1862 = vweird.f32 %v1856
    %vm1863 = vweird.f32 %v1857
    %vm1864 = vmor %vm1862, %vm1863
    %v1865 = vsel %vm1864, %v1857, %v1861
    %v1866 = vand.u32 2147483647, %v1856
    %vm1867 = vcmp.eq.f32.partialorder %v1866, 8.507059e+37
    %v1868 = vand.u32 %v1856, 2147483648
    %v1869 = vor.u32 1.1754944e-38, %v1868
    %v1870 = vsel %vm1867, %v1869, %v1865
    %v1871 = vmul.f32 1.0, %v1870
    %v1872 = vtanh.pop %v1852
    %v1874 = vrot.slane %v1821, 6
    %v1876 = vmul.f32 %v1871, %v1874
    %1878 = vrot.lane.b32.xlu0 %v1872, 64
    %v1879 = vpop.permute.xlu0 %1878
    %v1881 = vmul.f32 %v1871, %v1879
    %1883 = vrot.lane.b32.xlu0 %v1881, 32
    %v1884 = vpop.permute.xlu0 %1883
    %v1886 = vadd.f32 %v1876, %v1884
    %v1887 = vtanh.pop %v1886
    %1889 = vrot.lane.b32.xlu0 %v1887, 64
    %v1890 = vpop.permute.xlu0 %1889
    %v1892 = vmul.f32 %v1871, %v1890
    %v1893 = vpack.c.bf16 %v1892, %v1892
    %v1895 = vrot.slane %v1893, 2
    %1896 = vrot.lane.b32.xlu0 %v1895, 32
    %v1897 = vpop.permute.xlu0 %1896
    %v1899 = vsel %vm64, %v1897, 0
    %1901 = vmatpush.bf16.msra.mxu0 0
    %1902 = vmatpush.bf16.msra.mxu0 0
    %1903 = vmatpush.bf16.msra.mxu0 0
    %1904 = vmatpush.bf16.msra.mxu0 0
    %1905 = vmatpush.bf16.msra.mxu0 0
    %1906 = vmatpush.bf16.msra.mxu0 0
    %1907 = vmatpush.bf16.msra.mxu0 %v1456
    %1908 = vmatpush.bf16.msra.mxu0 %v1455
    %1909 = vmatmul.bf16.gmra.mxu0 %v1899
    %v1910 = vpop.f32.mrf.mxu0
    %v1911 = vadd.f32 0.0, %v1910
    %v1912 = vpop.f32.mrf.mxu0
    %1913 = vdwg.mxu0
    %v1915 = vrot.slane %v1911, 2
    %v1917 = vadd.f32 %v1442, %v1915
    %v1918 = vxor.u32 %v1917, 2147483648
    %v1919 = vmul.f32 %v1918, 1.442695
    %v1920 = vpow.pop %v1919
    %v1921 = vadd.f32 %v1920, 1.0
    %v1922 = vrcp.pop %v1921
    %v1923 = vmul.f32 %v1921, %v1922
    %v1924 = vsub.f32 1.0, %v1923
    %v1925 = vmul.f32 %v1922, %v1924
    %v1926 = vadd.f32 %v1922, %v1925
    %vm1927 = vweird.f32 %v1921
    %vm1928 = vweird.f32 %v1922
    %vm1929 = vmor %vm1927, %vm1928
    %v1930 = vsel %vm1929, %v1922, %v1926
    %v1931 = vand.u32 2147483647, %v1921
    %vm1932 = vcmp.eq.f32.partialorder %v1931, 8.507059e+37
    %v1933 = vand.u32 %v1921, 2147483648
    %v1934 = vor.u32 1.1754944e-38, %v1933
    %v1935 = vsel %vm1932, %v1934, %v1930
    %v1936 = vmul.f32 1.0, %v1935
    %v1937 = vtanh.pop %v1917
    %v1939 = vrot.slane %v1886, 6
    %v1941 = vmul.f32 %v1936, %v1939
    %1943 = vrot.lane.b32.xlu0 %v1937, 64
    %v1944 = vpop.permute.xlu0 %1943
    %v1946 = vmul.f32 %v1936, %v1944
    %1948 = vrot.lane.b32.xlu0 %v1946, 32
    %v1949 = vpop.permute.xlu0 %1948
    %v1951 = vadd.f32 %v1941, %v1949
    %v1952 = vtanh.pop %v1951
    %1954 = vrot.lane.b32.xlu0 %v1952, 64
    %v1955 = vpop.permute.xlu0 %1954
    %v1957 = vmul.f32 %v1936, %v1955
    %v1958 = vpack.c.bf16 %v1957, %v1957
    %v1960 = vrot.slane %v1958, 3
    %1961 = vrot.lane.b32.xlu0 %v1960, 32
    %v1962 = vpop.permute.xlu0 %1961
    %v1964 = vsel %vm64, %v1962, 0
    %1966 = vmatpush.bf16.msra.mxu0 0
    %1967 = vmatpush.bf16.msra.mxu0 0
    %1968 = vmatpush.bf16.msra.mxu0 0
    %1969 = vmatpush.bf16.msra.mxu0 0
    %1970 = vmatpush.bf16.msra.mxu0 0
    %1971 = vmatpush.bf16.msra.mxu0 0
    %1972 = vmatpush.bf16.msra.mxu0 %v1456
    %1973 = vmatpush.bf16.msra.mxu0 %v1455
    %1974 = vmatmul.bf16.gmra.mxu0 %v1964
    %v1975 = vpop.f32.mrf.mxu0
    %v1976 = vadd.f32 0.0, %v1975
    %v1977 = vpop.f32.mrf.mxu0
    %1978 = vdwg.mxu0
    %v1979 = vadd.f32 %v1445, %v1976
    %v1980 = vxor.u32 %v1979, 2147483648
    %v1981 = vmul.f32 %v1980, 1.442695
    %v1982 = vpow.pop %v1981
    %v1983 = vadd.f32 %v1982, 1.0
    %v1984 = vrcp.pop %v1983
    %v1985 = vmul.f32 %v1983, %v1984
    %v1986 = vsub.f32 1.0, %v1985
    %v1987 = vmul.f32 %v1984, %v1986
    %v1988 = vadd.f32 %v1984, %v1987
    %vm1989 = vweird.f32 %v1983
    %vm1990 = vweird.f32 %v1984
    %vm1991 = vmor %vm1989, %vm1990
    %v1992 = vsel %vm1991, %v1984, %v1988
    %v1993 = vand.u32 2147483647, %v1983
    %vm1994 = vcmp.eq.f32.partialorder %v1993, 8.507059e+37
    %v1995 = vand.u32 %v1983, 2147483648
    %v1996 = vor.u32 1.1754944e-38, %v1995
    %v1997 = vsel %vm1994, %v1996, %v1992
    %v1998 = vmul.f32 1.0, %v1997
    %v1999 = vtanh.pop %v1979
    %v2001 = vrot.slane %v1951, 6
    %v2003 = vmul.f32 %v1998, %v2001
    %2005 = vrot.lane.b32.xlu0 %v1999, 64
    %v2006 = vpop.permute.xlu0 %2005
    %v2008 = vmul.f32 %v1998, %v2006
    %2010 = vrot.lane.b32.xlu0 %v2008, 32
    %v2011 = vpop.permute.xlu0 %2010
    %v2013 = vadd.f32 %v2003, %v2011
    %v2014 = vtanh.pop %v2013
    %2016 = vrot.lane.b32.xlu0 %v2014, 64
    %v2017 = vpop.permute.xlu0 %2016
    %v2019 = vmul.f32 %v1998, %v2017
    %v2020 = vpack.c.bf16 %v2019, %v2019
    %2022 = vrot.lane.b32.xlu0 %v2020, 32
    %v2023 = vpop.permute.xlu0 %2022
    %v2025 = vsel %vm64, %v2023, 0
    %2027 = vmatpush.bf16.msra.mxu0 0
    %2028 = vmatpush.bf16.msra.mxu0 0
    %2029 = vmatpush.bf16.msra.mxu0 0
    %2030 = vmatpush.bf16.msra.mxu0 0
    %2031 = vmatpush.bf16.msra.mxu0 0
    %2032 = vmatpush.bf16.msra.mxu0 0
    %2033 = vmatpush.bf16.msra.mxu0 %v1456
    %2034 = vmatpush.bf16.msra.mxu0 %v1455
    %2035 = vmatmul.bf16.gmra.mxu0 %v2025
    %v2036 = vpop.f32.mrf.mxu0
    %v2037 = vadd.f32 0.0, %v2036
    %v2038 = vpop.f32.mrf.mxu0
    %2039 = vdwg.mxu0
    %v2041 = vrot.slane %v2037, 6
    %v2043 = vadd.f32 %v1445, %v2041
    %v2044 = vxor.u32 %v2043, 2147483648
    %v2045 = vmul.f32 %v2044, 1.442695
    %v2046 = vpow.pop %v2045
    %v2047 = vadd.f32 %v2046, 1.0
    %v2048 = vrcp.pop %v2047
    %v2049 = vmul.f32 %v2047, %v2048
    %v2050 = vsub.f32 1.0, %v2049
    %v2051 = vmul.f32 %v2048, %v2050
    %v2052 = vadd.f32 %v2048, %v2051
    %vm2053 = vweird.f32 %v2047
    %vm2054 = vweird.f32 %v2048
    %vm2055 = vmor %vm2053, %vm2054
    %v2056 = vsel %vm2055, %v2048, %v2052
    %v2057 = vand.u32 2147483647, %v2047
    %vm2058 = vcmp.eq.f32.partialorder %v2057, 8.507059e+37
    %v2059 = vand.u32 %v2047, 2147483648
    %v2060 = vor.u32 1.1754944e-38, %v2059
    %v2061 = vsel %vm2058, %v2060, %v2056
    %v2062 = vmul.f32 1.0, %v2061
    %v2063 = vtanh.pop %v2043
    %v2065 = vrot.slane %v2013, 6
    %v2067 = vmul.f32 %v2062, %v2065
    %2069 = vrot.lane.b32.xlu0 %v2063, 64
    %v2070 = vpop.permute.xlu0 %2069
    %v2072 = vmul.f32 %v2062, %v2070
    %2074 = vrot.lane.b32.xlu0 %v2072, 32
    %v2075 = vpop.permute.xlu0 %2074
    %v2077 = vadd.f32 %v2067, %v2075
    %v2078 = vtanh.pop %v2077
    %2080 = vrot.lane.b32.xlu0 %v2078, 64
    %v2081 = vpop.permute.xlu0 %2080
    %v2083 = vmul.f32 %v2062, %v2081
    %v2084 = vpack.c.bf16 %v2083, %v2083
    %v2086 = vrot.slane %v2084, 1
    %2087 = vrot.lane.b32.xlu0 %v2086, 32
    %v2088 = vpop.permute.xlu0 %2087
    %v2090 = vsel %vm64, %v2088, 0
    %2092 = vmatpush.bf16.msra.mxu0 0
    %2093 = vmatpush.bf16.msra.mxu0 0
    %2094 = vmatpush.bf16.msra.mxu0 0
    %2095 = vmatpush.bf16.msra.mxu0 0
    %2096 = vmatpush.bf16.msra.mxu0 0
    %2097 = vmatpush.bf16.msra.mxu0 0
    %2098 = vmatpush.bf16.msra.mxu0 %v1456
    %2099 = vmatpush.bf16.msra.mxu0 %v1455
    %2100 = vmatmul.bf16.gmra.mxu0 %v2090
    %v2101 = vpop.f32.mrf.mxu0
    %v2102 = vadd.f32 0.0, %v2101
    %v2103 = vpop.f32.mrf.mxu0
    %2104 = vdwg.mxu0
    %v2106 = vrot.slane %v2102, 4
    %v2108 = vadd.f32 %v1445, %v2106
    %v2109 = vxor.u32 %v2108, 2147483648
    %v2110 = vmul.f32 %v2109, 1.442695
    %v2111 = vpow.pop %v2110
    %v2112 = vadd.f32 %v2111, 1.0
    %v2113 = vrcp.pop %v2112
    %v2114 = vmul.f32 %v2112, %v2113
    %v2115 = vsub.f32 1.0, %v2114
    %v2116 = vmul.f32 %v2113, %v2115
    %v2117 = vadd.f32 %v2113, %v2116
    %vm2118 = vweird.f32 %v2112
    %vm2119 = vweird.f32 %v2113
    %vm2120 = vmor %vm2118, %vm2119
    %v2121 = vsel %vm2120, %v2113, %v2117
    %v2122 = vand.u32 2147483647, %v2112
    %vm2123 = vcmp.eq.f32.partialorder %v2122, 8.507059e+37
    %v2124 = vand.u32 %v2112, 2147483648
    %v2125 = vor.u32 1.1754944e-38, %v2124
    %v2126 = vsel %vm2123, %v2125, %v2121
    %v2127 = vmul.f32 1.0, %v2126
    %v2128 = vtanh.pop %v2108
    %v2130 = vrot.slane %v2077, 6
    %v2132 = vmul.f32 %v2127, %v2130
    %2134 = vrot.lane.b32.xlu0 %v2128, 64
    %v2135 = vpop.permute.xlu0 %2134
    %v2137 = vmul.f32 %v2127, %v2135
    %2139 = vrot.lane.b32.xlu0 %v2137, 32
    %v2140 = vpop.permute.xlu0 %2139
    %v2142 = vadd.f32 %v2132, %v2140
    %v2143 = vtanh.pop %v2142
    %2145 = vrot.lane.b32.xlu0 %v2143, 64
    %v2146 = vpop.permute.xlu0 %2145
    %v2148 = vmul.f32 %v2127, %v2146
    %v2149 = vpack.c.bf16 %v2148, %v2148
    %v2151 = vrot.slane %v2149, 2
    %2152 = vrot.lane.b32.xlu0 %v2151, 32
    %v2153 = vpop.permute.xlu0 %2152
    %v2155 = vsel %vm64, %v2153, 0
    %2157 = vmatpush.bf16.msra.mxu0 0
    %2158 = vmatpush.bf16.msra.mxu0 0
    %2159 = vmatpush.bf16.msra.mxu0 0
    %2160 = vmatpush.bf16.msra.mxu0 0
    %2161 = vmatpush.bf16.msra.mxu0 0
    %2162 = vmatpush.bf16.msra.mxu0 0
    %2163 = vmatpush.bf16.msra.mxu0 %v1456
    %2164 = vmatpush.bf16.msra.mxu0 %v1455
    %2165 = vmatmul.bf16.gmra.mxu0 %v2155
    %v2166 = vpop.f32.mrf.mxu0
    %v2167 = vadd.f32 0.0, %v2166
    %v2168 = vpop.f32.mrf.mxu0
    %2169 = vdwg.mxu0
    %v2171 = vrot.slane %v2167, 2
    %v2173 = vadd.f32 %v1445, %v2171
    %v2174 = vxor.u32 %v2173, 2147483648
    %v2175 = vmul.f32 %v2174, 1.442695
    %v2176 = vpow.pop %v2175
    %v2177 = vadd.f32 %v2176, 1.0
    %v2178 = vrcp.pop %v2177
    %v2179 = vmul.f32 %v2177, %v2178
    %v2180 = vsub.f32 1.0, %v2179
    %v2181 = vmul.f32 %v2178, %v2180
    %v2182 = vadd.f32 %v2178, %v2181
    %vm2183 = vweird.f32 %v2177
    %vm2184 = vweird.f32 %v2178
    %vm2185 = vmor %vm2183, %vm2184
    %v2186 = vsel %vm2185, %v2178, %v2182
    %v2187 = vand.u32 2147483647, %v2177
    %vm2188 = vcmp.eq.f32.partialorder %v2187, 8.507059e+37
    %v2189 = vand.u32 %v2177, 2147483648
    %v2190 = vor.u32 1.1754944e-38, %v2189
    %v2191 = vsel %vm2188, %v2190, %v2186
    %v2192 = vmul.f32 1.0, %v2191
    %v2193 = vtanh.pop %v2173
    %v2195 = vrot.slane %v2142, 6
    %v2197 = vmul.f32 %v2192, %v2195
    %2199 = vrot.lane.b32.xlu0 %v2193, 64
    %v2200 = vpop.permute.xlu0 %2199
    %v2202 = vmul.f32 %v2192, %v2200
    %2204 = vrot.lane.b32.xlu0 %v2202, 32
    %v2205 = vpop.permute.xlu0 %2204
    %v2207 = vadd.f32 %v2197, %v2205
    %v2208 = vtanh.pop %v2207
    %2210 = vrot.lane.b32.xlu0 %v2208, 64
    %v2211 = vpop.permute.xlu0 %2210
    %v2213 = vmul.f32 %v2192, %v2211
    %v2214 = vpack.c.bf16 %v2213, %v2213
    %v2216 = vrot.slane %v2214, 3
    %2217 = vrot.lane.b32.xlu0 %v2216, 32
    %v2218 = vpop.permute.xlu0 %2217
    %v2220 = vsel %vm64, %v2218, 0
    %2222 = vmatpush.bf16.msra.mxu0 0
    %2223 = vmatpush.bf16.msra.mxu0 0
    %2224 = vmatpush.bf16.msra.mxu0 0
    %2225 = vmatpush.bf16.msra.mxu0 0
    %2226 = vmatpush.bf16.msra.mxu0 0
    %2227 = vmatpush.bf16.msra.mxu0 0
    %2228 = vmatpush.bf16.msra.mxu0 %v1456
    %2229 = vmatpush.bf16.msra.mxu0 %v1455
    %2230 = vmatmul.bf16.gmra.mxu0 %v2220
    %v2231 = vpop.f32.mrf.mxu0
    %v2232 = vadd.f32 0.0, %v2231
    %v2233 = vpop.f32.mrf.mxu0
    %2234 = vdwg.mxu0
    %v2235 = vadd.f32 %v1448, %v2232
    %v2236 = vxor.u32 %v2235, 2147483648
    %v2237 = vmul.f32 %v2236, 1.442695
    %v2238 = vpow.pop %v2237
    %v2239 = vadd.f32 %v2238, 1.0
    %v2240 = vrcp.pop %v2239
    %v2241 = vmul.f32 %v2239, %v2240
    %v2242 = vsub.f32 1.0, %v2241
    %v2243 = vmul.f32 %v2240, %v2242
    %v2244 = vadd.f32 %v2240, %v2243
    %vm2245 = vweird.f32 %v2239
    %vm2246 = vweird.f32 %v2240
    %vm2247 = vmor %vm2245, %vm2246
    %v2248 = vsel %vm2247, %v2240, %v2244
    %v2249 = vand.u32 2147483647, %v2239
    %vm2250 = vcmp.eq.f32.partialorder %v2249, 8.507059e+37
    %v2251 = vand.u32 %v2239, 2147483648
    %v2252 = vor.u32 1.1754944e-38, %v2251
    %v2253 = vsel %vm2250, %v2252, %v2248
    %v2254 = vmul.f32 1.0, %v2253
    %v2255 = vtanh.pop %v2235
    %v2257 = vrot.slane %v2207, 6
    %v2259 = vmul.f32 %v2254, %v2257
    %2261 = vrot.lane.b32.xlu0 %v2255, 64
    %v2262 = vpop.permute.xlu0 %2261
    %v2264 = vmul.f32 %v2254, %v2262
    %2266 = vrot.lane.b32.xlu0 %v2264, 32
    %v2267 = vpop.permute.xlu0 %2266
    %v2269 = vadd.f32 %v2259, %v2267
    %v2270 = vtanh.pop %v2269
    %2272 = vrot.lane.b32.xlu0 %v2270, 64
    %v2273 = vpop.permute.xlu0 %2272
    %v2275 = vmul.f32 %v2254, %v2273
    %v2276 = vpack.c.bf16 %v2275, %v2275
    %2278 = vrot.lane.b32.xlu0 %v2276, 32
    %v2279 = vpop.permute.xlu0 %2278
    %v2281 = vsel %vm64, %v2279, 0
    %2283 = vmatpush.bf16.msra.mxu0 0
    %2284 = vmatpush.bf16.msra.mxu0 0
    %2285 = vmatpush.bf16.msra.mxu0 0
    %2286 = vmatpush.bf16.msra.mxu0 0
    %2287 = vmatpush.bf16.msra.mxu0 0
    %2288 = vmatpush.bf16.msra.mxu0 0
    %2289 = vmatpush.bf16.msra.mxu0 %v1456
    %2290 = vmatpush.bf16.msra.mxu0 %v1455
    %2291 = vmatmul.bf16.gmra.mxu0 %v2281
    %v2292 = vpop.f32.mrf.mxu0
    %v2293 = vadd.f32 0.0, %v2292
    %v2294 = vpop.f32.mrf.mxu0
    %2295 = vdwg.mxu0
    %v2297 = vrot.slane %v2293, 6
    %v2299 = vadd.f32 %v1448, %v2297
    %v2300 = vxor.u32 %v2299, 2147483648
    %v2301 = vmul.f32 %v2300, 1.442695
    %v2302 = vpow.pop %v2301
    %v2303 = vadd.f32 %v2302, 1.0
    %v2304 = vrcp.pop %v2303
    %v2305 = vmul.f32 %v2303, %v2304
    %v2306 = vsub.f32 1.0, %v2305
    %v2307 = vmul.f32 %v2304, %v2306
    %v2308 = vadd.f32 %v2304, %v2307
    %vm2309 = vweird.f32 %v2303
    %vm2310 = vweird.f32 %v2304
    %vm2311 = vmor %vm2309, %vm2310
    %v2312 = vsel %vm2311, %v2304, %v2308
    %v2313 = vand.u32 2147483647, %v2303
    %vm2314 = vcmp.eq.f32.partialorder %v2313, 8.507059e+37
    %v2315 = vand.u32 %v2303, 2147483648
    %v2316 = vor.u32 1.1754944e-38, %v2315
    %v2317 = vsel %vm2314, %v2316, %v2312
    %v2318 = vmul.f32 1.0, %v2317
    %v2319 = vtanh.pop %v2299
    %v2321 = vrot.slane %v2269, 6
    %v2323 = vmul.f32 %v2318, %v2321
    %2325 = vrot.lane.b32.xlu0 %v2319, 64
    %v2326 = vpop.permute.xlu0 %2325
    %v2328 = vmul.f32 %v2318, %v2326
    %2330 = vrot.lane.b32.xlu0 %v2328, 32
    %v2331 = vpop.permute.xlu0 %2330
    %v2333 = vadd.f32 %v2323, %v2331
    %v2334 = vtanh.pop %v2333
    %2336 = vrot.lane.b32.xlu0 %v2334, 64
    %v2337 = vpop.permute.xlu0 %2336
    %v2339 = vmul.f32 %v2318, %v2337
    %v2340 = vpack.c.bf16 %v2339, %v2339
    %v2342 = vrot.slane %v2340, 1
    %2343 = vrot.lane.b32.xlu0 %v2342, 32
    %v2344 = vpop.permute.xlu0 %2343
    %v2346 = vsel %vm64, %v2344, 0
    %2348 = vmatpush.bf16.msra.mxu0 0
    %2349 = vmatpush.bf16.msra.mxu0 0
    %2350 = vmatpush.bf16.msra.mxu0 0
    %2351 = vmatpush.bf16.msra.mxu0 0
    %2352 = vmatpush.bf16.msra.mxu0 0
    %2353 = vmatpush.bf16.msra.mxu0 0
    %2354 = vmatpush.bf16.msra.mxu0 %v1456
    %2355 = vmatpush.bf16.msra.mxu0 %v1455
    %2356 = vmatmul.bf16.gmra.mxu0 %v2346
    %v2357 = vpop.f32.mrf.mxu0
    %v2358 = vadd.f32 0.0, %v2357
    %v2359 = vpop.f32.mrf.mxu0
    %2360 = vdwg.mxu0
    %v2362 = vrot.slane %v2358, 4
    %v2364 = vadd.f32 %v1448, %v2362
    %v2365 = vxor.u32 %v2364, 2147483648
    %v2366 = vmul.f32 %v2365, 1.442695
    %v2367 = vpow.pop %v2366
    %v2368 = vadd.f32 %v2367, 1.0
    %v2369 = vrcp.pop %v2368
    %v2370 = vmul.f32 %v2368, %v2369
    %v2371 = vsub.f32 1.0, %v2370
    %v2372 = vmul.f32 %v2369, %v2371
    %v2373 = vadd.f32 %v2369, %v2372
    %vm2374 = vweird.f32 %v2368
    %vm2375 = vweird.f32 %v2369
    %vm2376 = vmor %vm2374, %vm2375
    %v2377 = vsel %vm2376, %v2369, %v2373
    %v2378 = vand.u32 2147483647, %v2368
    %vm2379 = vcmp.eq.f32.partialorder %v2378, 8.507059e+37
    %v2380 = vand.u32 %v2368, 2147483648
    %v2381 = vor.u32 1.1754944e-38, %v2380
    %v2382 = vsel %vm2379, %v2381, %v2377
    %v2383 = vmul.f32 1.0, %v2382
    %v2384 = vtanh.pop %v2364
    %v2386 = vrot.slane %v2333, 6
    %v2388 = vmul.f32 %v2383, %v2386
    %2390 = vrot.lane.b32.xlu0 %v2384, 64
    %v2391 = vpop.permute.xlu0 %2390
    %v2393 = vmul.f32 %v2383, %v2391
    %2395 = vrot.lane.b32.xlu0 %v2393, 32
    %v2396 = vpop.permute.xlu0 %2395
    %v2398 = vadd.f32 %v2388, %v2396
    %v2399 = vtanh.pop %v2398
    %2401 = vrot.lane.b32.xlu0 %v2399, 64
    %v2402 = vpop.permute.xlu0 %2401
    %v2404 = vmul.f32 %v2383, %v2402
    %v2405 = vpack.c.bf16 %v2404, %v2404
    %v2407 = vrot.slane %v2405, 2
    %2408 = vrot.lane.b32.xlu0 %v2407, 32
    %v2409 = vpop.permute.xlu0 %2408
    %v2411 = vsel %vm64, %v2409, 0
    %2413 = vmatpush.bf16.msra.mxu0 0
    %2414 = vmatpush.bf16.msra.mxu0 0
    %2415 = vmatpush.bf16.msra.mxu0 0
    %2416 = vmatpush.bf16.msra.mxu0 0
    %2417 = vmatpush.bf16.msra.mxu0 0
    %2418 = vmatpush.bf16.msra.mxu0 0
    %2419 = vmatpush.bf16.msra.mxu0 %v1456
    %2420 = vmatpush.bf16.msra.mxu0 %v1455
    %2421 = vmatmul.bf16.gmra.mxu0 %v2411
    %v2422 = vpop.f32.mrf.mxu0
    %v2423 = vadd.f32 0.0, %v2422
    %v2424 = vpop.f32.mrf.mxu0
    %2425 = vdwg.mxu0
    %v2427 = vrot.slane %v2423, 2
    %v2429 = vadd.f32 %v1448, %v2427
    %v2430 = vxor.u32 %v2429, 2147483648
    %v2431 = vmul.f32 %v2430, 1.442695
    %v2432 = vpow.pop %v2431
    %v2433 = vadd.f32 %v2432, 1.0
    %v2434 = vrcp.pop %v2433
    %v2435 = vmul.f32 %v2433, %v2434
    %v2436 = vsub.f32 1.0, %v2435
    %v2437 = vmul.f32 %v2434, %v2436
    %v2438 = vadd.f32 %v2434, %v2437
    %vm2439 = vweird.f32 %v2433
    %vm2440 = vweird.f32 %v2434
    %vm2441 = vmor %vm2439, %vm2440
    %v2442 = vsel %vm2441, %v2434, %v2438
    %v2443 = vand.u32 2147483647, %v2433
    %vm2444 = vcmp.eq.f32.partialorder %v2443, 8.507059e+37
    %v2445 = vand.u32 %v2433, 2147483648
    %v2446 = vor.u32 1.1754944e-38, %v2445
    %v2447 = vsel %vm2444, %v2446, %v2442
    %v2448 = vmul.f32 1.0, %v2447
    %v2449 = vtanh.pop %v2429
    %v2451 = vrot.slane %v2398, 6
    %v2453 = vmul.f32 %v2448, %v2451
    %2455 = vrot.lane.b32.xlu0 %v2449, 64
    %v2456 = vpop.permute.xlu0 %2455
    %v2458 = vmul.f32 %v2448, %v2456
    %2460 = vrot.lane.b32.xlu0 %v2458, 32
    %v2461 = vpop.permute.xlu0 %2460
    %v2463 = vadd.f32 %v2453, %v2461
    %v2464 = vtanh.pop %v2463
    %2466 = vrot.lane.b32.xlu0 %v2464, 64
    %v2467 = vpop.permute.xlu0 %2466
    %v2469 = vmul.f32 %v2448, %v2467
    %v2470 = vsel %vm1128, %v1507, %v1571
    %v2471 = vsel %vm1130, %v2470, %v1636
    %v2472 = vsel %vm1132, %v2471, %v1701
    %v2473 = vsel %vm1128, %v1763, %v1827
    %v2474 = vsel %vm1130, %v2473, %v1892
    %v2475 = vsel %vm1132, %v2474, %v1957
    %v2476 = vsel %vm1128, %v2019, %v2083
    %v2477 = vsel %vm1130, %v2476, %v2148
    %v2478 = vsel %vm1132, %v2477, %v2213
    %v2479 = vsel %vm1128, %v2275, %v2339
    %v2480 = vsel %vm1130, %v2479, %v2404
    %v2481 = vsel %vm1132, %v2480, %v2469
    %s2482 = scalar_lea.vmem [#allocation2], 32
    %v2483 = vld [vmem:[%s2482] sm:$0xff]
    %v2484 = vld [vmem:[%s2482 + $0x8] sm:$0xff]
    %v2485 = vld [vmem:[%s2482 + $0x10] sm:$0xff]
    %v2486 = vld [vmem:[%s2482 + $0x18] sm:$0xff]
    %s2487 = scalar_lea.vmem %s5, 1
    %v2488 = vld [vmem:[%s2487] sm:$0x1]
    %v2490 = vperm.slane %v2488, 0
    %2496 = vrot.lane.b32.xlu0 %v2472, 32
    %v2497 = vpop.permute.xlu0 %2496
    %2498 = vrot.lane.b32.xlu0 %v2475, 32
    %v2499 = vpop.permute.xlu0 %2498
    %2500 = vrot.lane.b32.xlu0 %v2478, 32
    %v2501 = vpop.permute.xlu0 %2500
    %2502 = vrot.lane.b32.xlu0 %v2481, 32
    %v2503 = vpop.permute.xlu0 %2502
    %v2504 = vsel %vm64, %v2497, 0
    %v2506 = vsel %vm64, %v2499, 0
    %v2508 = vsel %vm64, %v2501, 0
    %v2510 = vsel %vm64, %v2503, 0
    %2512 = vmatpush.msra.mxu0 0.0
    %2513 = vmatpush.msra.mxu0 0.0
    %2514 = vmatpush.msra.mxu0 0.0
    %2515 = vmatpush.msra.mxu0 0.0
    %2516 = vmatpush.msra.mxu0 0.0
    %2517 = vmatpush.msra.mxu0 0.0
    %2518 = vmatpush.msra.mxu0 0.0
    %2519 = vmatpush.msra.mxu0 0.0
    %2520 = vmatpush.msra.mxu0 0.0
    %2521 = vmatpush.msra.mxu0 0.0
    %2522 = vmatpush.msra.mxu0 0.0
    %2523 = vmatpush.msra.mxu0 0.0
    %2524 = vmatpush.msra.mxu0 %v2486
    %2525 = vmatpush.msra.mxu0 %v2485
    %2526 = vmatpush.msra.mxu0 %v2484
    %2527 = vmatpush.msra.mxu0 %v2483
    %2528 = vmatmul.f32.gmra.mxu0 %v2504
    %v2529 = vpop.f32.mrf.mxu0
    %v2530 = vadd.f32 %v2490, %v2529
    %2531 = vmatmul.f32.gmra.mxu0 %v2506
    %v2532 = vpop.f32.mrf.mxu0
    %v2533 = vadd.f32 %v2490, %v2532
    %2534 = vmatmul.f32.gmra.mxu0 %v2508
    %v2535 = vpop.f32.mrf.mxu0
    %v2536 = vadd.f32 %v2490, %v2535
    %2537 = vmatmul.f32.gmra.mxu0 %v2510
    %v2538 = vpop.f32.mrf.mxu0
    %v2539 = vadd.f32 %v2490, %v2538
    %2540 = vdwg.mxu0
    %v2541 = vxor.u32 %v2530, 2147483648
    %v2542 = vxor.u32 %v2533, 2147483648
    %v2543 = vxor.u32 %v2536, 2147483648
    %v2544 = vxor.u32 %v2539, 2147483648
    %v2545 = vmul.f32 %v2541, 1.442695
    %v2546 = vpow.pop %v2545
    %v2547 = vmul.f32 %v2542, 1.442695
    %v2548 = vpow.pop %v2547
    %v2549 = vmul.f32 %v2543, 1.442695
    %v2550 = vpow.pop %v2549
    %v2551 = vmul.f32 %v2544, 1.442695
    %v2552 = vpow.pop %v2551
    %v2553 = vadd.f32 %v2546, 1.0
    %v2554 = vadd.f32 %v2548, 1.0
    %v2555 = vadd.f32 %v2550, 1.0
    %v2556 = vadd.f32 %v2552, 1.0
    %v2557 = vrcp.pop %v2553
    %v2558 = vmul.f32 %v2553, %v2557
    %v2559 = vsub.f32 1.0, %v2558
    %v2560 = vmul.f32 %v2557, %v2559
    %v2561 = vadd.f32 %v2557, %v2560
    %vm2562 = vweird.f32 %v2553
    %vm2563 = vweird.f32 %v2557
    %vm2564 = vmor %vm2562, %vm2563
    %v2565 = vsel %vm2564, %v2557, %v2561
    %v2566 = vand.u32 2147483647, %v2553
    %vm2567 = vcmp.eq.f32.partialorder %v2566, 8.507059e+37
    %v2568 = vand.u32 %v2553, 2147483648
    %v2569 = vor.u32 1.1754944e-38, %v2568
    %v2570 = vsel %vm2567, %v2569, %v2565
    %v2571 = vmul.f32 1.0, %v2570
    %v2572 = vrcp.pop %v2554
    %v2573 = vmul.f32 %v2554, %v2572
    %v2574 = vsub.f32 1.0, %v2573
    %v2575 = vmul.f32 %v2572, %v2574
    %v2576 = vadd.f32 %v2572, %v2575
    %vm2577 = vweird.f32 %v2554
    %vm2578 = vweird.f32 %v2572
    %vm2579 = vmor %vm2577, %vm2578
    %v2580 = vsel %vm2579, %v2572, %v2576
    %v2581 = vand.u32 2147483647, %v2554
    %vm2582 = vcmp.eq.f32.partialorder %v2581, 8.507059e+37
    %v2583 = vand.u32 %v2554, 2147483648
    %v2584 = vor.u32 1.1754944e-38, %v2583
    %v2585 = vsel %vm2582, %v2584, %v2580
    %v2586 = vmul.f32 1.0, %v2585
    %v2587 = vrcp.pop %v2555
    %v2588 = vmul.f32 %v2555, %v2587
    %v2589 = vsub.f32 1.0, %v2588
    %v2590 = vmul.f32 %v2587, %v2589
    %v2591 = vadd.f32 %v2587, %v2590
    %vm2592 = vweird.f32 %v2555
    %vm2593 = vweird.f32 %v2587
    %vm2594 = vmor %vm2592, %vm2593
    %v2595 = vsel %vm2594, %v2587, %v2591
    %v2596 = vand.u32 2147483647, %v2555
    %vm2597 = vcmp.eq.f32.partialorder %v2596, 8.507059e+37
    %v2598 = vand.u32 %v2555, 2147483648
    %v2599 = vor.u32 1.1754944e-38, %v2598
    %v2600 = vsel %vm2597, %v2599, %v2595
    %v2601 = vmul.f32 1.0, %v2600
    %v2602 = vrcp.pop %v2556
    %v2603 = vmul.f32 %v2556, %v2602
    %v2604 = vsub.f32 1.0, %v2603
    %v2605 = vmul.f32 %v2602, %v2604
    %v2606 = vadd.f32 %v2602, %v2605
    %vm2607 = vweird.f32 %v2556
    %vm2608 = vweird.f32 %v2602
    %vm2609 = vmor %vm2607, %vm2608
    %v2610 = vsel %vm2609, %v2602, %v2606
    %v2611 = vand.u32 2147483647, %v2556
    %vm2612 = vcmp.eq.f32.partialorder %v2611, 8.507059e+37
    %v2613 = vand.u32 %v2556, 2147483648
    %v2614 = vor.u32 1.1754944e-38, %v2613
    %v2615 = vsel %vm2612, %v2614, %v2610
    %v2616 = vmul.f32 1.0, %v2615
    %v2621 = vmul.f32 %v2571, %v2497
    %v2622 = vmul.f32 %v2586, %v2499
    %v2623 = vmul.f32 %v2601, %v2501
    %v2624 = vmul.f32 %v2616, %v2503
    %v2625 = vadd.f32 %v1395, %v2621
    %v2626 = vadd.f32 %v1396, %v2622
    %v2627 = vadd.f32 %v1397, %v2623
    %v2628 = vadd.f32 %v1398, %v2624
    %v2629 = vsel %vm64, %v2625, 0.0
    %2630 = vadd.xlane.f32.xlu0 %v2629
    %v2631 = vpop.xlane.xlu0 %2630
    %v2632 = vsel %vm64, %v2626, 0.0
    %2633 = vadd.xlane.f32.xlu0 %v2632
    %v2634 = vpop.xlane.xlu0 %2633
    %v2635 = vsel %vm64, %v2627, 0.0
    %2636 = vadd.xlane.f32.xlu0 %v2635
    %v2637 = vpop.xlane.xlu0 %2636
    %v2638 = vsel %vm64, %v2628, 0.0
    %2639 = vadd.xlane.f32.xlu0 %v2638
    %v2640 = vpop.xlane.xlu0 %2639
    %v2641 = vmul.f32 %v2631, %v1306
    %v2642 = vmul.f32 %v2634, %v1306
    %v2643 = vmul.f32 %v2637, %v1306
    %v2644 = vmul.f32 %v2640, %v1306
    %v2645 = vsub.f32 %v2625, %v2641
    %v2646 = vsub.f32 %v2626, %v2642
    %v2647 = vsub.f32 %v2627, %v2643
    %v2648 = vsub.f32 %v2628, %v2644
    %v2649 = vmul.f32 %v2645, %v2645
    %v2650 = vmul.f32 %v2646, %v2646
    %v2651 = vmul.f32 %v2647, %v2647
    %v2652 = vmul.f32 %v2648, %v2648
    %v2653 = vsel %vm64, %v2649, 0.0
    %2654 = vadd.xlane.f32.xlu0 %v2653
    %v2655 = vpop.xlane.xlu0 %2654
    %v2656 = vsel %vm64, %v2650, 0.0
    %2657 = vadd.xlane.f32.xlu0 %v2656
    %v2658 = vpop.xlane.xlu0 %2657
    %v2659 = vsel %vm64, %v2651, 0.0
    %2660 = vadd.xlane.f32.xlu0 %v2659
    %v2661 = vpop.xlane.xlu0 %2660
    %v2662 = vsel %vm64, %v2652, 0.0
    %2663 = vadd.xlane.f32.xlu0 %v2662
    %v2664 = vpop.xlane.xlu0 %2663
    %v2665 = vmul.f32 %v2655, %v1306
    %v2666 = vmul.f32 %v2658, %v1306
    %v2667 = vmul.f32 %v2661, %v1306
    %v2668 = vmul.f32 %v2664, %v1306
    %v2669 = vadd.f32 %v2665, 1e-05
    %v2670 = vadd.f32 %v2666, 1e-05
    %v2671 = vadd.f32 %v2667, 1e-05
    %v2672 = vadd.f32 %v2668, 1e-05
    %v2673 = vrsqrt.pop %v2669
    %v2674 = vmul.f32 %v2673, %v2669
    %v2675 = vmul.f32 %v2674, %v2673
    %v2676 = vmul.f32 0.5, %v2675
    %v2677 = vsub.f32 1.5, %v2676
    %v2678 = vmul.f32 %v2673, %v2677
    %vm2679 = vweird.f32 %v2669
    %vm2680 = vweird.f32 %v2673
    %vm2681 = vmor %vm2679, %vm2680
    %v2682 = vsel %vm2681, %v2673, %v2678
    %v2683 = vrsqrt.pop %v2670
    %v2684 = vmul.f32 %v2683, %v2670
    %v2685 = vmul.f32 %v2684, %v2683
    %v2686 = vmul.f32 0.5, %v2685
    %v2687 = vsub.f32 1.5, %v2686
    %v2688 = vmul.f32 %v2683, %v2687
    %vm2689 = vweird.f32 %v2670
    %vm2690 = vweird.f32 %v2683
    %vm2691 = vmor %vm2689, %vm2690
    %v2692 = vsel %vm2691, %v2683, %v2688
    %v2693 = vrsqrt.pop %v2671
    %v2694 = vmul.f32 %v2693, %v2671
    %v2695 = vmul.f32 %v2694, %v2693
    %v2696 = vmul.f32 0.5, %v2695
    %v2697 = vsub.f32 1.5, %v2696
    %v2698 = vmul.f32 %v2693, %v2697
    %vm2699 = vweird.f32 %v2671
    %vm2700 = vweird.f32 %v2693
    %vm2701 = vmor %vm2699, %vm2700
    %v2702 = vsel %vm2701, %v2693, %v2698
    %v2703 = vrsqrt.pop %v2672
    %v2704 = vmul.f32 %v2703, %v2672
    %v2705 = vmul.f32 %v2704, %v2703
    %v2706 = vmul.f32 0.5, %v2705
    %v2707 = vsub.f32 1.5, %v2706
    %v2708 = vmul.f32 %v2703, %v2707
    %vm2709 = vweird.f32 %v2672
    %vm2710 = vweird.f32 %v2703
    %vm2711 = vmor %vm2709, %vm2710
    %v2712 = vsel %vm2711, %v2703, %v2708
    %v2713 = vmul.f32 %v2645, %v2682
    %v2714 = vmul.f32 %v2646, %v2692
    %v2715 = vmul.f32 %v2647, %v2702
    %v2716 = vmul.f32 %v2648, %v2712
    %s2717 = scalar_lea.vmem %s6, 1
    %v2718 = vld [vmem:[%s2717] sm:$0x1]
    %v2720 = vperm.slane %v2718, 0
    %v2722 = vmul.f32 %v2713, %v2720
    %v2723 = vmul.f32 %v2714, %v2720
    %v2724 = vmul.f32 %v2715, %v2720
    %v2725 = vmul.f32 %v2716, %v2720
    %s2726 = scalar_lea.vmem %s7, 1
    %v2727 = vld [vmem:[%s2726] sm:$0x1]
    %v2729 = vperm.slane %v2727, 0
    %v2731 = vadd.f32 %v2722, %v2729
    %v2732 = vadd.f32 %v2723, %v2729
    %v2733 = vadd.f32 %v2724, %v2729
    %v2734 = vadd.f32 %v2725, %v2729
    %s2735 = scalar_lea.vmem %s1, 64
    %v2736 = vld [vmem:[%s2735] sm:$0xff]
    %v2737 = vld [vmem:[%s2735 + $0x8] sm:$0xff]
    %v2738 = vld [vmem:[%s2735 + $0x10] sm:$0xff]
    %v2739 = vld [vmem:[%s2735 + $0x18] sm:$0xff]
    %s2740 = scalar_lea.vmem %s3, 2
    %v2741 = vld [vmem:[%s2740] sm:$0x1]
    %v2743 = vperm.slane %v2741, 0
    %v2746 = vsel %vm64, %v2731, 0
    %v2749 = vsel %vm64, %v2732, 0
    %v2752 = vsel %vm64, %v2733, 0
    %v2755 = vsel %vm64, %v2734, 0
    %2757 = vmatpush.msra.mxu0 0.0
    %2758 = vmatpush.msra.mxu0 0.0
    %2759 = vmatpush.msra.mxu0 0.0
    %2760 = vmatpush.msra.mxu0 0.0
    %2761 = vmatpush.msra.mxu0 0.0
    %2762 = vmatpush.msra.mxu0 0.0
    %2763 = vmatpush.msra.mxu0 0.0
    %2764 = vmatpush.msra.mxu0 0.0
    %2765 = vmatpush.msra.mxu0 0.0
    %2766 = vmatpush.msra.mxu0 0.0
    %2767 = vmatpush.msra.mxu0 0.0
    %2768 = vmatpush.msra.mxu0 0.0
    %2769 = vmatpush.msra.mxu0 %v2739
    %2770 = vmatpush.msra.mxu0 %v2738
    %2771 = vmatpush.msra.mxu0 %v2737
    %2772 = vmatpush.msra.mxu0 %v2736
    %2773 = vmatmul.f32.gmra.mxu0 %v2746
    %v2774 = vpop.f32.mrf.mxu0
    %v2775 = vadd.f32 %v2743, %v2774
    %2776 = vmatmul.f32.gmra.mxu0 %v2749
    %v2777 = vpop.f32.mrf.mxu0
    %v2778 = vadd.f32 %v2743, %v2777
    %2779 = vmatmul.f32.gmra.mxu0 %v2752
    %v2780 = vpop.f32.mrf.mxu0
    %v2781 = vadd.f32 %v2743, %v2780
    %2782 = vmatmul.f32.gmra.mxu0 %v2755
    %v2783 = vpop.f32.mrf.mxu0
    %v2784 = vadd.f32 %v2743, %v2783
    %2785 = vdwg.mxu0
    %s2786 = scalar_lea.vmem %s2, 64
    %v2787 = vld [vmem:[%s2786] sm:$0xff]
    %v2788 = vld [vmem:[%s2786 + $0x8] sm:$0xff]
    %v2789 = vld [vmem:[%s2786 + $0x10] sm:$0xff]
    %v2790 = vld [vmem:[%s2786 + $0x18] sm:$0xff]
    %v2791 = vpack.c.bf16 %v2788, %v2787
    %v2792 = vpack.c.bf16 %v2790, %v2789
    %2793 = vmatpush.bf16.msra.mxu0 0
    %2794 = vmatpush.bf16.msra.mxu0 0
    %2795 = vmatpush.bf16.msra.mxu0 0
    %2796 = vmatpush.bf16.msra.mxu0 0
    %2797 = vmatpush.bf16.msra.mxu0 0
    %2798 = vmatpush.bf16.msra.mxu0 0
    %2799 = vmatpush.bf16.msra.mxu0 %v2792
    %2800 = vmatpush.bf16.msra.mxu0 %v2791
    %2801 = vmatmul.bf16.gmra.mxu0 %v113
    %v2802 = vpop.f32.mrf.mxu0
    %v2803 = vadd.f32 0.0, %v2802
    %v2804 = vpop.f32.mrf.mxu0
    %2805 = vdwg.mxu0
    %v2806 = vadd.f32 %v2775, %v2803
    %v2807 = vxor.u32 %v2806, 2147483648
    %v2808 = vmul.f32 %v2807, 1.442695
    %v2809 = vpow.pop %v2808
    %v2810 = vadd.f32 %v2809, 1.0
    %v2811 = vrcp.pop %v2810
    %v2812 = vmul.f32 %v2810, %v2811
    %v2813 = vsub.f32 1.0, %v2812
    %v2814 = vmul.f32 %v2811, %v2813
    %v2815 = vadd.f32 %v2811, %v2814
    %vm2816 = vweird.f32 %v2810
    %vm2817 = vweird.f32 %v2811
    %vm2818 = vmor %vm2816, %vm2817
    %v2819 = vsel %vm2818, %v2811, %v2815
    %v2820 = vand.u32 2147483647, %v2810
    %vm2821 = vcmp.eq.f32.partialorder %v2820, 8.507059e+37
    %v2822 = vand.u32 %v2810, 2147483648
    %v2823 = vor.u32 1.1754944e-38, %v2822
    %v2824 = vsel %vm2821, %v2823, %v2819
    %v2825 = vmul.f32 1.0, %v2824
    %v2826 = vtanh.pop %v2806
    %v2827 = vmul.f32 %v2825, 0.0
    %2829 = vrot.lane.b32.xlu0 %v2826, 64
    %v2830 = vpop.permute.xlu0 %2829
    %v2832 = vmul.f32 %v2825, %v2830
    %2834 = vrot.lane.b32.xlu0 %v2832, 32
    %v2835 = vpop.permute.xlu0 %2834
    %v2837 = vadd.f32 %v2827, %v2835
    %v2838 = vtanh.pop %v2837
    %2840 = vrot.lane.b32.xlu0 %v2838, 64
    %v2841 = vpop.permute.xlu0 %2840
    %v2843 = vmul.f32 %v2825, %v2841
    %v2844 = vpack.c.bf16 %v2843, %v2843
    %2846 = vrot.lane.b32.xlu0 %v2844, 32
    %v2847 = vpop.permute.xlu0 %2846
    %v2849 = vsel %vm64, %v2847, 0
    %2851 = vmatpush.bf16.msra.mxu0 0
    %2852 = vmatpush.bf16.msra.mxu0 0
    %2853 = vmatpush.bf16.msra.mxu0 0
    %2854 = vmatpush.bf16.msra.mxu0 0
    %2855 = vmatpush.bf16.msra.mxu0 0
    %2856 = vmatpush.bf16.msra.mxu0 0
    %2857 = vmatpush.bf16.msra.mxu0 %v2792
    %2858 = vmatpush.bf16.msra.mxu0 %v2791
    %2859 = vmatmul.bf16.gmra.mxu0 %v2849
    %v2860 = vpop.f32.mrf.mxu0
    %v2861 = vadd.f32 0.0, %v2860
    %v2862 = vpop.f32.mrf.mxu0
    %2863 = vdwg.mxu0
    %v2865 = vrot.slane %v2861, 6
    %v2867 = vadd.f32 %v2775, %v2865
    %v2868 = vxor.u32 %v2867, 2147483648
    %v2869 = vmul.f32 %v2868, 1.442695
    %v2870 = vpow.pop %v2869
    %v2871 = vadd.f32 %v2870, 1.0
    %v2872 = vrcp.pop %v2871
    %v2873 = vmul.f32 %v2871, %v2872
    %v2874 = vsub.f32 1.0, %v2873
    %v2875 = vmul.f32 %v2872, %v2874
    %v2876 = vadd.f32 %v2872, %v2875
    %vm2877 = vweird.f32 %v2871
    %vm2878 = vweird.f32 %v2872
    %vm2879 = vmor %vm2877, %vm2878
    %v2880 = vsel %vm2879, %v2872, %v2876
    %v2881 = vand.u32 2147483647, %v2871
    %vm2882 = vcmp.eq.f32.partialorder %v2881, 8.507059e+37
    %v2883 = vand.u32 %v2871, 2147483648
    %v2884 = vor.u32 1.1754944e-38, %v2883
    %v2885 = vsel %vm2882, %v2884, %v2880
    %v2886 = vmul.f32 1.0, %v2885
    %v2887 = vtanh.pop %v2867
    %v2889 = vrot.slane %v2837, 6
    %v2891 = vmul.f32 %v2886, %v2889
    %2893 = vrot.lane.b32.xlu0 %v2887, 64
    %v2894 = vpop.permute.xlu0 %2893
    %v2896 = vmul.f32 %v2886, %v2894
    %2898 = vrot.lane.b32.xlu0 %v2896, 32
    %v2899 = vpop.permute.xlu0 %2898
    %v2901 = vadd.f32 %v2891, %v2899
    %v2902 = vtanh.pop %v2901
    %2904 = vrot.lane.b32.xlu0 %v2902, 64
    %v2905 = vpop.permute.xlu0 %2904
    %v2907 = vmul.f32 %v2886, %v2905
    %v2908 = vpack.c.bf16 %v2907, %v2907
    %v2910 = vrot.slane %v2908, 1
    %2911 = vrot.lane.b32.xlu0 %v2910, 32
    %v2912 = vpop.permute.xlu0 %2911
    %v2914 = vsel %vm64, %v2912, 0
    %2916 = vmatpush.bf16.msra.mxu0 0
    %2917 = vmatpush.bf16.msra.mxu0 0
    %2918 = vmatpush.bf16.msra.mxu0 0
    %2919 = vmatpush.bf16.msra.mxu0 0
    %2920 = vmatpush.bf16.msra.mxu0 0
    %2921 = vmatpush.bf16.msra.mxu0 0
    %2922 = vmatpush.bf16.msra.mxu0 %v2792
    %2923 = vmatpush.bf16.msra.mxu0 %v2791
    %2924 = vmatmul.bf16.gmra.mxu0 %v2914
    %v2925 = vpop.f32.mrf.mxu0
    %v2926 = vadd.f32 0.0, %v2925
    %v2927 = vpop.f32.mrf.mxu0
    %2928 = vdwg.mxu0
    %v2930 = vrot.slane %v2926, 4
    %v2932 = vadd.f32 %v2775, %v2930
    %v2933 = vxor.u32 %v2932, 2147483648
    %v2934 = vmul.f32 %v2933, 1.442695
    %v2935 = vpow.pop %v2934
    %v2936 = vadd.f32 %v2935, 1.0
    %v2937 = vrcp.pop %v2936
    %v2938 = vmul.f32 %v2936, %v2937
    %v2939 = vsub.f32 1.0, %v2938
    %v2940 = vmul.f32 %v2937, %v2939
    %v2941 = vadd.f32 %v2937, %v2940
    %vm2942 = vweird.f32 %v2936
    %vm2943 = vweird.f32 %v2937
    %vm2944 = vmor %vm2942, %vm2943
    %v2945 = vsel %vm2944, %v2937, %v2941
    %v2946 = vand.u32 2147483647, %v2936
    %vm2947 = vcmp.eq.f32.partialorder %v2946, 8.507059e+37
    %v2948 = vand.u32 %v2936, 2147483648
    %v2949 = vor.u32 1.1754944e-38, %v2948
    %v2950 = vsel %vm2947, %v2949, %v2945
    %v2951 = vmul.f32 1.0, %v2950
    %v2952 = vtanh.pop %v2932
    %v2954 = vrot.slane %v2901, 6
    %v2956 = vmul.f32 %v2951, %v2954
    %2958 = vrot.lane.b32.xlu0 %v2952, 64
    %v2959 = vpop.permute.xlu0 %2958
    %v2961 = vmul.f32 %v2951, %v2959
    %2963 = vrot.lane.b32.xlu0 %v2961, 32
    %v2964 = vpop.permute.xlu0 %2963
    %v2966 = vadd.f32 %v2956, %v2964
    %v2967 = vtanh.pop %v2966
    %2969 = vrot.lane.b32.xlu0 %v2967, 64
    %v2970 = vpop.permute.xlu0 %2969
    %v2972 = vmul.f32 %v2951, %v2970
    %v2973 = vpack.c.bf16 %v2972, %v2972
    %v2975 = vrot.slane %v2973, 2
    %2976 = vrot.lane.b32.xlu0 %v2975, 32
    %v2977 = vpop.permute.xlu0 %2976
    %v2979 = vsel %vm64, %v2977, 0
    %2981 = vmatpush.bf16.msra.mxu0 0
    %2982 = vmatpush.bf16.msra.mxu0 0
    %2983 = vmatpush.bf16.msra.mxu0 0
    %2984 = vmatpush.bf16.msra.mxu0 0
    %2985 = vmatpush.bf16.msra.mxu0 0
    %2986 = vmatpush.bf16.msra.mxu0 0
    %2987 = vmatpush.bf16.msra.mxu0 %v2792
    %2988 = vmatpush.bf16.msra.mxu0 %v2791
    %2989 = vmatmul.bf16.gmra.mxu0 %v2979
    %v2990 = vpop.f32.mrf.mxu0
    %v2991 = vadd.f32 0.0, %v2990
    %v2992 = vpop.f32.mrf.mxu0
    %2993 = vdwg.mxu0
    %v2995 = vrot.slane %v2991, 2
    %v2997 = vadd.f32 %v2775, %v2995
    %v2998 = vxor.u32 %v2997, 2147483648
    %v2999 = vmul.f32 %v2998, 1.442695
    %v3000 = vpow.pop %v2999
    %v3001 = vadd.f32 %v3000, 1.0
    %v3002 = vrcp.pop %v3001
    %v3003 = vmul.f32 %v3001, %v3002
    %v3004 = vsub.f32 1.0, %v3003
    %v3005 = vmul.f32 %v3002, %v3004
    %v3006 = vadd.f32 %v3002, %v3005
    %vm3007 = vweird.f32 %v3001
    %vm3008 = vweird.f32 %v3002
    %vm3009 = vmor %vm3007, %vm3008
    %v3010 = vsel %vm3009, %v3002, %v3006
    %v3011 = vand.u32 2147483647, %v3001
    %vm3012 = vcmp.eq.f32.partialorder %v3011, 8.507059e+37
    %v3013 = vand.u32 %v3001, 2147483648
    %v3014 = vor.u32 1.1754944e-38, %v3013
    %v3015 = vsel %vm3012, %v3014, %v3010
    %v3016 = vmul.f32 1.0, %v3015
    %v3017 = vtanh.pop %v2997
    %v3019 = vrot.slane %v2966, 6
    %v3021 = vmul.f32 %v3016, %v3019
    %3023 = vrot.lane.b32.xlu0 %v3017, 64
    %v3024 = vpop.permute.xlu0 %3023
    %v3026 = vmul.f32 %v3016, %v3024
    %3028 = vrot.lane.b32.xlu0 %v3026, 32
    %v3029 = vpop.permute.xlu0 %3028
    %v3031 = vadd.f32 %v3021, %v3029
    %v3032 = vtanh.pop %v3031
    %3034 = vrot.lane.b32.xlu0 %v3032, 64
    %v3035 = vpop.permute.xlu0 %3034
    %v3037 = vmul.f32 %v3016, %v3035
    %v3038 = vpack.c.bf16 %v3037, %v3037
    %v3040 = vrot.slane %v3038, 3
    %3041 = vrot.lane.b32.xlu0 %v3040, 32
    %v3042 = vpop.permute.xlu0 %3041
    %v3044 = vsel %vm64, %v3042, 0
    %3046 = vmatpush.bf16.msra.mxu0 0
    %3047 = vmatpush.bf16.msra.mxu0 0
    %3048 = vmatpush.bf16.msra.mxu0 0
    %3049 = vmatpush.bf16.msra.mxu0 0
    %3050 = vmatpush.bf16.msra.mxu0 0
    %3051 = vmatpush.bf16.msra.mxu0 0
    %3052 = vmatpush.bf16.msra.mxu0 %v2792
    %3053 = vmatpush.bf16.msra.mxu0 %v2791
    %3054 = vmatmul.bf16.gmra.mxu0 %v3044
    %v3055 = vpop.f32.mrf.mxu0
    %v3056 = vadd.f32 0.0, %v3055
    %v3057 = vpop.f32.mrf.mxu0
    %3058 = vdwg.mxu0
    %v3059 = vadd.f32 %v2778, %v3056
    %v3060 = vxor.u32 %v3059, 2147483648
    %v3061 = vmul.f32 %v3060, 1.442695
    %v3062 = vpow.pop %v3061
    %v3063 = vadd.f32 %v3062, 1.0
    %v3064 = vrcp.pop %v3063
    %v3065 = vmul.f32 %v3063, %v3064
    %v3066 = vsub.f32 1.0, %v3065
    %v3067 = vmul.f32 %v3064, %v3066
    %v3068 = vadd.f32 %v3064, %v3067
    %vm3069 = vweird.f32 %v3063
    %vm3070 = vweird.f32 %v3064
    %vm3071 = vmor %vm3069, %vm3070
    %v3072 = vsel %vm3071, %v3064, %v3068
    %v3073 = vand.u32 2147483647, %v3063
    %vm3074 = vcmp.eq.f32.partialorder %v3073, 8.507059e+37
    %v3075 = vand.u32 %v3063, 2147483648
    %v3076 = vor.u32 1.1754944e-38, %v3075
    %v3077 = vsel %vm3074, %v3076, %v3072
    %v3078 = vmul.f32 1.0, %v3077
    %v3079 = vtanh.pop %v3059
    %v3081 = vrot.slane %v3031, 6
    %v3083 = vmul.f32 %v3078, %v3081
    %3085 = vrot.lane.b32.xlu0 %v3079, 64
    %v3086 = vpop.permute.xlu0 %3085
    %v3088 = vmul.f32 %v3078, %v3086
    %3090 = vrot.lane.b32.xlu0 %v3088, 32
    %v3091 = vpop.permute.xlu0 %3090
    %v3093 = vadd.f32 %v3083, %v3091
    %v3094 = vtanh.pop %v3093
    %3096 = vrot.lane.b32.xlu0 %v3094, 64
    %v3097 = vpop.permute.xlu0 %3096
    %v3099 = vmul.f32 %v3078, %v3097
    %v3100 = vpack.c.bf16 %v3099, %v3099
    %3102 = vrot.lane.b32.xlu0 %v3100, 32
    %v3103 = vpop.permute.xlu0 %3102
    %v3105 = vsel %vm64, %v3103, 0
    %3107 = vmatpush.bf16.msra.mxu0 0
    %3108 = vmatpush.bf16.msra.mxu0 0
    %3109 = vmatpush.bf16.msra.mxu0 0
    %3110 = vmatpush.bf16.msra.mxu0 0
    %3111 = vmatpush.bf16.msra.mxu0 0
    %3112 = vmatpush.bf16.msra.mxu0 0
    %3113 = vmatpush.bf16.msra.mxu0 %v2792
    %3114 = vmatpush.bf16.msra.mxu0 %v2791
    %3115 = vmatmul.bf16.gmra.mxu0 %v3105
    %v3116 = vpop.f32.mrf.mxu0
    %v3117 = vadd.f32 0.0, %v3116
    %v3118 = vpop.f32.mrf.mxu0
    %3119 = vdwg.mxu0
    %v3121 = vrot.slane %v3117, 6
    %v3123 = vadd.f32 %v2778, %v3121
    %v3124 = vxor.u32 %v3123, 2147483648
    %v3125 = vmul.f32 %v3124, 1.442695
    %v3126 = vpow.pop %v3125
    %v3127 = vadd.f32 %v3126, 1.0
    %v3128 = vrcp.pop %v3127
    %v3129 = vmul.f32 %v3127, %v3128
    %v3130 = vsub.f32 1.0, %v3129
    %v3131 = vmul.f32 %v3128, %v3130
    %v3132 = vadd.f32 %v3128, %v3131
    %vm3133 = vweird.f32 %v3127
    %vm3134 = vweird.f32 %v3128
    %vm3135 = vmor %vm3133, %vm3134
    %v3136 = vsel %vm3135, %v3128, %v3132
    %v3137 = vand.u32 2147483647, %v3127
    %vm3138 = vcmp.eq.f32.partialorder %v3137, 8.507059e+37
    %v3139 = vand.u32 %v3127, 2147483648
    %v3140 = vor.u32 1.1754944e-38, %v3139
    %v3141 = vsel %vm3138, %v3140, %v3136
    %v3142 = vmul.f32 1.0, %v3141
    %v3143 = vtanh.pop %v3123
    %v3145 = vrot.slane %v3093, 6
    %v3147 = vmul.f32 %v3142, %v3145
    %3149 = vrot.lane.b32.xlu0 %v3143, 64
    %v3150 = vpop.permute.xlu0 %3149
    %v3152 = vmul.f32 %v3142, %v3150
    %3154 = vrot.lane.b32.xlu0 %v3152, 32
    %v3155 = vpop.permute.xlu0 %3154
    %v3157 = vadd.f32 %v3147, %v3155
    %v3158 = vtanh.pop %v3157
    %3160 = vrot.lane.b32.xlu0 %v3158, 64
    %v3161 = vpop.permute.xlu0 %3160
    %v3163 = vmul.f32 %v3142, %v3161
    %v3164 = vpack.c.bf16 %v3163, %v3163
    %v3166 = vrot.slane %v3164, 1
    %3167 = vrot.lane.b32.xlu0 %v3166, 32
    %v3168 = vpop.permute.xlu0 %3167
    %v3170 = vsel %vm64, %v3168, 0
    %3172 = vmatpush.bf16.msra.mxu0 0
    %3173 = vmatpush.bf16.msra.mxu0 0
    %3174 = vmatpush.bf16.msra.mxu0 0
    %3175 = vmatpush.bf16.msra.mxu0 0
    %3176 = vmatpush.bf16.msra.mxu0 0
    %3177 = vmatpush.bf16.msra.mxu0 0
    %3178 = vmatpush.bf16.msra.mxu0 %v2792
    %3179 = vmatpush.bf16.msra.mxu0 %v2791
    %3180 = vmatmul.bf16.gmra.mxu0 %v3170
    %v3181 = vpop.f32.mrf.mxu0
    %v3182 = vadd.f32 0.0, %v3181
    %v3183 = vpop.f32.mrf.mxu0
    %3184 = vdwg.mxu0
    %v3186 = vrot.slane %v3182, 4
    %v3188 = vadd.f32 %v2778, %v3186
    %v3189 = vxor.u32 %v3188, 2147483648
    %v3190 = vmul.f32 %v3189, 1.442695
    %v3191 = vpow.pop %v3190
    %v3192 = vadd.f32 %v3191, 1.0
    %v3193 = vrcp.pop %v3192
    %v3194 = vmul.f32 %v3192, %v3193
    %v3195 = vsub.f32 1.0, %v3194
    %v3196 = vmul.f32 %v3193, %v3195
    %v3197 = vadd.f32 %v3193, %v3196
    %vm3198 = vweird.f32 %v3192
    %vm3199 = vweird.f32 %v3193
    %vm3200 = vmor %vm3198, %vm3199
    %v3201 = vsel %vm3200, %v3193, %v3197
    %v3202 = vand.u32 2147483647, %v3192
    %vm3203 = vcmp.eq.f32.partialorder %v3202, 8.507059e+37
    %v3204 = vand.u32 %v3192, 2147483648
    %v3205 = vor.u32 1.1754944e-38, %v3204
    %v3206 = vsel %vm3203, %v3205, %v3201
    %v3207 = vmul.f32 1.0, %v3206
    %v3208 = vtanh.pop %v3188
    %v3210 = vrot.slane %v3157, 6
    %v3212 = vmul.f32 %v3207, %v3210
    %3214 = vrot.lane.b32.xlu0 %v3208, 64
    %v3215 = vpop.permute.xlu0 %3214
    %v3217 = vmul.f32 %v3207, %v3215
    %3219 = vrot.lane.b32.xlu0 %v3217, 32
    %v3220 = vpop.permute.xlu0 %3219
    %v3222 = vadd.f32 %v3212, %v3220
    %v3223 = vtanh.pop %v3222
    %3225 = vrot.lane.b32.xlu0 %v3223, 64
    %v3226 = vpop.permute.xlu0 %3225
    %v3228 = vmul.f32 %v3207, %v3226
    %v3229 = vpack.c.bf16 %v3228, %v3228
    %v3231 = vrot.slane %v3229, 2
    %3232 = vrot.lane.b32.xlu0 %v3231, 32
    %v3233 = vpop.permute.xlu0 %3232
    %v3235 = vsel %vm64, %v3233, 0
    %3237 = vmatpush.bf16.msra.mxu0 0
    %3238 = vmatpush.bf16.msra.mxu0 0
    %3239 = vmatpush.bf16.msra.mxu0 0
    %3240 = vmatpush.bf16.msra.mxu0 0
    %3241 = vmatpush.bf16.msra.mxu0 0
    %3242 = vmatpush.bf16.msra.mxu0 0
    %3243 = vmatpush.bf16.msra.mxu0 %v2792
    %3244 = vmatpush.bf16.msra.mxu0 %v2791
    %3245 = vmatmul.bf16.gmra.mxu0 %v3235
    %v3246 = vpop.f32.mrf.mxu0
    %v3247 = vadd.f32 0.0, %v3246
    %v3248 = vpop.f32.mrf.mxu0
    %3249 = vdwg.mxu0
    %v3251 = vrot.slane %v3247, 2
    %v3253 = vadd.f32 %v2778, %v3251
    %v3254 = vxor.u32 %v3253, 2147483648
    %v3255 = vmul.f32 %v3254, 1.442695
    %v3256 = vpow.pop %v3255
    %v3257 = vadd.f32 %v3256, 1.0
    %v3258 = vrcp.pop %v3257
    %v3259 = vmul.f32 %v3257, %v3258
    %v3260 = vsub.f32 1.0, %v3259
    %v3261 = vmul.f32 %v3258, %v3260
    %v3262 = vadd.f32 %v3258, %v3261
    %vm3263 = vweird.f32 %v3257
    %vm3264 = vweird.f32 %v3258
    %vm3265 = vmor %vm3263, %vm3264
    %v3266 = vsel %vm3265, %v3258, %v3262
    %v3267 = vand.u32 2147483647, %v3257
    %vm3268 = vcmp.eq.f32.partialorder %v3267, 8.507059e+37
    %v3269 = vand.u32 %v3257, 2147483648
    %v3270 = vor.u32 1.1754944e-38, %v3269
    %v3271 = vsel %vm3268, %v3270, %v3266
    %v3272 = vmul.f32 1.0, %v3271
    %v3273 = vtanh.pop %v3253
    %v3275 = vrot.slane %v3222, 6
    %v3277 = vmul.f32 %v3272, %v3275
    %3279 = vrot.lane.b32.xlu0 %v3273, 64
    %v3280 = vpop.permute.xlu0 %3279
    %v3282 = vmul.f32 %v3272, %v3280
    %3284 = vrot.lane.b32.xlu0 %v3282, 32
    %v3285 = vpop.permute.xlu0 %3284
    %v3287 = vadd.f32 %v3277, %v3285
    %v3288 = vtanh.pop %v3287
    %3290 = vrot.lane.b32.xlu0 %v3288, 64
    %v3291 = vpop.permute.xlu0 %3290
    %v3293 = vmul.f32 %v3272, %v3291
    %v3294 = vpack.c.bf16 %v3293, %v3293
    %v3296 = vrot.slane %v3294, 3
    %3297 = vrot.lane.b32.xlu0 %v3296, 32
    %v3298 = vpop.permute.xlu0 %3297
    %v3300 = vsel %vm64, %v3298, 0
    %3302 = vmatpush.bf16.msra.mxu0 0
    %3303 = vmatpush.bf16.msra.mxu0 0
    %3304 = vmatpush.bf16.msra.mxu0 0
    %3305 = vmatpush.bf16.msra.mxu0 0
    %3306 = vmatpush.bf16.msra.mxu0 0
    %3307 = vmatpush.bf16.msra.mxu0 0
    %3308 = vmatpush.bf16.msra.mxu0 %v2792
    %3309 = vmatpush.bf16.msra.mxu0 %v2791
    %3310 = vmatmul.bf16.gmra.mxu0 %v3300
    %v3311 = vpop.f32.mrf.mxu0
    %v3312 = vadd.f32 0.0, %v3311
    %v3313 = vpop.f32.mrf.mxu0
    %3314 = vdwg.mxu0
    %v3315 = vadd.f32 %v2781, %v3312
    %v3316 = vxor.u32 %v3315, 2147483648
    %v3317 = vmul.f32 %v3316, 1.442695
    %v3318 = vpow.pop %v3317
    %v3319 = vadd.f32 %v3318, 1.0
    %v3320 = vrcp.pop %v3319
    %v3321 = vmul.f32 %v3319, %v3320
    %v3322 = vsub.f32 1.0, %v3321
    %v3323 = vmul.f32 %v3320, %v3322
    %v3324 = vadd.f32 %v3320, %v3323
    %vm3325 = vweird.f32 %v3319
    %vm3326 = vweird.f32 %v3320
    %vm3327 = vmor %vm3325, %vm3326
    %v3328 = vsel %vm3327, %v3320, %v3324
    %v3329 = vand.u32 2147483647, %v3319
    %vm3330 = vcmp.eq.f32.partialorder %v3329, 8.507059e+37
    %v3331 = vand.u32 %v3319, 2147483648
    %v3332 = vor.u32 1.1754944e-38, %v3331
    %v3333 = vsel %vm3330, %v3332, %v3328
    %v3334 = vmul.f32 1.0, %v3333
    %v3335 = vtanh.pop %v3315
    %v3337 = vrot.slane %v3287, 6
    %v3339 = vmul.f32 %v3334, %v3337
    %3341 = vrot.lane.b32.xlu0 %v3335, 64
    %v3342 = vpop.permute.xlu0 %3341
    %v3344 = vmul.f32 %v3334, %v3342
    %3346 = vrot.lane.b32.xlu0 %v3344, 32
    %v3347 = vpop.permute.xlu0 %3346
    %v3349 = vadd.f32 %v3339, %v3347
    %v3350 = vtanh.pop %v3349
    %3352 = vrot.lane.b32.xlu0 %v3350, 64
    %v3353 = vpop.permute.xlu0 %3352
    %v3355 = vmul.f32 %v3334, %v3353
    %v3356 = vpack.c.bf16 %v3355, %v3355
    %3358 = vrot.lane.b32.xlu0 %v3356, 32
    %v3359 = vpop.permute.xlu0 %3358
    %v3361 = vsel %vm64, %v3359, 0
    %3363 = vmatpush.bf16.msra.mxu0 0
    %3364 = vmatpush.bf16.msra.mxu0 0
    %3365 = vmatpush.bf16.msra.mxu0 0
    %3366 = vmatpush.bf16.msra.mxu0 0
    %3367 = vmatpush.bf16.msra.mxu0 0
    %3368 = vmatpush.bf16.msra.mxu0 0
    %3369 = vmatpush.bf16.msra.mxu0 %v2792
    %3370 = vmatpush.bf16.msra.mxu0 %v2791
    %3371 = vmatmul.bf16.gmra.mxu0 %v3361
    %v3372 = vpop.f32.mrf.mxu0
    %v3373 = vadd.f32 0.0, %v3372
    %v3374 = vpop.f32.mrf.mxu0
    %3375 = vdwg.mxu0
    %v3377 = vrot.slane %v3373, 6
    %v3379 = vadd.f32 %v2781, %v3377
    %v3380 = vxor.u32 %v3379, 2147483648
    %v3381 = vmul.f32 %v3380, 1.442695
    %v3382 = vpow.pop %v3381
    %v3383 = vadd.f32 %v3382, 1.0
    %v3384 = vrcp.pop %v3383
    %v3385 = vmul.f32 %v3383, %v3384
    %v3386 = vsub.f32 1.0, %v3385
    %v3387 = vmul.f32 %v3384, %v3386
    %v3388 = vadd.f32 %v3384, %v3387
    %vm3389 = vweird.f32 %v3383
    %vm3390 = vweird.f32 %v3384
    %vm3391 = vmor %vm3389, %vm3390
    %v3392 = vsel %vm3391, %v3384, %v3388
    %v3393 = vand.u32 2147483647, %v3383
    %vm3394 = vcmp.eq.f32.partialorder %v3393, 8.507059e+37
    %v3395 = vand.u32 %v3383, 2147483648
    %v3396 = vor.u32 1.1754944e-38, %v3395
    %v3397 = vsel %vm3394, %v3396, %v3392
    %v3398 = vmul.f32 1.0, %v3397
    %v3399 = vtanh.pop %v3379
    %v3401 = vrot.slane %v3349, 6
    %v3403 = vmul.f32 %v3398, %v3401
    %3405 = vrot.lane.b32.xlu0 %v3399, 64
    %v3406 = vpop.permute.xlu0 %3405
    %v3408 = vmul.f32 %v3398, %v3406
    %3410 = vrot.lane.b32.xlu0 %v3408, 32
    %v3411 = vpop.permute.xlu0 %3410
    %v3413 = vadd.f32 %v3403, %v3411
    %v3414 = vtanh.pop %v3413
    %3416 = vrot.lane.b32.xlu0 %v3414, 64
    %v3417 = vpop.permute.xlu0 %3416
    %v3419 = vmul.f32 %v3398, %v3417
    %v3420 = vpack.c.bf16 %v3419, %v3419
    %v3422 = vrot.slane %v3420, 1
    %3423 = vrot.lane.b32.xlu0 %v3422, 32
    %v3424 = vpop.permute.xlu0 %3423
    %v3426 = vsel %vm64, %v3424, 0
    %3428 = vmatpush.bf16.msra.mxu0 0
    %3429 = vmatpush.bf16.msra.mxu0 0
    %3430 = vmatpush.bf16.msra.mxu0 0
    %3431 = vmatpush.bf16.msra.mxu0 0
    %3432 = vmatpush.bf16.msra.mxu0 0
    %3433 = vmatpush.bf16.msra.mxu0 0
    %3434 = vmatpush.bf16.msra.mxu0 %v2792
    %3435 = vmatpush.bf16.msra.mxu0 %v2791
    %3436 = vmatmul.bf16.gmra.mxu0 %v3426
    %v3437 = vpop.f32.mrf.mxu0
    %v3438 = vadd.f32 0.0, %v3437
    %v3439 = vpop.f32.mrf.mxu0
    %3440 = vdwg.mxu0
    %v3442 = vrot.slane %v3438, 4
    %v3444 = vadd.f32 %v2781, %v3442
    %v3445 = vxor.u32 %v3444, 2147483648
    %v3446 = vmul.f32 %v3445, 1.442695
    %v3447 = vpow.pop %v3446
    %v3448 = vadd.f32 %v3447, 1.0
    %v3449 = vrcp.pop %v3448
    %v3450 = vmul.f32 %v3448, %v3449
    %v3451 = vsub.f32 1.0, %v3450
    %v3452 = vmul.f32 %v3449, %v3451
    %v3453 = vadd.f32 %v3449, %v3452
    %vm3454 = vweird.f32 %v3448
    %vm3455 = vweird.f32 %v3449
    %vm3456 = vmor %vm3454, %vm3455
    %v3457 = vsel %vm3456, %v3449, %v3453
    %v3458 = vand.u32 2147483647, %v3448
    %vm3459 = vcmp.eq.f32.partialorder %v3458, 8.507059e+37
    %v3460 = vand.u32 %v3448, 2147483648
    %v3461 = vor.u32 1.1754944e-38, %v3460
    %v3462 = vsel %vm3459, %v3461, %v3457
    %v3463 = vmul.f32 1.0, %v3462
    %v3464 = vtanh.pop %v3444
    %v3466 = vrot.slane %v3413, 6
    %v3468 = vmul.f32 %v3463, %v3466
    %3470 = vrot.lane.b32.xlu0 %v3464, 64
    %v3471 = vpop.permute.xlu0 %3470
    %v3473 = vmul.f32 %v3463, %v3471
    %3475 = vrot.lane.b32.xlu0 %v3473, 32
    %v3476 = vpop.permute.xlu0 %3475
    %v3478 = vadd.f32 %v3468, %v3476
    %v3479 = vtanh.pop %v3478
    %3481 = vrot.lane.b32.xlu0 %v3479, 64
    %v3482 = vpop.permute.xlu0 %3481
    %v3484 = vmul.f32 %v3463, %v3482
    %v3485 = vpack.c.bf16 %v3484, %v3484
    %v3487 = vrot.slane %v3485, 2
    %3488 = vrot.lane.b32.xlu0 %v3487, 32
    %v3489 = vpop.permute.xlu0 %3488
    %v3491 = vsel %vm64, %v3489, 0
    %3493 = vmatpush.bf16.msra.mxu0 0
    %3494 = vmatpush.bf16.msra.mxu0 0
    %3495 = vmatpush.bf16.msra.mxu0 0
    %3496 = vmatpush.bf16.msra.mxu0 0
    %3497 = vmatpush.bf16.msra.mxu0 0
    %3498 = vmatpush.bf16.msra.mxu0 0
    %3499 = vmatpush.bf16.msra.mxu0 %v2792
    %3500 = vmatpush.bf16.msra.mxu0 %v2791
    %3501 = vmatmul.bf16.gmra.mxu0 %v3491
    %v3502 = vpop.f32.mrf.mxu0
    %v3503 = vadd.f32 0.0, %v3502
    %v3504 = vpop.f32.mrf.mxu0
    %3505 = vdwg.mxu0
    %v3507 = vrot.slane %v3503, 2
    %v3509 = vadd.f32 %v2781, %v3507
    %v3510 = vxor.u32 %v3509, 2147483648
    %v3511 = vmul.f32 %v3510, 1.442695
    %v3512 = vpow.pop %v3511
    %v3513 = vadd.f32 %v3512, 1.0
    %v3514 = vrcp.pop %v3513
    %v3515 = vmul.f32 %v3513, %v3514
    %v3516 = vsub.f32 1.0, %v3515
    %v3517 = vmul.f32 %v3514, %v3516
    %v3518 = vadd.f32 %v3514, %v3517
    %vm3519 = vweird.f32 %v3513
    %vm3520 = vweird.f32 %v3514
    %vm3521 = vmor %vm3519, %vm3520
    %v3522 = vsel %vm3521, %v3514, %v3518
    %v3523 = vand.u32 2147483647, %v3513
    %vm3524 = vcmp.eq.f32.partialorder %v3523, 8.507059e+37
    %v3525 = vand.u32 %v3513, 2147483648
    %v3526 = vor.u32 1.1754944e-38, %v3525
    %v3527 = vsel %vm3524, %v3526, %v3522
    %v3528 = vmul.f32 1.0, %v3527
    %v3529 = vtanh.pop %v3509
    %v3531 = vrot.slane %v3478, 6
    %v3533 = vmul.f32 %v3528, %v3531
    %3535 = vrot.lane.b32.xlu0 %v3529, 64
    %v3536 = vpop.permute.xlu0 %3535
    %v3538 = vmul.f32 %v3528, %v3536
    %3540 = vrot.lane.b32.xlu0 %v3538, 32
    %v3541 = vpop.permute.xlu0 %3540
    %v3543 = vadd.f32 %v3533, %v3541
    %v3544 = vtanh.pop %v3543
    %3546 = vrot.lane.b32.xlu0 %v3544, 64
    %v3547 = vpop.permute.xlu0 %3546
    %v3549 = vmul.f32 %v3528, %v3547
    %v3550 = vpack.c.bf16 %v3549, %v3549
    %v3552 = vrot.slane %v3550, 3
    %3553 = vrot.lane.b32.xlu0 %v3552, 32
    %v3554 = vpop.permute.xlu0 %3553
    %v3556 = vsel %vm64, %v3554, 0
    %3558 = vmatpush.bf16.msra.mxu0 0
    %3559 = vmatpush.bf16.msra.mxu0 0
    %3560 = vmatpush.bf16.msra.mxu0 0
    %3561 = vmatpush.bf16.msra.mxu0 0
    %3562 = vmatpush.bf16.msra.mxu0 0
    %3563 = vmatpush.bf16.msra.mxu0 0
    %3564 = vmatpush.bf16.msra.mxu0 %v2792
    %3565 = vmatpush.bf16.msra.mxu0 %v2791
    %3566 = vmatmul.bf16.gmra.mxu0 %v3556
    %v3567 = vpop.f32.mrf.mxu0
    %v3568 = vadd.f32 0.0, %v3567
    %v3569 = vpop.f32.mrf.mxu0
    %3570 = vdwg.mxu0
    %v3571 = vadd.f32 %v2784, %v3568
    %v3572 = vxor.u32 %v3571, 2147483648
    %v3573 = vmul.f32 %v3572, 1.442695
    %v3574 = vpow.pop %v3573
    %v3575 = vadd.f32 %v3574, 1.0
    %v3576 = vrcp.pop %v3575
    %v3577 = vmul.f32 %v3575, %v3576
    %v3578 = vsub.f32 1.0, %v3577
    %v3579 = vmul.f32 %v3576, %v3578
    %v3580 = vadd.f32 %v3576, %v3579
    %vm3581 = vweird.f32 %v3575
    %vm3582 = vweird.f32 %v3576
    %vm3583 = vmor %vm3581, %vm3582
    %v3584 = vsel %vm3583, %v3576, %v3580
    %v3585 = vand.u32 2147483647, %v3575
    %vm3586 = vcmp.eq.f32.partialorder %v3585, 8.507059e+37
    %v3587 = vand.u32 %v3575, 2147483648
    %v3588 = vor.u32 1.1754944e-38, %v3587
    %v3589 = vsel %vm3586, %v3588, %v3584
    %v3590 = vmul.f32 1.0, %v3589
    %v3591 = vtanh.pop %v3571
    %v3593 = vrot.slane %v3543, 6
    %v3595 = vmul.f32 %v3590, %v3593
    %3597 = vrot.lane.b32.xlu0 %v3591, 64
    %v3598 = vpop.permute.xlu0 %3597
    %v3600 = vmul.f32 %v3590, %v3598
    %3602 = vrot.lane.b32.xlu0 %v3600, 32
    %v3603 = vpop.permute.xlu0 %3602
    %v3605 = vadd.f32 %v3595, %v3603
    %v3606 = vtanh.pop %v3605
    %3608 = vrot.lane.b32.xlu0 %v3606, 64
    %v3609 = vpop.permute.xlu0 %3608
    %v3611 = vmul.f32 %v3590, %v3609
    %v3612 = vpack.c.bf16 %v3611, %v3611
    %3614 = vrot.lane.b32.xlu0 %v3612, 32
    %v3615 = vpop.permute.xlu0 %3614
    %v3617 = vsel %vm64, %v3615, 0
    %3619 = vmatpush.bf16.msra.mxu0 0
    %3620 = vmatpush.bf16.msra.mxu0 0
    %3621 = vmatpush.bf16.msra.mxu0 0
    %3622 = vmatpush.bf16.msra.mxu0 0
    %3623 = vmatpush.bf16.msra.mxu0 0
    %3624 = vmatpush.bf16.msra.mxu0 0
    %3625 = vmatpush.bf16.msra.mxu0 %v2792
    %3626 = vmatpush.bf16.msra.mxu0 %v2791
    %3627 = vmatmul.bf16.gmra.mxu0 %v3617
    %v3628 = vpop.f32.mrf.mxu0
    %v3629 = vadd.f32 0.0, %v3628
    %v3630 = vpop.f32.mrf.mxu0
    %3631 = vdwg.mxu0
    %v3633 = vrot.slane %v3629, 6
    %v3635 = vadd.f32 %v2784, %v3633
    %v3636 = vxor.u32 %v3635, 2147483648
    %v3637 = vmul.f32 %v3636, 1.442695
    %v3638 = vpow.pop %v3637
    %v3639 = vadd.f32 %v3638, 1.0
    %v3640 = vrcp.pop %v3639
    %v3641 = vmul.f32 %v3639, %v3640
    %v3642 = vsub.f32 1.0, %v3641
    %v3643 = vmul.f32 %v3640, %v3642
    %v3644 = vadd.f32 %v3640, %v3643
    %vm3645 = vweird.f32 %v3639
    %vm3646 = vweird.f32 %v3640
    %vm3647 = vmor %vm3645, %vm3646
    %v3648 = vsel %vm3647, %v3640, %v3644
    %v3649 = vand.u32 2147483647, %v3639
    %vm3650 = vcmp.eq.f32.partialorder %v3649, 8.507059e+37
    %v3651 = vand.u32 %v3639, 2147483648
    %v3652 = vor.u32 1.1754944e-38, %v3651
    %v3653 = vsel %vm3650, %v3652, %v3648
    %v3654 = vmul.f32 1.0, %v3653
    %v3655 = vtanh.pop %v3635
    %v3657 = vrot.slane %v3605, 6
    %v3659 = vmul.f32 %v3654, %v3657
    %3661 = vrot.lane.b32.xlu0 %v3655, 64
    %v3662 = vpop.permute.xlu0 %3661
    %v3664 = vmul.f32 %v3654, %v3662
    %3666 = vrot.lane.b32.xlu0 %v3664, 32
    %v3667 = vpop.permute.xlu0 %3666
    %v3669 = vadd.f32 %v3659, %v3667
    %v3670 = vtanh.pop %v3669
    %3672 = vrot.lane.b32.xlu0 %v3670, 64
    %v3673 = vpop.permute.xlu0 %3672
    %v3675 = vmul.f32 %v3654, %v3673
    %v3676 = vpack.c.bf16 %v3675, %v3675
    %v3678 = vrot.slane %v3676, 1
    %3679 = vrot.lane.b32.xlu0 %v3678, 32
    %v3680 = vpop.permute.xlu0 %3679
    %v3682 = vsel %vm64, %v3680, 0
    %3684 = vmatpush.bf16.msra.mxu0 0
    %3685 = vmatpush.bf16.msra.mxu0 0
    %3686 = vmatpush.bf16.msra.mxu0 0
    %3687 = vmatpush.bf16.msra.mxu0 0
    %3688 = vmatpush.bf16.msra.mxu0 0
    %3689 = vmatpush.bf16.msra.mxu0 0
    %3690 = vmatpush.bf16.msra.mxu0 %v2792
    %3691 = vmatpush.bf16.msra.mxu0 %v2791
    %3692 = vmatmul.bf16.gmra.mxu0 %v3682
    %v3693 = vpop.f32.mrf.mxu0
    %v3694 = vadd.f32 0.0, %v3693
    %v3695 = vpop.f32.mrf.mxu0
    %3696 = vdwg.mxu0
    %v3698 = vrot.slane %v3694, 4
    %v3700 = vadd.f32 %v2784, %v3698
    %v3701 = vxor.u32 %v3700, 2147483648
    %v3702 = vmul.f32 %v3701, 1.442695
    %v3703 = vpow.pop %v3702
    %v3704 = vadd.f32 %v3703, 1.0
    %v3705 = vrcp.pop %v3704
    %v3706 = vmul.f32 %v3704, %v3705
    %v3707 = vsub.f32 1.0, %v3706
    %v3708 = vmul.f32 %v3705, %v3707
    %v3709 = vadd.f32 %v3705, %v3708
    %vm3710 = vweird.f32 %v3704
    %vm3711 = vweird.f32 %v3705
    %vm3712 = vmor %vm3710, %vm3711
    %v3713 = vsel %vm3712, %v3705, %v3709
    %v3714 = vand.u32 2147483647, %v3704
    %vm3715 = vcmp.eq.f32.partialorder %v3714, 8.507059e+37
    %v3716 = vand.u32 %v3704, 2147483648
    %v3717 = vor.u32 1.1754944e-38, %v3716
    %v3718 = vsel %vm3715, %v3717, %v3713
    %v3719 = vmul.f32 1.0, %v3718
    %v3720 = vtanh.pop %v3700
    %v3722 = vrot.slane %v3669, 6
    %v3724 = vmul.f32 %v3719, %v3722
    %3726 = vrot.lane.b32.xlu0 %v3720, 64
    %v3727 = vpop.permute.xlu0 %3726
    %v3729 = vmul.f32 %v3719, %v3727
    %3731 = vrot.lane.b32.xlu0 %v3729, 32
    %v3732 = vpop.permute.xlu0 %3731
    %v3734 = vadd.f32 %v3724, %v3732
    %v3735 = vtanh.pop %v3734
    %3737 = vrot.lane.b32.xlu0 %v3735, 64
    %v3738 = vpop.permute.xlu0 %3737
    %v3740 = vmul.f32 %v3719, %v3738
    %v3741 = vpack.c.bf16 %v3740, %v3740
    %v3743 = vrot.slane %v3741, 2
    %3744 = vrot.lane.b32.xlu0 %v3743, 32
    %v3745 = vpop.permute.xlu0 %3744
    %v3747 = vsel %vm64, %v3745, 0
    %3749 = vmatpush.bf16.msra.mxu0 0
    %3750 = vmatpush.bf16.msra.mxu0 0
    %3751 = vmatpush.bf16.msra.mxu0 0
    %3752 = vmatpush.bf16.msra.mxu0 0
    %3753 = vmatpush.bf16.msra.mxu0 0
    %3754 = vmatpush.bf16.msra.mxu0 0
    %3755 = vmatpush.bf16.msra.mxu0 %v2792
    %3756 = vmatpush.bf16.msra.mxu0 %v2791
    %3757 = vmatmul.bf16.gmra.mxu0 %v3747
    %v3758 = vpop.f32.mrf.mxu0
    %v3759 = vadd.f32 0.0, %v3758
    %v3760 = vpop.f32.mrf.mxu0
    %3761 = vdwg.mxu0
    %v3763 = vrot.slane %v3759, 2
    %v3765 = vadd.f32 %v2784, %v3763
    %v3766 = vxor.u32 %v3765, 2147483648
    %v3767 = vmul.f32 %v3766, 1.442695
    %v3768 = vpow.pop %v3767
    %v3769 = vadd.f32 %v3768, 1.0
    %v3770 = vrcp.pop %v3769
    %v3771 = vmul.f32 %v3769, %v3770
    %v3772 = vsub.f32 1.0, %v3771
    %v3773 = vmul.f32 %v3770, %v3772
    %v3774 = vadd.f32 %v3770, %v3773
    %vm3775 = vweird.f32 %v3769
    %vm3776 = vweird.f32 %v3770
    %vm3777 = vmor %vm3775, %vm3776
    %v3778 = vsel %vm3777, %v3770, %v3774
    %v3779 = vand.u32 2147483647, %v3769
    %vm3780 = vcmp.eq.f32.partialorder %v3779, 8.507059e+37
    %v3781 = vand.u32 %v3769, 2147483648
    %v3782 = vor.u32 1.1754944e-38, %v3781
    %v3783 = vsel %vm3780, %v3782, %v3778
    %v3784 = vmul.f32 1.0, %v3783
    %v3785 = vtanh.pop %v3765
    %v3787 = vrot.slane %v3734, 6
    %v3789 = vmul.f32 %v3784, %v3787
    %3791 = vrot.lane.b32.xlu0 %v3785, 64
    %v3792 = vpop.permute.xlu0 %3791
    %v3794 = vmul.f32 %v3784, %v3792
    %3796 = vrot.lane.b32.xlu0 %v3794, 32
    %v3797 = vpop.permute.xlu0 %3796
    %v3799 = vadd.f32 %v3789, %v3797
    %v3800 = vtanh.pop %v3799
    %3802 = vrot.lane.b32.xlu0 %v3800, 64
    %v3803 = vpop.permute.xlu0 %3802
    %v3805 = vmul.f32 %v3784, %v3803
    %v3806 = vsel %vm1128, %v2843, %v2907
    %v3807 = vsel %vm1130, %v3806, %v2972
    %v3808 = vsel %vm1132, %v3807, %v3037
    %v3809 = vsel %vm1128, %v3099, %v3163
    %v3810 = vsel %vm1130, %v3809, %v3228
    %v3811 = vsel %vm1132, %v3810, %v3293
    %v3812 = vsel %vm1128, %v3355, %v3419
    %v3813 = vsel %vm1130, %v3812, %v3484
    %v3814 = vsel %vm1132, %v3813, %v3549
    %v3815 = vsel %vm1128, %v3611, %v3675
    %v3816 = vsel %vm1130, %v3815, %v3740
    %v3817 = vsel %vm1132, %v3816, %v3805
    %s3818 = scalar_lea.vmem [#allocation2], 64
    %v3819 = vld [vmem:[%s3818] sm:$0xff]
    %v3820 = vld [vmem:[%s3818 + $0x8] sm:$0xff]
    %v3821 = vld [vmem:[%s3818 + $0x10] sm:$0xff]
    %v3822 = vld [vmem:[%s3818 + $0x18] sm:$0xff]
    %s3823 = scalar_lea.vmem %s5, 2
    %v3824 = vld [vmem:[%s3823] sm:$0x1]
    %v3826 = vperm.slane %v3824, 0
    %3832 = vrot.lane.b32.xlu0 %v3808, 32
    %v3833 = vpop.permute.xlu0 %3832
    %3834 = vrot.lane.b32.xlu0 %v3811, 32
    %v3835 = vpop.permute.xlu0 %3834
    %3836 = vrot.lane.b32.xlu0 %v3814, 32
    %v3837 = vpop.permute.xlu0 %3836
    %3838 = vrot.lane.b32.xlu0 %v3817, 32
    %v3839 = vpop.permute.xlu0 %3838
    %v3840 = vsel %vm64, %v3833, 0
    %v3842 = vsel %vm64, %v3835, 0
    %v3844 = vsel %vm64, %v3837, 0
    %v3846 = vsel %vm64, %v3839, 0
    %3848 = vmatpush.msra.mxu0 0.0
    %3849 = vmatpush.msra.mxu0 0.0
    %3850 = vmatpush.msra.mxu0 0.0
    %3851 = vmatpush.msra.mxu0 0.0
    %3852 = vmatpush.msra.mxu0 0.0
    %3853 = vmatpush.msra.mxu0 0.0
    %3854 = vmatpush.msra.mxu0 0.0
    %3855 = vmatpush.msra.mxu0 0.0
    %3856 = vmatpush.msra.mxu0 0.0
    %3857 = vmatpush.msra.mxu0 0.0
    %3858 = vmatpush.msra.mxu0 0.0
    %3859 = vmatpush.msra.mxu0 0.0
    %3860 = vmatpush.msra.mxu0 %v3822
    %3861 = vmatpush.msra.mxu0 %v3821
    %3862 = vmatpush.msra.mxu0 %v3820
    %3863 = vmatpush.msra.mxu0 %v3819
    %3864 = vmatmul.f32.gmra.mxu0 %v3840
    %v3865 = vpop.f32.mrf.mxu0
    %v3866 = vadd.f32 %v3826, %v3865
    %3867 = vmatmul.f32.gmra.mxu0 %v3842
    %v3868 = vpop.f32.mrf.mxu0
    %v3869 = vadd.f32 %v3826, %v3868
    %3870 = vmatmul.f32.gmra.mxu0 %v3844
    %v3871 = vpop.f32.mrf.mxu0
    %v3872 = vadd.f32 %v3826, %v3871
    %3873 = vmatmul.f32.gmra.mxu0 %v3846
    %v3874 = vpop.f32.mrf.mxu0
    %v3875 = vadd.f32 %v3826, %v3874
    %3876 = vdwg.mxu0
    %v3877 = vxor.u32 %v3866, 2147483648
    %v3878 = vxor.u32 %v3869, 2147483648
    %v3879 = vxor.u32 %v3872, 2147483648
    %v3880 = vxor.u32 %v3875, 2147483648
    %v3881 = vmul.f32 %v3877, 1.442695
    %v3882 = vpow.pop %v3881
    %v3883 = vmul.f32 %v3878, 1.442695
    %v3884 = vpow.pop %v3883
    %v3885 = vmul.f32 %v3879, 1.442695
    %v3886 = vpow.pop %v3885
    %v3887 = vmul.f32 %v3880, 1.442695
    %v3888 = vpow.pop %v3887
    %v3889 = vadd.f32 %v3882, 1.0
    %v3890 = vadd.f32 %v3884, 1.0
    %v3891 = vadd.f32 %v3886, 1.0
    %v3892 = vadd.f32 %v3888, 1.0
    %v3893 = vrcp.pop %v3889
    %v3894 = vmul.f32 %v3889, %v3893
    %v3895 = vsub.f32 1.0, %v3894
    %v3896 = vmul.f32 %v3893, %v3895
    %v3897 = vadd.f32 %v3893, %v3896
    %vm3898 = vweird.f32 %v3889
    %vm3899 = vweird.f32 %v3893
    %vm3900 = vmor %vm3898, %vm3899
    %v3901 = vsel %vm3900, %v3893, %v3897
    %v3902 = vand.u32 2147483647, %v3889
    %vm3903 = vcmp.eq.f32.partialorder %v3902, 8.507059e+37
    %v3904 = vand.u32 %v3889, 2147483648
    %v3905 = vor.u32 1.1754944e-38, %v3904
    %v3906 = vsel %vm3903, %v3905, %v3901
    %v3907 = vmul.f32 1.0, %v3906
    %v3908 = vrcp.pop %v3890
    %v3909 = vmul.f32 %v3890, %v3908
    %v3910 = vsub.f32 1.0, %v3909
    %v3911 = vmul.f32 %v3908, %v3910
    %v3912 = vadd.f32 %v3908, %v3911
    %vm3913 = vweird.f32 %v3890
    %vm3914 = vweird.f32 %v3908
    %vm3915 = vmor %vm3913, %vm3914
    %v3916 = vsel %vm3915, %v3908, %v3912
    %v3917 = vand.u32 2147483647, %v3890
    %vm3918 = vcmp.eq.f32.partialorder %v3917, 8.507059e+37
    %v3919 = vand.u32 %v3890, 2147483648
    %v3920 = vor.u32 1.1754944e-38, %v3919
    %v3921 = vsel %vm3918, %v3920, %v3916
    %v3922 = vmul.f32 1.0, %v3921
    %v3923 = vrcp.pop %v3891
    %v3924 = vmul.f32 %v3891, %v3923
    %v3925 = vsub.f32 1.0, %v3924
    %v3926 = vmul.f32 %v3923, %v3925
    %v3927 = vadd.f32 %v3923, %v3926
    %vm3928 = vweird.f32 %v3891
    %vm3929 = vweird.f32 %v3923
    %vm3930 = vmor %vm3928, %vm3929
    %v3931 = vsel %vm3930, %v3923, %v3927
    %v3932 = vand.u32 2147483647, %v3891
    %vm3933 = vcmp.eq.f32.partialorder %v3932, 8.507059e+37
    %v3934 = vand.u32 %v3891, 2147483648
    %v3935 = vor.u32 1.1754944e-38, %v3934
    %v3936 = vsel %vm3933, %v3935, %v3931
    %v3937 = vmul.f32 1.0, %v3936
    %v3938 = vrcp.pop %v3892
    %v3939 = vmul.f32 %v3892, %v3938
    %v3940 = vsub.f32 1.0, %v3939
    %v3941 = vmul.f32 %v3938, %v3940
    %v3942 = vadd.f32 %v3938, %v3941
    %vm3943 = vweird.f32 %v3892
    %vm3944 = vweird.f32 %v3938
    %vm3945 = vmor %vm3943, %vm3944
    %v3946 = vsel %vm3945, %v3938, %v3942
    %v3947 = vand.u32 2147483647, %v3892
    %vm3948 = vcmp.eq.f32.partialorder %v3947, 8.507059e+37
    %v3949 = vand.u32 %v3892, 2147483648
    %v3950 = vor.u32 1.1754944e-38, %v3949
    %v3951 = vsel %vm3948, %v3950, %v3946
    %v3952 = vmul.f32 1.0, %v3951
    %v3957 = vmul.f32 %v3907, %v3833
    %v3958 = vmul.f32 %v3922, %v3835
    %v3959 = vmul.f32 %v3937, %v3837
    %v3960 = vmul.f32 %v3952, %v3839
    %v3961 = vadd.f32 %v2731, %v3957
    %v3962 = vadd.f32 %v2732, %v3958
    %v3963 = vadd.f32 %v2733, %v3959
    %v3964 = vadd.f32 %v2734, %v3960
    %v3965 = vsel %vm64, %v3961, 0.0
    %3966 = vadd.xlane.f32.xlu0 %v3965
    %v3967 = vpop.xlane.xlu0 %3966
    %v3968 = vsel %vm64, %v3962, 0.0
    %3969 = vadd.xlane.f32.xlu0 %v3968
    %v3970 = vpop.xlane.xlu0 %3969
    %v3971 = vsel %vm64, %v3963, 0.0
    %3972 = vadd.xlane.f32.xlu0 %v3971
    %v3973 = vpop.xlane.xlu0 %3972
    %v3974 = vsel %vm64, %v3964, 0.0
    %3975 = vadd.xlane.f32.xlu0 %v3974
    %v3976 = vpop.xlane.xlu0 %3975
    %v3977 = vmul.f32 %v3967, %v1306
    %v3978 = vmul.f32 %v3970, %v1306
    %v3979 = vmul.f32 %v3973, %v1306
    %v3980 = vmul.f32 %v3976, %v1306
    %v3981 = vsub.f32 %v3961, %v3977
    %v3982 = vsub.f32 %v3962, %v3978
    %v3983 = vsub.f32 %v3963, %v3979
    %v3984 = vsub.f32 %v3964, %v3980
    %v3985 = vmul.f32 %v3981, %v3981
    %v3986 = vmul.f32 %v3982, %v3982
    %v3987 = vmul.f32 %v3983, %v3983
    %v3988 = vmul.f32 %v3984, %v3984
    %v3989 = vsel %vm64, %v3985, 0.0
    %3990 = vadd.xlane.f32.xlu0 %v3989
    %v3991 = vpop.xlane.xlu0 %3990
    %v3992 = vsel %vm64, %v3986, 0.0
    %3993 = vadd.xlane.f32.xlu0 %v3992
    %v3994 = vpop.xlane.xlu0 %3993
    %v3995 = vsel %vm64, %v3987, 0.0
    %3996 = vadd.xlane.f32.xlu0 %v3995
    %v3997 = vpop.xlane.xlu0 %3996
    %v3998 = vsel %vm64, %v3988, 0.0
    %3999 = vadd.xlane.f32.xlu0 %v3998
    %v4000 = vpop.xlane.xlu0 %3999
    %v4001 = vmul.f32 %v3991, %v1306
    %v4002 = vmul.f32 %v3994, %v1306
    %v4003 = vmul.f32 %v3997, %v1306
    %v4004 = vmul.f32 %v4000, %v1306
    %v4005 = vadd.f32 %v4001, 1e-05
    %v4006 = vadd.f32 %v4002, 1e-05
    %v4007 = vadd.f32 %v4003, 1e-05
    %v4008 = vadd.f32 %v4004, 1e-05
    %v4009 = vrsqrt.pop %v4005
    %v4010 = vmul.f32 %v4009, %v4005
    %v4011 = vmul.f32 %v4010, %v4009
    %v4012 = vmul.f32 0.5, %v4011
    %v4013 = vsub.f32 1.5, %v4012
    %v4014 = vmul.f32 %v4009, %v4013
    %vm4015 = vweird.f32 %v4005
    %vm4016 = vweird.f32 %v4009
    %vm4017 = vmor %vm4015, %vm4016
    %v4018 = vsel %vm4017, %v4009, %v4014
    %v4019 = vrsqrt.pop %v4006
    %v4020 = vmul.f32 %v4019, %v4006
    %v4021 = vmul.f32 %v4020, %v4019
    %v4022 = vmul.f32 0.5, %v4021
    %v4023 = vsub.f32 1.5, %v4022
    %v4024 = vmul.f32 %v4019, %v4023
    %vm4025 = vweird.f32 %v4006
    %vm4026 = vweird.f32 %v4019
    %vm4027 = vmor %vm4025, %vm4026
    %v4028 = vsel %vm4027, %v4019, %v4024
    %v4029 = vrsqrt.pop %v4007
    %v4030 = vmul.f32 %v4029, %v4007
    %v4031 = vmul.f32 %v4030, %v4029
    %v4032 = vmul.f32 0.5, %v4031
    %v4033 = vsub.f32 1.5, %v4032
    %v4034 = vmul.f32 %v4029, %v4033
    %vm4035 = vweird.f32 %v4007
    %vm4036 = vweird.f32 %v4029
    %vm4037 = vmor %vm4035, %vm4036
    %v4038 = vsel %vm4037, %v4029, %v4034
    %v4039 = vrsqrt.pop %v4008
    %v4040 = vmul.f32 %v4039, %v4008
    %v4041 = vmul.f32 %v4040, %v4039
    %v4042 = vmul.f32 0.5, %v4041
    %v4043 = vsub.f32 1.5, %v4042
    %v4044 = vmul.f32 %v4039, %v4043
    %vm4045 = vweird.f32 %v4008
    %vm4046 = vweird.f32 %v4039
    %vm4047 = vmor %vm4045, %vm4046
    %v4048 = vsel %vm4047, %v4039, %v4044
    %v4049 = vmul.f32 %v3981, %v4018
    %v4050 = vmul.f32 %v3982, %v4028
    %v4051 = vmul.f32 %v3983, %v4038
    %v4052 = vmul.f32 %v3984, %v4048
    %s4053 = scalar_lea.vmem %s6, 2
    %v4054 = vld [vmem:[%s4053] sm:$0x1]
    %v4056 = vperm.slane %v4054, 0
    %v4058 = vmul.f32 %v4049, %v4056
    %v4059 = vmul.f32 %v4050, %v4056
    %v4060 = vmul.f32 %v4051, %v4056
    %v4061 = vmul.f32 %v4052, %v4056
    %s4062 = scalar_lea.vmem %s7, 2
    %v4063 = vld [vmem:[%s4062] sm:$0x1]
    %v4065 = vperm.slane %v4063, 0
    %v4067 = vadd.f32 %v4058, %v4065
    %v4068 = vadd.f32 %v4059, %v4065
    %v4069 = vadd.f32 %v4060, %v4065
    %v4070 = vadd.f32 %v4061, %v4065
    %v4071 = vsel %vm64, %v4067, 0.0
    %4072 = vadd.xlane.f32.xlu0 %v4071
    %v4073 = vpop.xlane.xlu0 %4072
    %v4074 = vsel %vm64, %v4068, 0.0
    %4075 = vadd.xlane.f32.xlu0 %v4074
    %v4076 = vpop.xlane.xlu0 %4075
    %v4077 = vsel %vm64, %v4069, 0.0
    %4078 = vadd.xlane.f32.xlu0 %v4077
    %v4079 = vpop.xlane.xlu0 %4078
    %v4080 = vsel %vm64, %v4070, 0.0
    %4081 = vadd.xlane.f32.xlu0 %v4080
    %v4082 = vpop.xlane.xlu0 %4081
    %v4083 = vmul.f32 %v4073, %v1306
    %v4084 = vmul.f32 %v4076, %v1306
    %v4085 = vmul.f32 %v4079, %v1306
    %v4086 = vmul.f32 %v4082, %v1306
    %v4087 = vsub.f32 %v4067, %v4083
    %v4088 = vsub.f32 %v4068, %v4084
    %v4089 = vsub.f32 %v4069, %v4085
    %v4090 = vsub.f32 %v4070, %v4086
    %v4091 = vmul.f32 %v4087, %v4087
    %v4092 = vmul.f32 %v4088, %v4088
    %v4093 = vmul.f32 %v4089, %v4089
    %v4094 = vmul.f32 %v4090, %v4090
    %v4095 = vsel %vm64, %v4091, 0.0
    %4096 = vadd.xlane.f32.xlu0 %v4095
    %v4097 = vpop.xlane.xlu0 %4096
    %v4098 = vsel %vm64, %v4092, 0.0
    %4099 = vadd.xlane.f32.xlu0 %v4098
    %v4100 = vpop.xlane.xlu0 %4099
    %v4101 = vsel %vm64, %v4093, 0.0
    %4102 = vadd.xlane.f32.xlu0 %v4101
    %v4103 = vpop.xlane.xlu0 %4102
    %v4104 = vsel %vm64, %v4094, 0.0
    %4105 = vadd.xlane.f32.xlu0 %v4104
    %v4106 = vpop.xlane.xlu0 %4105
    %v4107 = vmul.f32 %v4097, %v1306
    %v4108 = vmul.f32 %v4100, %v1306
    %v4109 = vmul.f32 %v4103, %v1306
    %v4110 = vmul.f32 %v4106, %v1306
    %v4111 = vadd.f32 %v4107, 1e-05
    %v4112 = vadd.f32 %v4108, 1e-05
    %v4113 = vadd.f32 %v4109, 1e-05
    %v4114 = vadd.f32 %v4110, 1e-05
    %v4115 = vrsqrt.pop %v4111
    %v4116 = vmul.f32 %v4115, %v4111
    %v4117 = vmul.f32 %v4116, %v4115
    %v4118 = vmul.f32 0.5, %v4117
    %v4119 = vsub.f32 1.5, %v4118
    %v4120 = vmul.f32 %v4115, %v4119
    %vm4121 = vweird.f32 %v4111
    %vm4122 = vweird.f32 %v4115
    %vm4123 = vmor %vm4121, %vm4122
    %v4124 = vsel %vm4123, %v4115, %v4120
    %v4125 = vrsqrt.pop %v4112
    %v4126 = vmul.f32 %v4125, %v4112
    %v4127 = vmul.f32 %v4126, %v4125
    %v4128 = vmul.f32 0.5, %v4127
    %v4129 = vsub.f32 1.5, %v4128
    %v4130 = vmul.f32 %v4125, %v4129
    %vm4131 = vweird.f32 %v4112
    %vm4132 = vweird.f32 %v4125
    %vm4133 = vmor %vm4131, %vm4132
    %v4134 = vsel %vm4133, %v4125, %v4130
    %v4135 = vrsqrt.pop %v4113
    %v4136 = vmul.f32 %v4135, %v4113
    %v4137 = vmul.f32 %v4136, %v4135
    %v4138 = vmul.f32 0.5, %v4137
    %v4139 = vsub.f32 1.5, %v4138
    %v4140 = vmul.f32 %v4135, %v4139
    %vm4141 = vweird.f32 %v4113
    %vm4142 = vweird.f32 %v4135
    %vm4143 = vmor %vm4141, %vm4142
    %v4144 = vsel %vm4143, %v4135, %v4140
    %v4145 = vrsqrt.pop %v4114
    %v4146 = vmul.f32 %v4145, %v4114
    %v4147 = vmul.f32 %v4146, %v4145
    %v4148 = vmul.f32 0.5, %v4147
    %v4149 = vsub.f32 1.5, %v4148
    %v4150 = vmul.f32 %v4145, %v4149
    %vm4151 = vweird.f32 %v4114
    %vm4152 = vweird.f32 %v4145
    %vm4153 = vmor %vm4151, %vm4152
    %v4154 = vsel %vm4153, %v4145, %v4150
    %v4155 = vmul.f32 %v4087, %v4124
    %v4156 = vmul.f32 %v4088, %v4134
    %v4157 = vmul.f32 %v4089, %v4144
    %v4158 = vmul.f32 %v4090, %v4154
    %v4159 = vld [vmem:[%s8] sm:$0x1]
    %v4161 = vperm.slane %v4159, 0
    %v4163 = vmul.f32 %v4155, %v4161
    %v4164 = vmul.f32 %v4156, %v4161
    %v4165 = vmul.f32 %v4157, %v4161
    %v4166 = vmul.f32 %v4158, %v4161
    %v4167 = vld [vmem:[%s9] sm:$0x1]
    %v4169 = vperm.slane %v4167, 0
    %v4171 = vadd.f32 %v4163, %v4169
    %v4172 = vadd.f32 %v4164, %v4169
    %v4173 = vadd.f32 %v4165, %v4169
    %v4174 = vadd.f32 %v4166, %v4169
    %4175 = vst.msk [vmem:[%s10] sm:$0xff] %vm64, %v4171
    %4176 = vst.msk [vmem:[%s10 + $0x8] sm:$0xff] %vm64, %v4172
    %4177 = vst.msk [vmem:[%s10 + $0x10] sm:$0xff] %vm64, %v4173
    %4178 = vst.msk [vmem:[%s10 + $0x18] sm:$0xff] %vm64, %v4174
    // Predicated region
    $region46: #{xlstm_forward.1} parent=1 // pred_check
      _
    $region47: #{xlstm_forward.1} parent=1 // pred_check_branch
      %4180 = sbr.rel (0) target = $region49
    $region48: #{xlstm_forward.1} parent=1 // pred_region
      _
    $region49: #{xlstm_forward.1} parent=1 // pred_fallthru
      _
    // Predicated region
    $region50: #{xlstm_forward.1} parent=1 // pred_check
      _
    $region51: #{xlstm_forward.1} parent=1 // pred_check_branch
      %4182 = sbr.rel (0) target = $region53
    $region52: #{xlstm_forward.1} parent=1 // pred_region
      _
    $region53: #{xlstm_forward.1} parent=1 // pred_fallthru
      _
    %4183 = vsyncpa [#allocation3], 1

</llo_original>
